<compile_context>
chip_gen: v5e
topology: v5e:2x2
jax: 0.10.0
libtpu: 0.0.40
codegen_flags: <defaults>
</compile_context>

<pallas_src>
import collections
import functools

import numpy as np
import jax
import jax.numpy as jnp
from jax.experimental import pallas as pl
from jax.experimental.pallas import tpu as pltpu

LANE = 128       # TPU lane width
SLAB_W = 256     # common lane width of the fused weight / bias slabs
B_MIN = 16       # batch rows padded to a full bf16 sublane tile

# bias-slab row indices (fixed order)
_B1, _B2, _BFC, _BL1A, _BL1B, _BL2, _BJ, _BH = range(8)


def _round_up(x, m):
    return (x + m - 1) // m * m


Layout = collections.namedtuple("Layout", [
    "h", "w", "k1", "c1", "oh1", "ow1", "k2", "c2", "oh2", "ow2",
    "pos_dim", "num_outputs", "act_w", "kc2", "kfc",
    "off_w1s", "off_w2r", "off_wfc",
    "off_wl1a", "off_wl1b", "off_wl2a", "off_wl2b",
    "off_wj_cnn", "off_wj_lin", "off_wh",
    "slab_rows",
])


# ----------------------------- fused Pallas kernel ---------------------------

def _make_kernel(lay, b_pad):
    """Whole CNNModel forward on one VMEM-resident block.

    acts_ref : (oh1*b_pad + b_pad, act_w) bf16 — conv1 row-strips + positions
    w_ref    : (slab_rows, SLAB_W) bf16       — all weights, row-stacked
    b_ref    : (8, SLAB_W) f32                — all biases, one row per layer
    out_ref  : (b_pad, SLAB_W) f32            — merged policy/value head
    """
    Bp = b_pad
    n_strip = lay.oh1 * Bp

    def kernel(acts_ref, w_ref, b_ref, out_ref):
        cdt = w_ref.dtype  # bf16 matmul operands; f32 accumulation / bias / tanh

        def mm(x, off, k):
            return jnp.dot(x.astype(cdt), w_ref[pl.ds(off, k), :],
                           preferred_element_type=jnp.float32)

        def finish(y, brow, act=True):
            y = y + b_ref[pl.ds(brow, 1), :]
            return jnp.tanh(y) if act else y

        x_str = acts_ref[pl.ds(0, n_strip), :]          # (oh1*Bp, act_w)
        x_pos = acts_ref[pl.ds(n_strip, Bp), :]         # (Bp, act_w)

        # --- conv1 (+tanh): ONE matmul over the pre-gathered 8-row strips ---
        # h1[row=(oi,b), col=oj*C1+c] = tanh(conv1)[b, c, oi, oj]
        h1 = finish(mm(x_str, lay.off_w1s, lay.act_w), _B1)      # (oh1*Bp, 256)

        # --- conv2 (+tanh): K2 accumulated row-tap matmuls -------------------
        h1k = h1[:, :lay.kc2]
        acc = mm(h1k[0:lay.oh2 * Bp, :], lay.off_w2r[0], lay.kc2)
        for di in range(1, lay.k2):
            acc += mm(h1k[di * Bp:(di + lay.oh2) * Bp, :],
                      lay.off_w2r[di], lay.kc2)
        h2 = finish(acc, _B2)                                     # (oh2*Bp, 256)

        # --- cnn_fc (+tanh): one accumulated matmul per conv2 output row ----
        h2k = h2[:, :lay.kfc]
        accf = mm(h2k[0:Bp, :], lay.off_wfc[0], lay.kfc)
        for oi in range(1, lay.oh2):
            accf += mm(h2k[oi * Bp:(oi + 1) * Bp, :], lay.off_wfc[oi], lay.kfc)
        cnn_out = finish(accf, _BFC)                              # (Bp, 256)

        # --- MLP branch (lin1/lin2 split into 256-wide halves) ---------------
        m1a = finish(mm(x_pos, lay.off_wl1a, lay.act_w), _BL1A)
        m1b = finish(mm(x_pos, lay.off_wl1b, lay.act_w), _BL1B)
        lin_out = finish(mm(m1a, lay.off_wl2a, 256)
                         + mm(m1b, lay.off_wl2b, 256), _BL2)      # (Bp, 256)

        # --- join(cat(cnn_out, linear_out)) without a concatenate ------------
        j = finish(mm(cnn_out, lay.off_wj_cnn, 256)
                   + mm(lin_out, lay.off_wj_lin, 256), _BJ)       # (Bp, 256)

        # --- merged policy/value head (no tanh) ------------------------------
        out_ref[...] = finish(mm(j, lay.off_wh, 256), _BH, act=False)

    return kernel


# ------------------- init-time parameter preparation (host) ------------------

def prepare_fused_params(params, H, W, num_outputs, compute_dtype=jnp.bfloat16):
    """One-time conversion of PyTorch-layout params into a single bf16 weight
    slab + single f32 bias slab with static, 16-row-aligned block offsets."""
    p = {k: np.asarray(v, np.float32) for k, v in params.items()}
    C1, _, K1, _ = p["conv1_w"].shape                    # (16, 1, 8, 8)
    C2, _, K2, _ = p["conv2_w"].shape                    # (32, 16, 4, 4)
    OH1, OW1 = H - K1 + 1, W - K1 + 1                    # 9, 9
    OH2, OW2 = OH1 - K2 + 1, OW1 - K2 + 1                # 6, 6
    pos_dim = p["lin1_w"].shape[1]
    fc_out = p["cnn_fc_w"].shape[0]
    assert fc_out == 256 and p["lin1_w"].shape[0] == 512
    assert p["lin2_w"].shape == (256, 512) and p["join_w"].shape == (256, 512)
    assert num_outputs + 1 <= SLAB_W

    act_w = _round_up(max(K1 * W, pos_dim), LANE)        # 128
    kc2 = OW1 * C1                                       # 144
    kfc = OW2 * C2                                       # 192
    assert kc2 <= SLAB_W and kfc <= SLAB_W

    # conv1 -> one (act_w, OW1*C1) "row-strip" weight:
    #   W1s[di*W + wi, oj*C1 + co] = conv1_w[co, 0, di, wi-oj]   (0 <= wi-oj < K1)
    w1 = p["conv1_w"]
    W1s = np.zeros((act_w, kc2), np.float32)
    for di in range(K1):
        for oj in range(OW1):
            for dj in range(K1):
                W1s[di * W + oj + dj, oj * C1:(oj + 1) * C1] = w1[:, 0, di, dj]
    b1s = np.tile(p["conv1_b"], OW1)                     # bias per (oj, co)

    # conv2 -> K2 accumulated row-tap weights (Toeplitz over width only):
    #   W2r[di][x*C1 + ci, oj*C2 + co] = conv2_w[co, ci, di, x-oj]
    w2 = p["conv2_w"]
    W2r = np.zeros((K2, kc2, kfc), np.float32)
    for di in range(K2):
        for oj in range(OW2):
            for dj in range(K2):
                W2r[di, (oj + dj) * C1:(oj + dj + 1) * C1,
                    oj * C2:(oj + 1) * C2] = w2[:, :, di, dj].T
    b2s = np.tile(p["conv2_b"], OW2)

    # cnn_fc -> OH2 accumulated (OW2*C2, 256) weights, NCHW flatten folded in.
    wfc_r = (p["cnn_fc_w"].T.reshape(C2, OH2, OW2, fc_out)
             .transpose(1, 2, 0, 3).reshape(OH2, kfc, fc_out))
    bfc = p["cnn_fc_b"]

    # MLP branch: lin1 split by output half, lin2 split by input half.
    wl1 = np.zeros((act_w, 512), np.float32)
    wl1[:pos_dim] = p["lin1_w"].T
    wl1a, wl1b = wl1[:, :256], wl1[:, 256:]
    bl1a, bl1b = p["lin1_b"][:256], p["lin1_b"][256:]
    wl2 = p["lin2_w"].T
    wl2a, wl2b = wl2[:256], wl2[256:]
    bl2 = p["lin2_b"]

    # join split over the two concatenated inputs (concat-free in kernel).
    wj = p["join_w"].T
    wj_cnn, wj_lin = wj[:256], wj[256:]
    bj = p["join_b"]

    # merged policy + value head, zero-padded to the slab width.
    wh = np.zeros((256, SLAB_W), np.float32)
    wh[:, :num_outputs] = p["policy_w"].T
    wh[:, num_outputs:num_outputs + 1] = p["value_w"].T
    bh = np.zeros((SLAB_W,), np.float32)
    bh[:num_outputs] = p["policy_b"]
    bh[num_outputs] = p["value_b"][0]

    # ---- pack all weights into ONE bf16 slab (row-stacked, 16-row aligned) --
    blocks = ([W1s] + [W2r[i] for i in range(K2)] + [wfc_r[i] for i in range(OH2)]
              + [wl1a, wl1b, wl2a, wl2b, wj_cnn, wj_lin, wh])
    offsets, parts, row = [], [], 0
    for wmat in blocks:
        r, c = wmat.shape
        rp = _round_up(r, 16)
        part = np.zeros((rp, SLAB_W), np.float32)
        part[:r, :c] = wmat
        offsets.append(row)
        parts.append(part)
        row += rp
    slab = np.concatenate(parts, axis=0)                 # (3392, 256) here

    # ---- pack all biases into ONE f32 slab (one row per layer) --------------
    bias_rows = [b1s, b2s, bfc, bl1a, bl1b, bl2, bj, bh]
    bias = np.zeros((len(bias_rows), SLAB_W), np.float32)
    for i, b in enumerate(bias_rows):
        bias[i, :b.shape[0]] = b

    off = offsets
    lay = Layout(
        h=H, w=W, k1=K1, c1=C1, oh1=OH1, ow1=OW1, k2=K2, c2=C2, oh2=OH2, ow2=OW2,
        pos_dim=pos_dim, num_outputs=num_outputs, act_w=act_w, kc2=kc2, kfc=kfc,
        off_w1s=off[0],
        off_w2r=tuple(off[1:1 + K2]),
        off_wfc=tuple(off[1 + K2:1 + K2 + OH2]),
        off_wl1a=off[1 + K2 + OH2], off_wl1b=off[2 + K2 + OH2],
        off_wl2a=off[3 + K2 + OH2], off_wl2b=off[4 + K2 + OH2],
        off_wj_cnn=off[5 + K2 + OH2], off_wj_lin=off[6 + K2 + OH2],
        off_wh=off[7 + K2 + OH2],
        slab_rows=row,
    )
    fused = {"w": jnp.asarray(slab, dtype=compute_dtype),
             "b": jnp.asarray(bias, dtype=jnp.float32)}
    return fused, lay


# --------------------------------- forward -----------------------------------

def cnn_model_forward(fused, positions, matrix, *, layout):
    """positions: (B, pos_dim) f32;  matrix: (B, H, W) f32.
    Returns (policy_logits (B, num_outputs), value (B, 1)) — same semantics as
    CNNModel.forward / value_function."""
    lay = layout
    B = matrix.shape[0]
    Bp = max(B_MIN, _round_up(B, B_MIN))
    cdt = fused["w"].dtype
    n_strip = lay.oh1 * Bp

    # Host-side "row-strip im2col": 9 overlapping 8-row strips of the image,
    # plus the (padded) positions, stacked into ONE bf16 activation array.
    strips = jnp.stack([matrix[:, i:i + lay.k1, :] for i in range(lay.oh1)],
                       axis=0)                                  # (oh1, B, k1, W)
    strips = strips.reshape(lay.oh1, B, lay.k1 * lay.w)
    strips_p = jnp.zeros((lay.oh1, Bp, lay.act_w), jnp.float32)
    strips_p = strips_p.at[:, :B, :lay.k1 * lay.w].set(strips)
    pos_p = jnp.zeros((Bp, lay.act_w), jnp.float32)
    pos_p = pos_p.at[:B, :positions.shape[1]].set(positions)
    acts = jnp.concatenate([strips_p.reshape(n_strip, lay.act_w), pos_p],
                           axis=0).astype(cdt)                  # (10*Bp, act_w)

    # Advisory cost estimate for XLA's scheduler around the single custom call.
    mms = ([(n_strip, lay.act_w, SLAB_W)]
           + [(lay.oh2 * Bp, lay.kc2, SLAB_W)] * lay.k2
           + [(Bp, lay.kfc, SLAB_W)] * lay.oh2
           + [(Bp, lay.act_w, SLAB_W)] * 2
           + [(Bp, 256, SLAB_W)] * 5)
    flops = int(sum(2 * m * k * n for m, k, n in mms))
    transcendentals = int(SLAB_W * (n_strip + lay.oh2 * Bp + 5 * Bp))
    bytes_accessed = int(acts.size * acts.dtype.itemsize
                         + fused["w"].size * fused["w"].dtype.itemsize
                         + fused["b"].size * 4 + Bp * SLAB_W * 4)

    vmem = pl.BlockSpec(memory_space=pltpu.MemorySpace.VMEM)
    out = pl.pallas_call(
        _make_kernel(lay, Bp),
        out_shape=jax.ShapeDtypeStruct((Bp, SLAB_W), jnp.float32),
        in_specs=[vmem, vmem, vmem],
        out_specs=vmem,
        compiler_params=pltpu.CompilerParams(vmem_limit_bytes=12 * 1024 * 1024),
        cost_estimate=pl.CostEstimate(flops=flops,
                                      transcendentals=transcendentals,
                                      bytes_accessed=bytes_accessed),
    )(acts, fused["w"], fused["b"])

    policy = out[:B, :lay.num_outputs]
    value = out[:B, lay.num_outputs:lay.num_outputs + 1]
    return policy, value


# ------------------------- synthetic params & reference ----------------------

def init_params(key, pos_dim, H, W, num_outputs):
    """Deterministic synthetic params in native PyTorch layouts:
    Conv2d weight (O, C, kh, kw); Linear weight (out_features, in_features)."""
    flat = 32 * (H - 7 - 3) * (W - 7 - 3)
    keys = jax.random.split(key, 16)

    def p(k, shape, fan_in):
        return jax.random.normal(k, shape, jnp.float32) / jnp.sqrt(jnp.float32(fan_in))

    return {
        "conv1_w": p(keys[0], (16, 1, 8, 8), 64),
        "conv1_b": p(keys[1], (16,), 64),
        "conv2_w": p(keys[2], (32, 16, 4, 4), 256),
        "conv2_b": p(keys[3], (32,), 256),
        "cnn_fc_w": p(keys[4], (256, flat), flat),
        "cnn_fc_b": p(keys[5], (256,), flat),
        "lin1_w": p(keys[6], (512, pos_dim), pos_dim),
        "lin1_b": p(keys[7], (512,), pos_dim),
        "lin2_w": p(keys[8], (256, 512), 512),
        "lin2_b": p(keys[9], (256,), 512),
        "join_w": p(keys[10], (256, 512), 512),
        "join_b": p(keys[11], (256,), 512),
        "policy_w": p(keys[12], (num_outputs, 256), 256),
        "policy_b": p(keys[13], (num_outputs,), 256),
        "value_w": p(keys[14], (1, 256), 256),
        "value_b": p(keys[15], (1,), 256),
    }


def _bf16_round(x):
    return x.astype(jnp.bfloat16).astype(jnp.float32)


def reference_forward(params, positions, matrix):
    """Plain-JAX re-implementation of the original PyTorch forward (validation
    only; emulates the kernel's bf16 matmul-input rounding, f32 accumulation)."""
    hi = jax.lax.Precision.HIGHEST
    dn = ("NCHW", "OIHW", "NCHW")

    x = _bf16_round(matrix)[:, None, :, :]
    x = jax.lax.conv_general_dilated(x, _bf16_round(params["conv1_w"]), (1, 1),
                                     "VALID", dimension_numbers=dn, precision=hi)
    x = jnp.tanh(x + params["conv1_b"][None, :, None, None])
    x = jax.lax.conv_general_dilated(_bf16_round(x), _bf16_round(params["conv2_w"]),
                                     (1, 1), "VALID", dimension_numbers=dn,
                                     precision=hi)
    x = jnp.tanh(x + params["conv2_b"][None, :, None, None])
    x = x.reshape(x.shape[0], -1)

    def dense(h, wn, bn, act):
        y = jnp.dot(_bf16_round(h), _bf16_round(params[wn]).T, precision=hi) + params[bn]
        return jnp.tanh(y) if act else y

    cnn_out = dense(x, "cnn_fc_w", "cnn_fc_b", True)
    h = dense(positions, "lin1_w", "lin1_b", True)
    lin_out = dense(h, "lin2_w", "lin2_b", True)
    vi = jnp.concatenate([cnn_out, lin_out], axis=1)
    vi = dense(vi, "join_w", "join_b", True)
    return dense(vi, "policy_w", "policy_b", False), dense(vi, "value_w", "value_b", False)


# ----------------------------------- main ------------------------------------

if __name__ == "__main__":
    B, POS_DIM, H, W, NUM_OUT = 2, 8, 16, 16, 4

    key = jax.random.PRNGKey(0)
    k_pos, k_mat, k_params = jax.random.split(key, 3)

    positions = jax.random.normal(k_pos, (B, POS_DIM), jnp.float32)
    matrix = jax.random.normal(k_mat, (B, H, W), jnp.float32)
    params = init_params(k_params, POS_DIM, H, W, NUM_OUT)

    fused, lay = prepare_fused_params(params, H, W, NUM_OUT)   # one-time init cost

    fwd = jax.jit(functools.partial(cnn_model_forward, layout=lay))
    policy, value = fwd(fused, positions, matrix)
    jax.block_until_ready((policy, value))

    assert policy.shape == (B, NUM_OUT), policy.shape
    assert value.shape == (B, 1), value.shape
    assert policy.dtype == jnp.float32 and value.dtype == jnp.float32

    # Numerical check against a plain-JAX reference of the original module
    # (same bf16 rounding points, f32 accumulation): should agree to ~1e-4.
    ref_policy, ref_value = reference_forward(params, positions, matrix)
    assert float(jnp.max(jnp.abs(policy - ref_policy))) < 5e-3, "policy mismatch"
    assert float(jnp.max(jnp.abs(value - ref_value))) < 5e-3, "value mismatch"

    print("KERNEL_OK")
</pallas_src>

<mosaic_0001>
module attributes {stable_mosaic.version = 11 : i64} {
  func.func @kernel(%arg0: memref<160x128xbf16, #tpu.memory_space<vmem>>, %arg1: memref<3392x256xbf16, #tpu.memory_space<vmem>>, %arg2: memref<8x256xf32, #tpu.memory_space<vmem>>, %arg3: memref<16x256xf32, #tpu.memory_space<vmem>>) attributes {dimension_semantics = [], scalar_prefetch = 0 : i64, scratch_operands = 0 : i64, tpu.core_type = #tpu.core_type<tc>} {
    %c0 = arith.constant 0 : index
    %c0_0 = arith.constant 0 : index
    %0 = vector.load %arg0[%c0, %c0_0] : memref<160x128xbf16, #tpu.memory_space<vmem>>, vector<144x128xbf16>
    %c144 = arith.constant 144 : index
    %c0_1 = arith.constant 0 : index
    %1 = vector.load %arg0[%c144, %c0_1] : memref<160x128xbf16, #tpu.memory_space<vmem>>, vector<16x128xbf16>
    %c0_2 = arith.constant 0 : index
    %c0_3 = arith.constant 0 : index
    %2 = vector.load %arg1[%c0_2, %c0_3] : memref<3392x256xbf16, #tpu.memory_space<vmem>>, vector<128x256xbf16>
    %cst = arith.constant dense<0.000000e+00> : vector<144x256xf32>
    %3 = tpu.matmul %0, %2, %cst {dimension_numbers = #tpu.dot_dimension_numbers<[1], [0], [0], [1], [0, 0, 1, 1], [], []>} : vector<144x128xbf16>, vector<128x256xbf16>, vector<144x256xf32> -> vector<144x256xf32>
    %c0_4 = arith.constant 0 : index
    %c0_5 = arith.constant 0 : index
    %4 = vector.load %arg2[%c0_4, %c0_5] : memref<8x256xf32, #tpu.memory_space<vmem>>, vector<1x256xf32>
    %5 = vector.broadcast %4 : vector<1x256xf32> to vector<144x256xf32>
    %6 = arith.addf %3, %5 : vector<144x256xf32>
    %7 = math.tanh %6 : vector<144x256xf32>
    %8 = vector.extract_strided_slice %7 {offsets = [0, 0], sizes = [144, 144], strides = [1, 1]} : vector<144x256xf32> to vector<144x144xf32>
    %9 = vector.extract_strided_slice %8 {offsets = [0, 0], sizes = [96, 144], strides = [1, 1]} : vector<144x144xf32> to vector<96x144xf32>
    %10 = arith.truncf %9 : vector<96x144xf32> to vector<96x144xbf16>
    %c128 = arith.constant 128 : index
    %c0_6 = arith.constant 0 : index
    %11 = vector.load %arg1[%c128, %c0_6] : memref<3392x256xbf16, #tpu.memory_space<vmem>>, vector<144x256xbf16>
    %cst_7 = arith.constant dense<0.000000e+00> : vector<96x256xf32>
    %12 = tpu.matmul %10, %11, %cst_7 {dimension_numbers = #tpu.dot_dimension_numbers<[1], [0], [0], [1], [0, 0, 1, 1], [], []>} : vector<96x144xbf16>, vector<144x256xbf16>, vector<96x256xf32> -> vector<96x256xf32>
    %13 = vector.extract_strided_slice %8 {offsets = [16, 0], sizes = [96, 144], strides = [1, 1]} : vector<144x144xf32> to vector<96x144xf32>
    %14 = arith.truncf %13 : vector<96x144xf32> to vector<96x144xbf16>
    %c272 = arith.constant 272 : index
    %c0_8 = arith.constant 0 : index
    %15 = vector.load %arg1[%c272, %c0_8] : memref<3392x256xbf16, #tpu.memory_space<vmem>>, vector<144x256xbf16>
    %cst_9 = arith.constant dense<0.000000e+00> : vector<96x256xf32>
    %16 = tpu.matmul %14, %15, %cst_9 {dimension_numbers = #tpu.dot_dimension_numbers<[1], [0], [0], [1], [0, 0, 1, 1], [], []>} : vector<96x144xbf16>, vector<144x256xbf16>, vector<96x256xf32> -> vector<96x256xf32>
    %17 = arith.addf %12, %16 : vector<96x256xf32>
    %18 = vector.extract_strided_slice %8 {offsets = [32, 0], sizes = [96, 144], strides = [1, 1]} : vector<144x144xf32> to vector<96x144xf32>
    %19 = arith.truncf %18 : vector<96x144xf32> to vector<96x144xbf16>
    %c416 = arith.constant 416 : index
    %c0_10 = arith.constant 0 : index
    %20 = vector.load %arg1[%c416, %c0_10] : memref<3392x256xbf16, #tpu.memory_space<vmem>>, vector<144x256xbf16>
    %cst_11 = arith.constant dense<0.000000e+00> : vector<96x256xf32>
    %21 = tpu.matmul %19, %20, %cst_11 {dimension_numbers = #tpu.dot_dimension_numbers<[1], [0], [0], [1], [0, 0, 1, 1], [], []>} : vector<96x144xbf16>, vector<144x256xbf16>, vector<96x256xf32> -> vector<96x256xf32>
    %22 = arith.addf %17, %21 : vector<96x256xf32>
    %23 = vector.extract_strided_slice %8 {offsets = [48, 0], sizes = [96, 144], strides = [1, 1]} : vector<144x144xf32> to vector<96x144xf32>
    %24 = arith.truncf %23 : vector<96x144xf32> to vector<96x144xbf16>
    %c560 = arith.constant 560 : index
    %c0_12 = arith.constant 0 : index
    %25 = vector.load %arg1[%c560, %c0_12] : memref<3392x256xbf16, #tpu.memory_space<vmem>>, vector<144x256xbf16>
    %cst_13 = arith.constant dense<0.000000e+00> : vector<96x256xf32>
    %26 = tpu.matmul %24, %25, %cst_13 {dimension_numbers = #tpu.dot_dimension_numbers<[1], [0], [0], [1], [0, 0, 1, 1], [], []>} : vector<96x144xbf16>, vector<144x256xbf16>, vector<96x256xf32> -> vector<96x256xf32>
    %27 = arith.addf %22, %26 : vector<96x256xf32>
    %c1 = arith.constant 1 : index
    %c0_14 = arith.constant 0 : index
    %28 = vector.load %arg2[%c1, %c0_14] : memref<8x256xf32, #tpu.memory_space<vmem>>, vector<1x256xf32>
    %29 = vector.broadcast %28 : vector<1x256xf32> to vector<96x256xf32>
    %30 = arith.addf %27, %29 : vector<96x256xf32>
    %31 = math.tanh %30 : vector<96x256xf32>
    %32 = vector.extract_strided_slice %31 {offsets = [0, 0], sizes = [96, 192], strides = [1, 1]} : vector<96x256xf32> to vector<96x192xf32>
    %33 = vector.extract_strided_slice %32 {offsets = [0, 0], sizes = [16, 192], strides = [1, 1]} : vector<96x192xf32> to vector<16x192xf32>
    %34 = arith.truncf %33 : vector<16x192xf32> to vector<16x192xbf16>
    %c704 = arith.constant 704 : index
    %c0_15 = arith.constant 0 : index
    %35 = vector.load %arg1[%c704, %c0_15] : memref<3392x256xbf16, #tpu.memory_space<vmem>>, vector<192x256xbf16>
    %cst_16 = arith.constant dense<0.000000e+00> : vector<16x256xf32>
    %36 = tpu.matmul %34, %35, %cst_16 {dimension_numbers = #tpu.dot_dimension_numbers<[1], [0], [0], [1], [0, 0, 1, 1], [], []>} : vector<16x192xbf16>, vector<192x256xbf16>, vector<16x256xf32> -> vector<16x256xf32>
    %37 = vector.extract_strided_slice %32 {offsets = [16, 0], sizes = [16, 192], strides = [1, 1]} : vector<96x192xf32> to vector<16x192xf32>
    %38 = arith.truncf %37 : vector<16x192xf32> to vector<16x192xbf16>
    %c896 = arith.constant 896 : index
    %c0_17 = arith.constant 0 : index
    %39 = vector.load %arg1[%c896, %c0_17] : memref<3392x256xbf16, #tpu.memory_space<vmem>>, vector<192x256xbf16>
    %cst_18 = arith.constant dense<0.000000e+00> : vector<16x256xf32>
    %40 = tpu.matmul %38, %39, %cst_18 {dimension_numbers = #tpu.dot_dimension_numbers<[1], [0], [0], [1], [0, 0, 1, 1], [], []>} : vector<16x192xbf16>, vector<192x256xbf16>, vector<16x256xf32> -> vector<16x256xf32>
    %41 = arith.addf %36, %40 : vector<16x256xf32>
    %42 = vector.extract_strided_slice %32 {offsets = [32, 0], sizes = [16, 192], strides = [1, 1]} : vector<96x192xf32> to vector<16x192xf32>
    %43 = arith.truncf %42 : vector<16x192xf32> to vector<16x192xbf16>
    %c1088 = arith.constant 1088 : index
    %c0_19 = arith.constant 0 : index
    %44 = vector.load %arg1[%c1088, %c0_19] : memref<3392x256xbf16, #tpu.memory_space<vmem>>, vector<192x256xbf16>
    %cst_20 = arith.constant dense<0.000000e+00> : vector<16x256xf32>
    %45 = tpu.matmul %43, %44, %cst_20 {dimension_numbers = #tpu.dot_dimension_numbers<[1], [0], [0], [1], [0, 0, 1, 1], [], []>} : vector<16x192xbf16>, vector<192x256xbf16>, vector<16x256xf32> -> vector<16x256xf32>
    %46 = arith.addf %41, %45 : vector<16x256xf32>
    %47 = vector.extract_strided_slice %32 {offsets = [48, 0], sizes = [16, 192], strides = [1, 1]} : vector<96x192xf32> to vector<16x192xf32>
    %48 = arith.truncf %47 : vector<16x192xf32> to vector<16x192xbf16>
    %c1280 = arith.constant 1280 : index
    %c0_21 = arith.constant 0 : index
    %49 = vector.load %arg1[%c1280, %c0_21] : memref<3392x256xbf16, #tpu.memory_space<vmem>>, vector<192x256xbf16>
    %cst_22 = arith.constant dense<0.000000e+00> : vector<16x256xf32>
    %50 = tpu.matmul %48, %49, %cst_22 {dimension_numbers = #tpu.dot_dimension_numbers<[1], [0], [0], [1], [0, 0, 1, 1], [], []>} : vector<16x192xbf16>, vector<192x256xbf16>, vector<16x256xf32> -> vector<16x256xf32>
    %51 = arith.addf %46, %50 : vector<16x256xf32>
    %52 = vector.extract_strided_slice %32 {offsets = [64, 0], sizes = [16, 192], strides = [1, 1]} : vector<96x192xf32> to vector<16x192xf32>
    %53 = arith.truncf %52 : vector<16x192xf32> to vector<16x192xbf16>
    %c1472 = arith.constant 1472 : index
    %c0_23 = arith.constant 0 : index
    %54 = vector.load %arg1[%c1472, %c0_23] : memref<3392x256xbf16, #tpu.memory_space<vmem>>, vector<192x256xbf16>
    %cst_24 = arith.constant dense<0.000000e+00> : vector<16x256xf32>
    %55 = tpu.matmul %53, %54, %cst_24 {dimension_numbers = #tpu.dot_dimension_numbers<[1], [0], [0], [1], [0, 0, 1, 1], [], []>} : vector<16x192xbf16>, vector<192x256xbf16>, vector<16x256xf32> -> vector<16x256xf32>
    %56 = arith.addf %51, %55 : vector<16x256xf32>
    %57 = vector.extract_strided_slice %32 {offsets = [80, 0], sizes = [16, 192], strides = [1, 1]} : vector<96x192xf32> to vector<16x192xf32>
    %58 = arith.truncf %57 : vector<16x192xf32> to vector<16x192xbf16>
    %c1664 = arith.constant 1664 : index
    %c0_25 = arith.constant 0 : index
    %59 = vector.load %arg1[%c1664, %c0_25] : memref<3392x256xbf16, #tpu.memory_space<vmem>>, vector<192x256xbf16>
    %cst_26 = arith.constant dense<0.000000e+00> : vector<16x256xf32>
    %60 = tpu.matmul %58, %59, %cst_26 {dimension_numbers = #tpu.dot_dimension_numbers<[1], [0], [0], [1], [0, 0, 1, 1], [], []>} : vector<16x192xbf16>, vector<192x256xbf16>, vector<16x256xf32> -> vector<16x256xf32>
    %61 = arith.addf %56, %60 : vector<16x256xf32>
    %c2 = arith.constant 2 : index
    %c0_27 = arith.constant 0 : index
    %62 = vector.load %arg2[%c2, %c0_27] : memref<8x256xf32, #tpu.memory_space<vmem>>, vector<1x256xf32>
    %63 = vector.broadcast %62 : vector<1x256xf32> to vector<16x256xf32>
    %64 = arith.addf %61, %63 : vector<16x256xf32>
    %65 = math.tanh %64 : vector<16x256xf32>
    %c1856 = arith.constant 1856 : index
    %c0_28 = arith.constant 0 : index
    %66 = vector.load %arg1[%c1856, %c0_28] : memref<3392x256xbf16, #tpu.memory_space<vmem>>, vector<128x256xbf16>
    %cst_29 = arith.constant dense<0.000000e+00> : vector<16x256xf32>
    %67 = tpu.matmul %1, %66, %cst_29 {dimension_numbers = #tpu.dot_dimension_numbers<[1], [0], [0], [1], [0, 0, 1, 1], [], []>} : vector<16x128xbf16>, vector<128x256xbf16>, vector<16x256xf32> -> vector<16x256xf32>
    %c3 = arith.constant 3 : index
    %c0_30 = arith.constant 0 : index
    %68 = vector.load %arg2[%c3, %c0_30] : memref<8x256xf32, #tpu.memory_space<vmem>>, vector<1x256xf32>
    %69 = vector.broadcast %68 : vector<1x256xf32> to vector<16x256xf32>
    %70 = arith.addf %67, %69 : vector<16x256xf32>
    %71 = math.tanh %70 : vector<16x256xf32>
    %c1984 = arith.constant 1984 : index
    %c0_31 = arith.constant 0 : index
    %72 = vector.load %arg1[%c1984, %c0_31] : memref<3392x256xbf16, #tpu.memory_space<vmem>>, vector<128x256xbf16>
    %cst_32 = arith.constant dense<0.000000e+00> : vector<16x256xf32>
    %73 = tpu.matmul %1, %72, %cst_32 {dimension_numbers = #tpu.dot_dimension_numbers<[1], [0], [0], [1], [0, 0, 1, 1], [], []>} : vector<16x128xbf16>, vector<128x256xbf16>, vector<16x256xf32> -> vector<16x256xf32>
    %c4 = arith.constant 4 : index
    %c0_33 = arith.constant 0 : index
    %74 = vector.load %arg2[%c4, %c0_33] : memref<8x256xf32, #tpu.memory_space<vmem>>, vector<1x256xf32>
    %75 = vector.broadcast %74 : vector<1x256xf32> to vector<16x256xf32>
    %76 = arith.addf %73, %75 : vector<16x256xf32>
    %77 = math.tanh %76 : vector<16x256xf32>
    %78 = arith.truncf %71 : vector<16x256xf32> to vector<16x256xbf16>
    %c2112 = arith.constant 2112 : index
    %c0_34 = arith.constant 0 : index
    %79 = vector.load %arg1[%c2112, %c0_34] : memref<3392x256xbf16, #tpu.memory_space<vmem>>, vector<256x256xbf16>
    %cst_35 = arith.constant dense<0.000000e+00> : vector<16x256xf32>
    %80 = tpu.matmul %78, %79, %cst_35 {dimension_numbers = #tpu.dot_dimension_numbers<[1], [0], [0], [1], [0, 0, 1, 1], [], []>} : vector<16x256xbf16>, vector<256x256xbf16>, vector<16x256xf32> -> vector<16x256xf32>
    %81 = arith.truncf %77 : vector<16x256xf32> to vector<16x256xbf16>
    %c2368 = arith.constant 2368 : index
    %c0_36 = arith.constant 0 : index
    %82 = vector.load %arg1[%c2368, %c0_36] : memref<3392x256xbf16, #tpu.memory_space<vmem>>, vector<256x256xbf16>
    %cst_37 = arith.constant dense<0.000000e+00> : vector<16x256xf32>
    %83 = tpu.matmul %81, %82, %cst_37 {dimension_numbers = #tpu.dot_dimension_numbers<[1], [0], [0], [1], [0, 0, 1, 1], [], []>} : vector<16x256xbf16>, vector<256x256xbf16>, vector<16x256xf32> -> vector<16x256xf32>
    %84 = arith.addf %80, %83 : vector<16x256xf32>
    %c5 = arith.constant 5 : index
    %c0_38 = arith.constant 0 : index
    %85 = vector.load %arg2[%c5, %c0_38] : memref<8x256xf32, #tpu.memory_space<vmem>>, vector<1x256xf32>
    %86 = vector.broadcast %85 : vector<1x256xf32> to vector<16x256xf32>
    %87 = arith.addf %84, %86 : vector<16x256xf32>
    %88 = math.tanh %87 : vector<16x256xf32>
    %89 = arith.truncf %65 : vector<16x256xf32> to vector<16x256xbf16>
    %c2624 = arith.constant 2624 : index
    %c0_39 = arith.constant 0 : index
    %90 = vector.load %arg1[%c2624, %c0_39] : memref<3392x256xbf16, #tpu.memory_space<vmem>>, vector<256x256xbf16>
    %cst_40 = arith.constant dense<0.000000e+00> : vector<16x256xf32>
    %91 = tpu.matmul %89, %90, %cst_40 {dimension_numbers = #tpu.dot_dimension_numbers<[1], [0], [0], [1], [0, 0, 1, 1], [], []>} : vector<16x256xbf16>, vector<256x256xbf16>, vector<16x256xf32> -> vector<16x256xf32>
    %92 = arith.truncf %88 : vector<16x256xf32> to vector<16x256xbf16>
    %c2880 = arith.constant 2880 : index
    %c0_41 = arith.constant 0 : index
    %93 = vector.load %arg1[%c2880, %c0_41] : memref<3392x256xbf16, #tpu.memory_space<vmem>>, vector<256x256xbf16>
    %cst_42 = arith.constant dense<0.000000e+00> : vector<16x256xf32>
    %94 = tpu.matmul %92, %93, %cst_42 {dimension_numbers = #tpu.dot_dimension_numbers<[1], [0], [0], [1], [0, 0, 1, 1], [], []>} : vector<16x256xbf16>, vector<256x256xbf16>, vector<16x256xf32> -> vector<16x256xf32>
    %95 = arith.addf %91, %94 : vector<16x256xf32>
    %c6 = arith.constant 6 : index
    %c0_43 = arith.constant 0 : index
    %96 = vector.load %arg2[%c6, %c0_43] : memref<8x256xf32, #tpu.memory_space<vmem>>, vector<1x256xf32>
    %97 = vector.broadcast %96 : vector<1x256xf32> to vector<16x256xf32>
    %98 = arith.addf %95, %97 : vector<16x256xf32>
    %99 = math.tanh %98 : vector<16x256xf32>
    %100 = arith.truncf %99 : vector<16x256xf32> to vector<16x256xbf16>
    %c3136 = arith.constant 3136 : index
    %c0_44 = arith.constant 0 : index
    %101 = vector.load %arg1[%c3136, %c0_44] : memref<3392x256xbf16, #tpu.memory_space<vmem>>, vector<256x256xbf16>
    %cst_45 = arith.constant dense<0.000000e+00> : vector<16x256xf32>
    %102 = tpu.matmul %100, %101, %cst_45 {dimension_numbers = #tpu.dot_dimension_numbers<[1], [0], [0], [1], [0, 0, 1, 1], [], []>} : vector<16x256xbf16>, vector<256x256xbf16>, vector<16x256xf32> -> vector<16x256xf32>
    %c7 = arith.constant 7 : index
    %c0_46 = arith.constant 0 : index
    %103 = vector.load %arg2[%c7, %c0_46] : memref<8x256xf32, #tpu.memory_space<vmem>>, vector<1x256xf32>
    %104 = vector.broadcast %103 : vector<1x256xf32> to vector<16x256xf32>
    %105 = arith.addf %102, %104 : vector<16x256xf32>
    %c0_47 = arith.constant 0 : index
    %c0_48 = arith.constant 0 : index
    %106 = vector.load %arg3[%c0_47, %c0_48] : memref<16x256xf32, #tpu.memory_space<vmem>>, vector<16x256xf32>
    tpu.vector_store %arg3[%c0_47, %c0_48], %105 {strides = array<i32>} : memref<16x256xf32, #tpu.memory_space<vmem>>, vector<16x256xf32>,
    return
  }
}

</mosaic_0001>

<llo_original>
// kernel: cnn_model_forward.1
$region0: #{cnn_model_forward.1}
  #allocation0 [shape = 'u32[]', space=smem, size = 0x4, offset = 0x4, fixed_abs, tag = 'smem constant byte address 0x4 - core index']
  #allocation1 [shape = 'u32[72,128]{1,0:T(1,128)}', space=vmem, size = 0x9000, scoped, tag = 'internal scratch']
  %s0 = inlined_call_operand.vmem [shape: bf16[160,128], index: 0, kind: input, shape index: {}]
  %s1 = inlined_call_operand.hbm [shape: bf16[3392,256], index: 1, kind: input, shape index: {}]
  %s2 = inlined_call_operand.hbm [shape: f32[8,256], index: 2, kind: input, shape index: {}]
  %s3 = inlined_call_operand.vmem [shape: f32[16,256], index: 3, kind: output, shape index: {}]
  %s4 = sld [smem:[#allocation0]]
  $region30: #{cnn_model_forward.1} parent=0
    _
  %s6 = ssub.s32 1, %s4
  %s7 = scalar_select 0, %s6, %s4
  $region1: #{cnn_model_forward.1} parent=0
    #allocation2 [shape = 'u8[1736704]{0}', space=vmem, size = 0x1a8000, scoped, tag = 'input window, operand 1, single buffered']
    #allocation3 [shape = 's32[1]{0}', space=sflag, size = 0x4, scoped, tag = 'scoped memory for cnn_model_forward.1']
    #allocation4 [shape = 'u8[8192]{0}', space=vmem, size = 0x2000, scoped, tag = 'input window, operand 2, single buffered']
    #allocation5 [shape = 's32[1]{0}', space=sflag, size = 0x4, scoped, tag = 'scoped memory for cnn_model_forward.1']
    %8 = vsyncpa [#allocation3], 0
    %9 = vsyncpa [#allocation5], 0
    // Predicated region
    $region2: #{cnn_model_forward.1} parent=1 // pred_check
      _
    $region3: #{cnn_model_forward.1} parent=1 // pred_check_branch
      %11 = sbr.rel (0) target = $region5
    $region4: #{cnn_model_forward.1} parent=1 // pred_region
      _
    $region5: #{cnn_model_forward.1} parent=1 // pred_fallthru
      _
    // Predicated region
    $region6: #{cnn_model_forward.1} parent=1 // pred_check
      _
    $region7: #{cnn_model_forward.1} parent=1 // pred_check_branch
      %13 = sbr.rel (0) target = $region9
    $region8: #{cnn_model_forward.1} parent=1 // pred_region
      %15 = vsyncadd [#allocation3], 0
      %s16 = sshll.u32 %s1, 4
      %s17 = int_to_ptr.hbm [resolvable:$true] %s16
      %s18 = sshll.u32 [#allocation2], 4
      %s19 = int_to_ptr.vmem [resolvable:$true] %s18
      %24 = dma.hbm_to_vmem [thread:$0]  %s17, 54272, %s19, [#allocation3], 128, 128, 8
    $region9: #{cnn_model_forward.1} parent=1 // pred_fallthru
      _
    // Predicated region
    $region10: #{cnn_model_forward.1} parent=1 // pred_check
      _
    $region11: #{cnn_model_forward.1} parent=1 // pred_check_branch
      %26 = sbr.rel (0) target = $region13
    $region12: #{cnn_model_forward.1} parent=1 // pred_region
      %28 = vsyncadd [#allocation5], 0
      %s30 = sshll.u32 %s2, 4
      %s31 = int_to_ptr.hbm [resolvable:$true] %s30
      %s32 = sshll.u32 [#allocation4], 4
      %s33 = int_to_ptr.vmem [resolvable:$true] %s32
      %35 = dma.hbm_to_vmem [thread:$0]  %s31, 256, %s33, [#allocation5]
    $region13: #{cnn_model_forward.1} parent=1 // pred_fallthru
      _
    // Predicated region
    $region14: #{cnn_model_forward.1} parent=1 // pred_check
      _
    $region15: #{cnn_model_forward.1} parent=1 // pred_check_branch
      %37 = sbr.rel (0) target = $region17
    $region16: #{cnn_model_forward.1} parent=1 // pred_region
      %39 = dma.done [#allocation3], 54272
    $region17: #{cnn_model_forward.1} parent=1 // pred_fallthru
      _
    // Predicated region
    $region18: #{cnn_model_forward.1} parent=1 // pred_check
      _
    $region19: #{cnn_model_forward.1} parent=1 // pred_check_branch
      %41 = sbr.rel (0) target = $region21
    $region20: #{cnn_model_forward.1} parent=1 // pred_region
      %43 = dma.done [#allocation5], 256
    $region21: #{cnn_model_forward.1} parent=1 // pred_fallthru
      _
    %v45 = vld [vmem:[%s0] sm:$0xf]
    %v46 = vld [vmem:[%s0 + $0x4] sm:$0xf]
    %v47 = vld [vmem:[%s0 + $0x8] sm:$0xf]
    %v48 = vld [vmem:[%s0 + $0xc] sm:$0xf]
    %v49 = vld [vmem:[%s0 + $0x10] sm:$0xf]
    %v50 = vld [vmem:[%s0 + $0x14] sm:$0xf]
    %v51 = vld [vmem:[%s0 + $0x18] sm:$0xf]
    %v52 = vld [vmem:[%s0 + $0x1c] sm:$0xf]
    %v53 = vld [vmem:[%s0 + $0x20] sm:$0xf]
    %v54 = vld [vmem:[%s0 + $0x24] sm:$0xf]
    %v55 = vld [vmem:[%s0 + $0x28] sm:$0xf]
    %v56 = vld [vmem:[%s0 + $0x2c] sm:$0xf]
    %v57 = vld [vmem:[%s0 + $0x30] sm:$0xf]
    %v58 = vld [vmem:[%s0 + $0x34] sm:$0xf]
    %v59 = vld [vmem:[%s0 + $0x38] sm:$0xf]
    %v60 = vld [vmem:[%s0 + $0x3c] sm:$0xf]
    %v61 = vld [vmem:[%s0 + $0x40] sm:$0xf]
    %v62 = vld [vmem:[%s0 + $0x44] sm:$0xf]
    %v63 = vld [vmem:[%s0 + $0x48] sm:$0xf]
    %v64 = vld [vmem:[%s0 + $0x4c] sm:$0xf]
    %v65 = vld [vmem:[#allocation2] sm:$0xff]
    %v66 = vld [vmem:[#allocation2 + $0x8] sm:$0xff]
    %v67 = vld [vmem:[#allocation2 + $0x10] sm:$0xff]
    %v68 = vld [vmem:[#allocation2 + $0x18] sm:$0xff]
    %v69 = vld [vmem:[#allocation2 + $0x20] sm:$0xff]
    %v70 = vld [vmem:[#allocation2 + $0x28] sm:$0xff]
    %v71 = vld [vmem:[#allocation2 + $0x30] sm:$0xff]
    %v72 = vld [vmem:[#allocation2 + $0x38] sm:$0xff]
    %v73 = vld [vmem:[#allocation2 + $0x40] sm:$0xff]
    %v74 = vld [vmem:[#allocation2 + $0x48] sm:$0xff]
    %v75 = vld [vmem:[#allocation2 + $0x50] sm:$0xff]
    %v76 = vld [vmem:[#allocation2 + $0x58] sm:$0xff]
    %v77 = vld [vmem:[#allocation2 + $0x60] sm:$0xff]
    %v78 = vld [vmem:[#allocation2 + $0x68] sm:$0xff]
    %v79 = vld [vmem:[#allocation2 + $0x70] sm:$0xff]
    %v80 = vld [vmem:[#allocation2 + $0x78] sm:$0xff]
    %v81 = vld [vmem:[#allocation4] ss:$8 sm:$0x3]
    %v83 = vperm.slane %v81, 0
    %v84 = vperm.slane %v81, 1
    %v105 = vunpack.c.l.b16 %v45
    %v106 = vunpack.c.l.b16 %v46
    %v107 = vunpack.c.l.b16 %v47
    %v108 = vunpack.c.l.b16 %v48
    %v109 = vunpack.c.l.b16 %v49
    %v110 = vunpack.c.l.b16 %v50
    %v111 = vunpack.c.l.b16 %v51
    %v112 = vunpack.c.l.b16 %v52
    %v113 = vunpack.c.l.b16 %v53
    %v114 = vunpack.c.l.b16 %v54
    %v115 = vunpack.c.l.b16 %v55
    %v116 = vunpack.c.l.b16 %v56
    %v117 = vunpack.c.l.b16 %v57
    %v118 = vunpack.c.l.b16 %v58
    %v119 = vunpack.c.l.b16 %v59
    %v120 = vunpack.c.l.b16 %v60
    %v121 = vunpack.c.l.b16 %v61
    %v122 = vunpack.c.l.b16 %v62
    %v123 = vpack.c.b16 %v106, %v105
    %v124 = vpack.c.b16 %v108, %v107
    %v125 = vpack.c.b16 %v110, %v109
    %v126 = vpack.c.b16 %v112, %v111
    %v127 = vpack.c.b16 %v114, %v113
    %v128 = vpack.c.b16 %v116, %v115
    %v129 = vpack.c.b16 %v118, %v117
    %v130 = vpack.c.b16 %v120, %v119
    %v131 = vpack.c.b16 %v122, %v121
    %v157 = vunpack.c.l.b16 %v65
    %v158 = vunpack.c.h.b16 %v65
    %v159 = vunpack.c.l.b16 %v66
    %v160 = vunpack.c.h.b16 %v66
    %v161 = vunpack.c.l.b16 %v67
    %v162 = vunpack.c.h.b16 %v67
    %v163 = vunpack.c.l.b16 %v68
    %v164 = vunpack.c.h.b16 %v68
    %v165 = vunpack.c.l.b16 %v69
    %v166 = vunpack.c.h.b16 %v69
    %v167 = vunpack.c.l.b16 %v70
    %v168 = vunpack.c.h.b16 %v70
    %v169 = vunpack.c.l.b16 %v71
    %v170 = vunpack.c.h.b16 %v71
    %v171 = vunpack.c.l.b16 %v72
    %v172 = vunpack.c.h.b16 %v72
    %v173 = vunpack.c.l.b16 %v73
    %v174 = vunpack.c.h.b16 %v73
    %v175 = vunpack.c.l.b16 %v74
    %v176 = vunpack.c.h.b16 %v74
    %v177 = vunpack.c.l.b16 %v75
    %v178 = vunpack.c.h.b16 %v75
    %v179 = vunpack.c.l.b16 %v76
    %v180 = vunpack.c.h.b16 %v76
    %v181 = vunpack.c.l.b16 %v77
    %v182 = vunpack.c.h.b16 %v77
    %v183 = vunpack.c.l.b16 %v78
    %v184 = vunpack.c.h.b16 %v78
    %v185 = vunpack.c.l.b16 %v79
    %v186 = vunpack.c.h.b16 %v79
    %v187 = vunpack.c.l.b16 %v80
    %v188 = vunpack.c.h.b16 %v80
    %v189 = vpack.c.b16 %v159, %v157
    %v190 = vpack.c.b16 %v160, %v158
    %v191 = vpack.c.b16 %v163, %v161
    %v192 = vpack.c.b16 %v164, %v162
    %v193 = vpack.c.b16 %v167, %v165
    %v194 = vpack.c.b16 %v168, %v166
    %v195 = vpack.c.b16 %v171, %v169
    %v196 = vpack.c.b16 %v172, %v170
    %v197 = vpack.c.b16 %v175, %v173
    %v198 = vpack.c.b16 %v176, %v174
    %v199 = vpack.c.b16 %v179, %v177
    %v200 = vpack.c.b16 %v180, %v178
    %v201 = vpack.c.b16 %v183, %v181
    %v202 = vpack.c.b16 %v184, %v182
    %v203 = vpack.c.b16 %v187, %v185
    %v204 = vpack.c.b16 %v188, %v186
    %221 = vmatpush.bf16.msra.mxu0 %v203
    %222 = vmatpush.bf16.msra.mxu0 %v201
    %223 = vmatpush.bf16.msra.mxu0 %v199
    %224 = vmatpush.bf16.msra.mxu0 %v197
    %225 = vmatpush.bf16.msra.mxu0 %v195
    %226 = vmatpush.bf16.msra.mxu0 %v193
    %227 = vmatpush.bf16.msra.mxu0 %v191
    %228 = vmatpush.bf16.msra.mxu0 %v189
    %229 = vmatmul.bf16.gmra.mxu0 %v123
    %v230 = vpop.f32.mrf.mxu0
    %v231 = vadd.f32 %v83, %v230
    %v232 = vpop.f32.mrf.mxu0
    %v233 = vadd.f32 %v83, %v232
    %234 = vmatmul.bf16.gmra.mxu0 %v124
    %v235 = vpop.f32.mrf.mxu0
    %v236 = vadd.f32 %v83, %v235
    %v237 = vpop.f32.mrf.mxu0
    %v238 = vadd.f32 %v83, %v237
    %239 = vmatmul.bf16.gmra.mxu0 %v125
    %v240 = vpop.f32.mrf.mxu0
    %v241 = vadd.f32 %v83, %v240
    %v242 = vpop.f32.mrf.mxu0
    %v243 = vadd.f32 %v83, %v242
    %244 = vmatmul.bf16.gmra.mxu0 %v126
    %v245 = vpop.f32.mrf.mxu0
    %v246 = vadd.f32 %v83, %v245
    %v247 = vpop.f32.mrf.mxu0
    %v248 = vadd.f32 %v83, %v247
    %249 = vmatmul.bf16.gmra.mxu0 %v127
    %v250 = vpop.f32.mrf.mxu0
    %v251 = vadd.f32 %v83, %v250
    %v252 = vpop.f32.mrf.mxu0
    %v253 = vadd.f32 %v83, %v252
    %254 = vmatmul.bf16.gmra.mxu0 %v128
    %v255 = vpop.f32.mrf.mxu0
    %v256 = vadd.f32 %v83, %v255
    %v257 = vpop.f32.mrf.mxu0
    %v258 = vadd.f32 %v83, %v257
    %259 = vmatmul.bf16.gmra.mxu0 %v129
    %v260 = vpop.f32.mrf.mxu0
    %v261 = vadd.f32 %v83, %v260
    %v262 = vpop.f32.mrf.mxu0
    %v263 = vadd.f32 %v83, %v262
    %264 = vmatmul.bf16.gmra.mxu0 %v130
    %v265 = vpop.f32.mrf.mxu0
    %v266 = vadd.f32 %v83, %v265
    %v267 = vpop.f32.mrf.mxu0
    %v268 = vadd.f32 %v83, %v267
    %269 = vmatmul.bf16.gmra.mxu0 %v131
    %v270 = vpop.f32.mrf.mxu0
    %v271 = vadd.f32 %v83, %v270
    %v272 = vpop.f32.mrf.mxu0
    %v273 = vadd.f32 %v83, %v272
    %274 = vdwg.mxu0
    %275 = vmatpush.bf16.msra.mxu0 %v204
    %276 = vmatpush.bf16.msra.mxu0 %v202
    %277 = vmatpush.bf16.msra.mxu0 %v200
    %278 = vmatpush.bf16.msra.mxu0 %v198
    %279 = vmatpush.bf16.msra.mxu0 %v196
    %280 = vmatpush.bf16.msra.mxu0 %v194
    %281 = vmatpush.bf16.msra.mxu0 %v192
    %282 = vmatpush.bf16.msra.mxu0 %v190
    %283 = vmatmul.bf16.gmra.mxu0 %v123
    %v284 = vpop.f32.mrf.mxu0
    %v285 = vadd.f32 %v84, %v284
    %v286 = vpop.f32.mrf.mxu0
    %v287 = vadd.f32 %v84, %v286
    %288 = vmatmul.bf16.gmra.mxu0 %v124
    %v289 = vpop.f32.mrf.mxu0
    %v290 = vadd.f32 %v84, %v289
    %v291 = vpop.f32.mrf.mxu0
    %v292 = vadd.f32 %v84, %v291
    %293 = vmatmul.bf16.gmra.mxu0 %v125
    %v294 = vpop.f32.mrf.mxu0
    %v295 = vadd.f32 %v84, %v294
    %v296 = vpop.f32.mrf.mxu0
    %v297 = vadd.f32 %v84, %v296
    %298 = vmatmul.bf16.gmra.mxu0 %v126
    %v299 = vpop.f32.mrf.mxu0
    %v300 = vadd.f32 %v84, %v299
    %v301 = vpop.f32.mrf.mxu0
    %v302 = vadd.f32 %v84, %v301
    %303 = vmatmul.bf16.gmra.mxu0 %v127
    %v304 = vpop.f32.mrf.mxu0
    %v305 = vadd.f32 %v84, %v304
    %v306 = vpop.f32.mrf.mxu0
    %v307 = vadd.f32 %v84, %v306
    %308 = vmatmul.bf16.gmra.mxu0 %v128
    %v309 = vpop.f32.mrf.mxu0
    %v310 = vadd.f32 %v84, %v309
    %v311 = vpop.f32.mrf.mxu0
    %v312 = vadd.f32 %v84, %v311
    %313 = vmatmul.bf16.gmra.mxu0 %v129
    %v314 = vpop.f32.mrf.mxu0
    %v315 = vadd.f32 %v84, %v314
    %v316 = vpop.f32.mrf.mxu0
    %v317 = vadd.f32 %v84, %v316
    %318 = vmatmul.bf16.gmra.mxu0 %v130
    %v319 = vpop.f32.mrf.mxu0
    %v320 = vadd.f32 %v84, %v319
    %v321 = vpop.f32.mrf.mxu0
    %v322 = vadd.f32 %v84, %v321
    %323 = vmatmul.bf16.gmra.mxu0 %v131
    %v324 = vpop.f32.mrf.mxu0
    %v325 = vadd.f32 %v84, %v324
    %v326 = vpop.f32.mrf.mxu0
    %v327 = vadd.f32 %v84, %v326
    %328 = vdwg.mxu0
    %v329 = vtanh.pop %v231
    %v330 = vtanh.pop %v285
    %v331 = vtanh.pop %v233
    %v332 = vtanh.pop %v287
    %v333 = vtanh.pop %v236
    %v334 = vtanh.pop %v290
    %v335 = vtanh.pop %v238
    %v336 = vtanh.pop %v292
    %v337 = vtanh.pop %v241
    %v338 = vtanh.pop %v295
    %v339 = vtanh.pop %v243
    %v340 = vtanh.pop %v297
    %v341 = vtanh.pop %v246
    %v342 = vtanh.pop %v300
    %v343 = vtanh.pop %v248
    %v344 = vtanh.pop %v302
    %v345 = vtanh.pop %v251
    %v346 = vtanh.pop %v305
    %v347 = vtanh.pop %v253
    %v348 = vtanh.pop %v307
    %v349 = vtanh.pop %v256
    %v350 = vtanh.pop %v310
    %v351 = vtanh.pop %v258
    %v352 = vtanh.pop %v312
    %v353 = vtanh.pop %v261
    %v354 = vtanh.pop %v315
    %v355 = vtanh.pop %v263
    %v356 = vtanh.pop %v317
    %v357 = vtanh.pop %v266
    %v358 = vtanh.pop %v320
    %v359 = vtanh.pop %v268
    %v360 = vtanh.pop %v322
    %v361 = vtanh.pop %v271
    %v362 = vtanh.pop %v325
    %v363 = vtanh.pop %v273
    %v364 = vtanh.pop %v327
    %v365 = vpack.c.bf16 %v331, %v329
    %v366 = vpack.c.bf16 %v332, %v330
    %v367 = vpack.c.bf16 %v335, %v333
    %v368 = vpack.c.bf16 %v336, %v334
    %v369 = vpack.c.bf16 %v339, %v337
    %v370 = vpack.c.bf16 %v340, %v338
    %v371 = vpack.c.bf16 %v343, %v341
    %v372 = vpack.c.bf16 %v344, %v342
    %v373 = vpack.c.bf16 %v347, %v345
    %v374 = vpack.c.bf16 %v348, %v346
    %v375 = vpack.c.bf16 %v351, %v349
    %v376 = vpack.c.bf16 %v352, %v350
    %v377 = vld [vmem:[#allocation2 + $0x80] sm:$0xff]
    %v378 = vld [vmem:[#allocation2 + $0x88] sm:$0xff]
    %v379 = vld [vmem:[#allocation2 + $0x90] sm:$0xff]
    %v380 = vld [vmem:[#allocation2 + $0x98] sm:$0xff]
    %v381 = vld [vmem:[#allocation2 + $0xa0] sm:$0xff]
    %v382 = vld [vmem:[#allocation2 + $0xa8] sm:$0xff]
    %v383 = vld [vmem:[#allocation2 + $0xb0] sm:$0xff]
    %v384 = vld [vmem:[#allocation2 + $0xb8] sm:$0xff]
    %v385 = vld [vmem:[#allocation2 + $0xc0] sm:$0xff]
    %v386 = vld [vmem:[#allocation2 + $0xc8] sm:$0xff]
    %v387 = vld [vmem:[#allocation2 + $0xd0] sm:$0xff]
    %v388 = vld [vmem:[#allocation2 + $0xd8] sm:$0xff]
    %v389 = vld [vmem:[#allocation2 + $0xe0] sm:$0xff]
    %v390 = vld [vmem:[#allocation2 + $0xe8] sm:$0xff]
    %v391 = vld [vmem:[#allocation2 + $0xf0] sm:$0xff]
    %v392 = vld [vmem:[#allocation2 + $0xf8] sm:$0xff]
    %v393 = vld [vmem:[#allocation2 + $0x100] sm:$0xff]
    %v394 = vld [vmem:[#allocation2 + $0x108] sm:$0xff]
    %v395 = vpack.c.bf16 %v355, %v353
    %v396 = vpack.c.bf16 %v356, %v354
    %v397 = vld [vmem:[#allocation2 + $0x110] sm:$0xff]
    %v398 = vld [vmem:[#allocation2 + $0x118] sm:$0xff]
    %v399 = vld [vmem:[#allocation2 + $0x120] sm:$0xff]
    %v400 = vld [vmem:[#allocation2 + $0x128] sm:$0xff]
    %v401 = vld [vmem:[#allocation2 + $0x130] sm:$0xff]
    %v402 = vld [vmem:[#allocation2 + $0x138] sm:$0xff]
    %v403 = vld [vmem:[#allocation2 + $0x140] sm:$0xff]
    %v404 = vld [vmem:[#allocation2 + $0x148] sm:$0xff]
    %v405 = vld [vmem:[#allocation2 + $0x150] sm:$0xff]
    %v406 = vld [vmem:[#allocation2 + $0x158] sm:$0xff]
    %v407 = vld [vmem:[#allocation2 + $0x160] sm:$0xff]
    %v408 = vld [vmem:[#allocation2 + $0x168] sm:$0xff]
    %v409 = vld [vmem:[#allocation2 + $0x170] sm:$0xff]
    %v410 = vld [vmem:[#allocation2 + $0x178] sm:$0xff]
    %v411 = vld [vmem:[#allocation2 + $0x180] sm:$0xff]
    %v412 = vld [vmem:[#allocation2 + $0x188] sm:$0xff]
    %v413 = vld [vmem:[#allocation2 + $0x190] sm:$0xff]
    %v414 = vld [vmem:[#allocation2 + $0x198] sm:$0xff]
    %v433 = vunpack.c.l.b16 %v397
    %v434 = vunpack.c.h.b16 %v397
    %v435 = vunpack.c.l.b16 %v398
    %v436 = vunpack.c.h.b16 %v398
    %v437 = vunpack.c.l.b16 %v399
    %v438 = vunpack.c.h.b16 %v399
    %v439 = vunpack.c.l.b16 %v400
    %v440 = vunpack.c.h.b16 %v400
    %v441 = vunpack.c.l.b16 %v401
    %v442 = vunpack.c.h.b16 %v401
    %v443 = vunpack.c.l.b16 %v402
    %v444 = vunpack.c.h.b16 %v402
    %v445 = vunpack.c.l.b16 %v403
    %v446 = vunpack.c.h.b16 %v403
    %v447 = vunpack.c.l.b16 %v404
    %v448 = vunpack.c.h.b16 %v404
    %v449 = vunpack.c.l.b16 %v405
    %v450 = vunpack.c.h.b16 %v405
    %v451 = vunpack.c.l.b16 %v406
    %v452 = vunpack.c.h.b16 %v406
    %v453 = vunpack.c.l.b16 %v407
    %v454 = vunpack.c.h.b16 %v407
    %v455 = vunpack.c.l.b16 %v408
    %v456 = vunpack.c.h.b16 %v408
    %v457 = vunpack.c.l.b16 %v409
    %v458 = vunpack.c.h.b16 %v409
    %v459 = vunpack.c.l.b16 %v410
    %v460 = vunpack.c.h.b16 %v410
    %v461 = vunpack.c.l.b16 %v411
    %v462 = vunpack.c.h.b16 %v411
    %v463 = vunpack.c.l.b16 %v412
    %v464 = vunpack.c.h.b16 %v412
    %v465 = vunpack.c.l.b16 %v413
    %v466 = vunpack.c.h.b16 %v413
    %v467 = vunpack.c.l.b16 %v414
    %v468 = vunpack.c.h.b16 %v414
    %v469 = vpack.c.b16 %v435, %v433
    %v470 = vpack.c.b16 %v436, %v434
    %v471 = vpack.c.b16 %v439, %v437
    %v472 = vpack.c.b16 %v440, %v438
    %v473 = vpack.c.b16 %v443, %v441
    %v474 = vpack.c.b16 %v444, %v442
    %v475 = vpack.c.b16 %v447, %v445
    %v476 = vpack.c.b16 %v448, %v446
    %v477 = vpack.c.b16 %v451, %v449
    %v478 = vpack.c.b16 %v452, %v450
    %v479 = vpack.c.b16 %v455, %v453
    %v480 = vpack.c.b16 %v456, %v454
    %v481 = vpack.c.b16 %v459, %v457
    %v482 = vpack.c.b16 %v460, %v458
    %v483 = vpack.c.b16 %v463, %v461
    %v484 = vpack.c.b16 %v464, %v462
    %v485 = vpack.c.b16 %v467, %v465
    %v486 = vpack.c.b16 %v468, %v466
    %vm505 = vcmask 130048
    %v507 = vsel %vm505, %v368, 0
    %v510 = vsel %vm505, %v370, 0
    %v513 = vsel %vm505, %v372, 0
    %v516 = vsel %vm505, %v374, 0
    %v519 = vsel %vm505, %v376, 0
    %v522 = vsel %vm505, %v396, 0
    %524 = vmatpush.bf16.msra.mxu0 %v483
    %525 = vmatpush.bf16.msra.mxu0 %v481
    %526 = vmatpush.bf16.msra.mxu0 %v479
    %527 = vmatpush.bf16.msra.mxu0 %v477
    %528 = vmatpush.bf16.msra.mxu0 %v475
    %529 = vmatpush.bf16.msra.mxu0 %v473
    %530 = vmatpush.bf16.msra.mxu0 %v471
    %531 = vmatpush.bf16.msra.mxu0 %v469
    %532 = vmatmul.bf16.gmra.mxu0 %v367
    %v533 = vpop.f32.mrf.mxu0
    %v534 = vadd.f32 0.0, %v533
    %v535 = vpop.f32.mrf.mxu0
    %v536 = vadd.f32 0.0, %v535
    %537 = vmatmul.bf16.gmra.mxu0 %v369
    %v538 = vpop.f32.mrf.mxu0
    %v539 = vadd.f32 0.0, %v538
    %v540 = vpop.f32.mrf.mxu0
    %v541 = vadd.f32 0.0, %v540
    %542 = vmatmul.bf16.gmra.mxu0 %v371
    %v543 = vpop.f32.mrf.mxu0
    %v544 = vadd.f32 0.0, %v543
    %v545 = vpop.f32.mrf.mxu0
    %v546 = vadd.f32 0.0, %v545
    %547 = vmatmul.bf16.gmra.mxu0 %v373
    %v548 = vpop.f32.mrf.mxu0
    %v549 = vadd.f32 0.0, %v548
    %v550 = vpop.f32.mrf.mxu0
    %v551 = vadd.f32 0.0, %v550
    %552 = vmatmul.bf16.gmra.mxu0 %v375
    %v553 = vpop.f32.mrf.mxu0
    %v554 = vadd.f32 0.0, %v553
    %v555 = vpop.f32.mrf.mxu0
    %v556 = vadd.f32 0.0, %v555
    %557 = vmatmul.bf16.gmra.mxu0 %v395
    %v558 = vpop.f32.mrf.mxu0
    %v559 = vadd.f32 0.0, %v558
    %v560 = vpop.f32.mrf.mxu0
    %v561 = vadd.f32 0.0, %v560
    %562 = vdwg.mxu0
    %563 = vmatpush.bf16.msra.mxu0 0
    %564 = vmatpush.bf16.msra.mxu0 0
    %565 = vmatpush.bf16.msra.mxu0 0
    %566 = vmatpush.bf16.msra.mxu0 0
    %567 = vmatpush.bf16.msra.mxu0 0
    %568 = vmatpush.bf16.msra.mxu0 0
    %569 = vmatpush.bf16.msra.mxu0 0
    %570 = vmatpush.bf16.msra.mxu0 %v485
    %571 = vmatmul.bf16.gmra.mxu0 %v507
    %v572 = vpop.f32.mrf.mxu0
    %v573 = vadd.f32 %v534, %v572
    %v574 = vpop.f32.mrf.mxu0
    %v575 = vadd.f32 %v536, %v574
    %576 = vmatmul.bf16.gmra.mxu0 %v510
    %v577 = vpop.f32.mrf.mxu0
    %v578 = vadd.f32 %v539, %v577
    %v579 = vpop.f32.mrf.mxu0
    %v580 = vadd.f32 %v541, %v579
    %581 = vmatmul.bf16.gmra.mxu0 %v513
    %v582 = vpop.f32.mrf.mxu0
    %v583 = vadd.f32 %v544, %v582
    %v584 = vpop.f32.mrf.mxu0
    %v585 = vadd.f32 %v546, %v584
    %586 = vmatmul.bf16.gmra.mxu0 %v516
    %v587 = vpop.f32.mrf.mxu0
    %v588 = vadd.f32 %v549, %v587
    %v589 = vpop.f32.mrf.mxu0
    %v590 = vadd.f32 %v551, %v589
    %591 = vmatmul.bf16.gmra.mxu0 %v519
    %v592 = vpop.f32.mrf.mxu0
    %v593 = vadd.f32 %v554, %v592
    %v594 = vpop.f32.mrf.mxu0
    %v595 = vadd.f32 %v556, %v594
    %596 = vmatmul.bf16.gmra.mxu0 %v522
    %v597 = vpop.f32.mrf.mxu0
    %v598 = vadd.f32 %v559, %v597
    %v599 = vpop.f32.mrf.mxu0
    %v600 = vadd.f32 %v561, %v599
    %601 = vdwg.mxu0
    %602 = vmatpush.bf16.msra.mxu0 %v484
    %603 = vmatpush.bf16.msra.mxu0 %v482
    %604 = vmatpush.bf16.msra.mxu0 %v480
    %605 = vmatpush.bf16.msra.mxu0 %v478
    %606 = vmatpush.bf16.msra.mxu0 %v476
    %607 = vmatpush.bf16.msra.mxu0 %v474
    %608 = vmatpush.bf16.msra.mxu0 %v472
    %609 = vmatpush.bf16.msra.mxu0 %v470
    %610 = vmatmul.bf16.gmra.mxu0 %v367
    %v611 = vpop.f32.mrf.mxu0
    %v612 = vadd.f32 0.0, %v611
    %v613 = vpop.f32.mrf.mxu0
    %v614 = vadd.f32 0.0, %v613
    %615 = vmatmul.bf16.gmra.mxu0 %v369
    %v616 = vpop.f32.mrf.mxu0
    %v617 = vadd.f32 0.0, %v616
    %v618 = vpop.f32.mrf.mxu0
    %v619 = vadd.f32 0.0, %v618
    %620 = vmatmul.bf16.gmra.mxu0 %v371
    %v621 = vpop.f32.mrf.mxu0
    %v622 = vadd.f32 0.0, %v621
    %v623 = vpop.f32.mrf.mxu0
    %v624 = vadd.f32 0.0, %v623
    %625 = vmatmul.bf16.gmra.mxu0 %v373
    %v626 = vpop.f32.mrf.mxu0
    %v627 = vadd.f32 0.0, %v626
    %v628 = vpop.f32.mrf.mxu0
    %v629 = vadd.f32 0.0, %v628
    %630 = vmatmul.bf16.gmra.mxu0 %v375
    %v631 = vpop.f32.mrf.mxu0
    %v632 = vadd.f32 0.0, %v631
    %v633 = vpop.f32.mrf.mxu0
    %v634 = vadd.f32 0.0, %v633
    %635 = vmatmul.bf16.gmra.mxu0 %v395
    %v636 = vpop.f32.mrf.mxu0
    %v637 = vadd.f32 0.0, %v636
    %v638 = vpop.f32.mrf.mxu0
    %v639 = vadd.f32 0.0, %v638
    %640 = vdwg.mxu0
    %641 = vmatpush.bf16.msra.mxu0 0
    %642 = vmatpush.bf16.msra.mxu0 0
    %643 = vmatpush.bf16.msra.mxu0 0
    %644 = vmatpush.bf16.msra.mxu0 0
    %645 = vmatpush.bf16.msra.mxu0 0
    %646 = vmatpush.bf16.msra.mxu0 0
    %647 = vmatpush.bf16.msra.mxu0 0
    %648 = vmatpush.bf16.msra.mxu0 %v486
    %649 = vmatmul.bf16.gmra.mxu0 %v507
    %v650 = vpop.f32.mrf.mxu0
    %v651 = vadd.f32 %v612, %v650
    %v652 = vpop.f32.mrf.mxu0
    %v653 = vadd.f32 %v614, %v652
    %654 = vmatmul.bf16.gmra.mxu0 %v510
    %v655 = vpop.f32.mrf.mxu0
    %v656 = vadd.f32 %v617, %v655
    %v657 = vpop.f32.mrf.mxu0
    %v658 = vadd.f32 %v619, %v657
    %659 = vmatmul.bf16.gmra.mxu0 %v513
    %v660 = vpop.f32.mrf.mxu0
    %v661 = vadd.f32 %v622, %v660
    %v662 = vpop.f32.mrf.mxu0
    %v663 = vadd.f32 %v624, %v662
    %664 = vmatmul.bf16.gmra.mxu0 %v516
    %v665 = vpop.f32.mrf.mxu0
    %v666 = vadd.f32 %v627, %v665
    %v667 = vpop.f32.mrf.mxu0
    %v668 = vadd.f32 %v629, %v667
    %669 = vmatmul.bf16.gmra.mxu0 %v519
    %v670 = vpop.f32.mrf.mxu0
    %v671 = vadd.f32 %v632, %v670
    %v672 = vpop.f32.mrf.mxu0
    %v673 = vadd.f32 %v634, %v672
    %674 = vmatmul.bf16.gmra.mxu0 %v522
    %v675 = vpop.f32.mrf.mxu0
    %v676 = vadd.f32 %v637, %v675
    %v677 = vpop.f32.mrf.mxu0
    %v678 = vadd.f32 %v639, %v677
    %679 = vdwg.mxu0
    %v698 = vunpack.c.l.b16 %v377
    %v699 = vunpack.c.h.b16 %v377
    %v700 = vunpack.c.l.b16 %v378
    %v701 = vunpack.c.h.b16 %v378
    %v702 = vunpack.c.l.b16 %v379
    %v703 = vunpack.c.h.b16 %v379
    %v704 = vunpack.c.l.b16 %v380
    %v705 = vunpack.c.h.b16 %v380
    %v706 = vunpack.c.l.b16 %v381
    %v707 = vunpack.c.h.b16 %v381
    %v708 = vunpack.c.l.b16 %v382
    %v709 = vunpack.c.h.b16 %v382
    %v710 = vunpack.c.l.b16 %v383
    %v711 = vunpack.c.h.b16 %v383
    %v712 = vunpack.c.l.b16 %v384
    %v713 = vunpack.c.h.b16 %v384
    %v714 = vunpack.c.l.b16 %v385
    %v715 = vunpack.c.h.b16 %v385
    %v716 = vunpack.c.l.b16 %v386
    %v717 = vunpack.c.h.b16 %v386
    %v718 = vunpack.c.l.b16 %v387
    %v719 = vunpack.c.h.b16 %v387
    %v720 = vunpack.c.l.b16 %v388
    %v721 = vunpack.c.h.b16 %v388
    %v722 = vunpack.c.l.b16 %v389
    %v723 = vunpack.c.h.b16 %v389
    %v724 = vunpack.c.l.b16 %v390
    %v725 = vunpack.c.h.b16 %v390
    %v726 = vunpack.c.l.b16 %v391
    %v727 = vunpack.c.h.b16 %v391
    %v728 = vunpack.c.l.b16 %v392
    %v729 = vunpack.c.h.b16 %v392
    %v730 = vunpack.c.l.b16 %v393
    %v731 = vunpack.c.h.b16 %v393
    %v732 = vunpack.c.l.b16 %v394
    %v733 = vunpack.c.h.b16 %v394
    %v734 = vpack.c.b16 %v700, %v698
    %v735 = vpack.c.b16 %v701, %v699
    %v736 = vpack.c.b16 %v704, %v702
    %v737 = vpack.c.b16 %v705, %v703
    %v738 = vpack.c.b16 %v708, %v706
    %v739 = vpack.c.b16 %v709, %v707
    %v740 = vpack.c.b16 %v712, %v710
    %v741 = vpack.c.b16 %v713, %v711
    %v742 = vpack.c.b16 %v716, %v714
    %v743 = vpack.c.b16 %v717, %v715
    %v744 = vpack.c.b16 %v720, %v718
    %v745 = vpack.c.b16 %v721, %v719
    %v746 = vpack.c.b16 %v724, %v722
    %v747 = vpack.c.b16 %v725, %v723
    %v748 = vpack.c.b16 %v728, %v726
    %v749 = vpack.c.b16 %v729, %v727
    %v750 = vpack.c.b16 %v732, %v730
    %v751 = vpack.c.b16 %v733, %v731
    %v771 = vsel %vm505, %v366, 0
    %773 = vmatpush.bf16.msra.mxu0 %v748
    %774 = vmatpush.bf16.msra.mxu0 %v746
    %775 = vmatpush.bf16.msra.mxu0 %v744
    %776 = vmatpush.bf16.msra.mxu0 %v742
    %777 = vmatpush.bf16.msra.mxu0 %v740
    %778 = vmatpush.bf16.msra.mxu0 %v738
    %779 = vmatpush.bf16.msra.mxu0 %v736
    %780 = vmatpush.bf16.msra.mxu0 %v734
    %781 = vmatmul.bf16.gmra.mxu0 %v365
    %v782 = vpop.f32.mrf.mxu0
    %v783 = vadd.f32 %v573, %v782
    %v784 = vpop.f32.mrf.mxu0
    %v785 = vadd.f32 %v575, %v784
    %786 = vmatmul.bf16.gmra.mxu0 %v367
    %v787 = vpop.f32.mrf.mxu0
    %v788 = vadd.f32 %v578, %v787
    %v789 = vpop.f32.mrf.mxu0
    %v790 = vadd.f32 %v580, %v789
    %791 = vmatmul.bf16.gmra.mxu0 %v369
    %v792 = vpop.f32.mrf.mxu0
    %v793 = vadd.f32 %v583, %v792
    %v794 = vpop.f32.mrf.mxu0
    %v795 = vadd.f32 %v585, %v794
    %796 = vmatmul.bf16.gmra.mxu0 %v371
    %v797 = vpop.f32.mrf.mxu0
    %v798 = vadd.f32 %v588, %v797
    %v799 = vpop.f32.mrf.mxu0
    %v800 = vadd.f32 %v590, %v799
    %801 = vmatmul.bf16.gmra.mxu0 %v373
    %v802 = vpop.f32.mrf.mxu0
    %v803 = vadd.f32 %v593, %v802
    %v804 = vpop.f32.mrf.mxu0
    %v805 = vadd.f32 %v595, %v804
    %806 = vmatmul.bf16.gmra.mxu0 %v375
    %v807 = vpop.f32.mrf.mxu0
    %v808 = vadd.f32 %v598, %v807
    %v809 = vpop.f32.mrf.mxu0
    %v810 = vadd.f32 %v600, %v809
    %811 = vdwg.mxu0
    %812 = vmatpush.bf16.msra.mxu0 0
    %813 = vmatpush.bf16.msra.mxu0 0
    %814 = vmatpush.bf16.msra.mxu0 0
    %815 = vmatpush.bf16.msra.mxu0 0
    %816 = vmatpush.bf16.msra.mxu0 0
    %817 = vmatpush.bf16.msra.mxu0 0
    %818 = vmatpush.bf16.msra.mxu0 0
    %819 = vmatpush.bf16.msra.mxu0 %v750
    %820 = vmatmul.bf16.gmra.mxu0 %v771
    %v821 = vpop.f32.mrf.mxu0
    %v822 = vadd.f32 %v783, %v821
    %v823 = vpop.f32.mrf.mxu0
    %v824 = vadd.f32 %v785, %v823
    %825 = vmatmul.bf16.gmra.mxu0 %v507
    %v826 = vpop.f32.mrf.mxu0
    %v827 = vadd.f32 %v788, %v826
    %v828 = vpop.f32.mrf.mxu0
    %v829 = vadd.f32 %v790, %v828
    %830 = vmatmul.bf16.gmra.mxu0 %v510
    %v831 = vpop.f32.mrf.mxu0
    %v832 = vadd.f32 %v793, %v831
    %v833 = vpop.f32.mrf.mxu0
    %v834 = vadd.f32 %v795, %v833
    %835 = vmatmul.bf16.gmra.mxu0 %v513
    %v836 = vpop.f32.mrf.mxu0
    %v837 = vadd.f32 %v798, %v836
    %v838 = vpop.f32.mrf.mxu0
    %v839 = vadd.f32 %v800, %v838
    %840 = vmatmul.bf16.gmra.mxu0 %v516
    %v841 = vpop.f32.mrf.mxu0
    %v842 = vadd.f32 %v803, %v841
    %v843 = vpop.f32.mrf.mxu0
    %v844 = vadd.f32 %v805, %v843
    %845 = vmatmul.bf16.gmra.mxu0 %v519
    %v846 = vpop.f32.mrf.mxu0
    %v847 = vadd.f32 %v808, %v846
    %v848 = vpop.f32.mrf.mxu0
    %v849 = vadd.f32 %v810, %v848
    %850 = vdwg.mxu0
    %851 = vmatpush.bf16.msra.mxu0 %v749
    %852 = vmatpush.bf16.msra.mxu0 %v747
    %853 = vmatpush.bf16.msra.mxu0 %v745
    %854 = vmatpush.bf16.msra.mxu0 %v743
    %855 = vmatpush.bf16.msra.mxu0 %v741
    %856 = vmatpush.bf16.msra.mxu0 %v739
    %857 = vmatpush.bf16.msra.mxu0 %v737
    %858 = vmatpush.bf16.msra.mxu0 %v735
    %859 = vmatmul.bf16.gmra.mxu0 %v365
    %v860 = vpop.f32.mrf.mxu0
    %v861 = vadd.f32 %v651, %v860
    %v862 = vpop.f32.mrf.mxu0
    %v863 = vadd.f32 %v653, %v862
    %864 = vmatmul.bf16.gmra.mxu0 %v367
    %v865 = vpop.f32.mrf.mxu0
    %v866 = vadd.f32 %v656, %v865
    %v867 = vpop.f32.mrf.mxu0
    %v868 = vadd.f32 %v658, %v867
    %869 = vmatmul.bf16.gmra.mxu0 %v369
    %v870 = vpop.f32.mrf.mxu0
    %v871 = vadd.f32 %v661, %v870
    %v872 = vpop.f32.mrf.mxu0
    %v873 = vadd.f32 %v663, %v872
    %874 = vmatmul.bf16.gmra.mxu0 %v371
    %v875 = vpop.f32.mrf.mxu0
    %v876 = vadd.f32 %v666, %v875
    %v877 = vpop.f32.mrf.mxu0
    %v878 = vadd.f32 %v668, %v877
    %879 = vmatmul.bf16.gmra.mxu0 %v373
    %v880 = vpop.f32.mrf.mxu0
    %v881 = vadd.f32 %v671, %v880
    %v882 = vpop.f32.mrf.mxu0
    %v883 = vadd.f32 %v673, %v882
    %884 = vmatmul.bf16.gmra.mxu0 %v375
    %v885 = vpop.f32.mrf.mxu0
    %v886 = vadd.f32 %v676, %v885
    %v887 = vpop.f32.mrf.mxu0
    %v888 = vadd.f32 %v678, %v887
    %889 = vdwg.mxu0
    %890 = vmatpush.bf16.msra.mxu0 0
    %891 = vmatpush.bf16.msra.mxu0 0
    %892 = vmatpush.bf16.msra.mxu0 0
    %893 = vmatpush.bf16.msra.mxu0 0
    %894 = vmatpush.bf16.msra.mxu0 0
    %895 = vmatpush.bf16.msra.mxu0 0
    %896 = vmatpush.bf16.msra.mxu0 0
    %897 = vmatpush.bf16.msra.mxu0 %v751
    %898 = vmatmul.bf16.gmra.mxu0 %v771
    %v899 = vpop.f32.mrf.mxu0
    %v900 = vadd.f32 %v861, %v899
    %v901 = vpop.f32.mrf.mxu0
    %v902 = vadd.f32 %v863, %v901
    %903 = vmatmul.bf16.gmra.mxu0 %v507
    %v904 = vpop.f32.mrf.mxu0
    %v905 = vadd.f32 %v866, %v904
    %v906 = vpop.f32.mrf.mxu0
    %v907 = vadd.f32 %v868, %v906
    %908 = vmatmul.bf16.gmra.mxu0 %v510
    %v909 = vpop.f32.mrf.mxu0
    %v910 = vadd.f32 %v871, %v909
    %v911 = vpop.f32.mrf.mxu0
    %v912 = vadd.f32 %v873, %v911
    %913 = vmatmul.bf16.gmra.mxu0 %v513
    %v914 = vpop.f32.mrf.mxu0
    %v915 = vadd.f32 %v876, %v914
    %v916 = vpop.f32.mrf.mxu0
    %v917 = vadd.f32 %v878, %v916
    %918 = vmatmul.bf16.gmra.mxu0 %v516
    %v919 = vpop.f32.mrf.mxu0
    %v920 = vadd.f32 %v881, %v919
    %v921 = vpop.f32.mrf.mxu0
    %v922 = vadd.f32 %v883, %v921
    %923 = vmatmul.bf16.gmra.mxu0 %v519
    %v924 = vpop.f32.mrf.mxu0
    %v925 = vadd.f32 %v886, %v924
    %v926 = vpop.f32.mrf.mxu0
    %v927 = vadd.f32 %v888, %v926
    %928 = vdwg.mxu0
    %v929 = vpack.c.bf16 %v359, %v357
    %v930 = vpack.c.bf16 %v360, %v358
    %v931 = vld [vmem:[#allocation2 + $0x1a0] sm:$0xff]
    %v932 = vld [vmem:[#allocation2 + $0x1a8] sm:$0xff]
    %v933 = vld [vmem:[#allocation2 + $0x1b0] sm:$0xff]
    %v934 = vld [vmem:[#allocation2 + $0x1b8] sm:$0xff]
    %v935 = vld [vmem:[#allocation2 + $0x1c0] sm:$0xff]
    %v936 = vld [vmem:[#allocation2 + $0x1c8] sm:$0xff]
    %v937 = vld [vmem:[#allocation2 + $0x1d0] sm:$0xff]
    %v938 = vld [vmem:[#allocation2 + $0x1d8] sm:$0xff]
    %v939 = vld [vmem:[#allocation2 + $0x1e0] sm:$0xff]
    %v940 = vld [vmem:[#allocation2 + $0x1e8] sm:$0xff]
    %v941 = vld [vmem:[#allocation2 + $0x1f0] sm:$0xff]
    %v942 = vld [vmem:[#allocation2 + $0x1f8] sm:$0xff]
    %v943 = vld [vmem:[#allocation2 + $0x200] sm:$0xff]
    %v944 = vld [vmem:[#allocation2 + $0x208] sm:$0xff]
    %v945 = vld [vmem:[#allocation2 + $0x210] sm:$0xff]
    %v946 = vld [vmem:[#allocation2 + $0x218] sm:$0xff]
    %v947 = vld [vmem:[#allocation2 + $0x220] sm:$0xff]
    %v948 = vld [vmem:[#allocation2 + $0x228] sm:$0xff]
    %v967 = vunpack.c.l.b16 %v931
    %v968 = vunpack.c.h.b16 %v931
    %v969 = vunpack.c.l.b16 %v932
    %v970 = vunpack.c.h.b16 %v932
    %v971 = vunpack.c.l.b16 %v933
    %v972 = vunpack.c.h.b16 %v933
    %v973 = vunpack.c.l.b16 %v934
    %v974 = vunpack.c.h.b16 %v934
    %v975 = vunpack.c.l.b16 %v935
    %v976 = vunpack.c.h.b16 %v935
    %v977 = vunpack.c.l.b16 %v936
    %v978 = vunpack.c.h.b16 %v936
    %v979 = vunpack.c.l.b16 %v937
    %v980 = vunpack.c.h.b16 %v937
    %v981 = vunpack.c.l.b16 %v938
    %v982 = vunpack.c.h.b16 %v938
    %v983 = vunpack.c.l.b16 %v939
    %v984 = vunpack.c.h.b16 %v939
    %v985 = vunpack.c.l.b16 %v940
    %v986 = vunpack.c.h.b16 %v940
    %v987 = vunpack.c.l.b16 %v941
    %v988 = vunpack.c.h.b16 %v941
    %v989 = vunpack.c.l.b16 %v942
    %v990 = vunpack.c.h.b16 %v942
    %v991 = vunpack.c.l.b16 %v943
    %v992 = vunpack.c.h.b16 %v943
    %v993 = vunpack.c.l.b16 %v944
    %v994 = vunpack.c.h.b16 %v944
    %v995 = vunpack.c.l.b16 %v945
    %v996 = vunpack.c.h.b16 %v945
    %v997 = vunpack.c.l.b16 %v946
    %v998 = vunpack.c.h.b16 %v946
    %v999 = vunpack.c.l.b16 %v947
    %v1000 = vunpack.c.h.b16 %v947
    %v1001 = vunpack.c.l.b16 %v948
    %v1002 = vunpack.c.h.b16 %v948
    %v1003 = vpack.c.b16 %v969, %v967
    %v1004 = vpack.c.b16 %v970, %v968
    %v1005 = vpack.c.b16 %v973, %v971
    %v1006 = vpack.c.b16 %v974, %v972
    %v1007 = vpack.c.b16 %v977, %v975
    %v1008 = vpack.c.b16 %v978, %v976
    %v1009 = vpack.c.b16 %v981, %v979
    %v1010 = vpack.c.b16 %v982, %v980
    %v1011 = vpack.c.b16 %v985, %v983
    %v1012 = vpack.c.b16 %v986, %v984
    %v1013 = vpack.c.b16 %v989, %v987
    %v1014 = vpack.c.b16 %v990, %v988
    %v1015 = vpack.c.b16 %v993, %v991
    %v1016 = vpack.c.b16 %v994, %v992
    %v1017 = vpack.c.b16 %v997, %v995
    %v1018 = vpack.c.b16 %v998, %v996
    %v1019 = vpack.c.b16 %v1001, %v999
    %v1020 = vpack.c.b16 %v1002, %v1000
    %v1040 = vsel %vm505, %v930, 0
    %1042 = vmatpush.bf16.msra.mxu0 %v1017
    %1043 = vmatpush.bf16.msra.mxu0 %v1015
    %1044 = vmatpush.bf16.msra.mxu0 %v1013
    %1045 = vmatpush.bf16.msra.mxu0 %v1011
    %1046 = vmatpush.bf16.msra.mxu0 %v1009
    %1047 = vmatpush.bf16.msra.mxu0 %v1007
    %1048 = vmatpush.bf16.msra.mxu0 %v1005
    %1049 = vmatpush.bf16.msra.mxu0 %v1003
    %1050 = vmatmul.bf16.gmra.mxu0 %v369
    %v1051 = vpop.f32.mrf.mxu0
    %v1052 = vadd.f32 0.0, %v1051
    %v1053 = vpop.f32.mrf.mxu0
    %v1054 = vadd.f32 0.0, %v1053
    %1055 = vmatmul.bf16.gmra.mxu0 %v371
    %v1056 = vpop.f32.mrf.mxu0
    %v1057 = vadd.f32 0.0, %v1056
    %v1058 = vpop.f32.mrf.mxu0
    %v1059 = vadd.f32 0.0, %v1058
    %1060 = vmatmul.bf16.gmra.mxu0 %v373
    %v1061 = vpop.f32.mrf.mxu0
    %v1062 = vadd.f32 0.0, %v1061
    %v1063 = vpop.f32.mrf.mxu0
    %v1064 = vadd.f32 0.0, %v1063
    %1065 = vmatmul.bf16.gmra.mxu0 %v375
    %v1066 = vpop.f32.mrf.mxu0
    %v1067 = vadd.f32 0.0, %v1066
    %v1068 = vpop.f32.mrf.mxu0
    %v1069 = vadd.f32 0.0, %v1068
    %1070 = vmatmul.bf16.gmra.mxu0 %v395
    %v1071 = vpop.f32.mrf.mxu0
    %v1072 = vadd.f32 0.0, %v1071
    %v1073 = vpop.f32.mrf.mxu0
    %v1074 = vadd.f32 0.0, %v1073
    %1075 = vmatmul.bf16.gmra.mxu0 %v929
    %v1076 = vpop.f32.mrf.mxu0
    %v1077 = vadd.f32 0.0, %v1076
    %v1078 = vpop.f32.mrf.mxu0
    %v1079 = vadd.f32 0.0, %v1078
    %1080 = vdwg.mxu0
    %1081 = vmatpush.bf16.msra.mxu0 0
    %1082 = vmatpush.bf16.msra.mxu0 0
    %1083 = vmatpush.bf16.msra.mxu0 0
    %1084 = vmatpush.bf16.msra.mxu0 0
    %1085 = vmatpush.bf16.msra.mxu0 0
    %1086 = vmatpush.bf16.msra.mxu0 0
    %1087 = vmatpush.bf16.msra.mxu0 0
    %1088 = vmatpush.bf16.msra.mxu0 %v1019
    %1089 = vmatmul.bf16.gmra.mxu0 %v510
    %v1090 = vpop.f32.mrf.mxu0
    %v1091 = vadd.f32 %v1052, %v1090
    %v1092 = vpop.f32.mrf.mxu0
    %v1093 = vadd.f32 %v1054, %v1092
    %1094 = vmatmul.bf16.gmra.mxu0 %v513
    %v1095 = vpop.f32.mrf.mxu0
    %v1096 = vadd.f32 %v1057, %v1095
    %v1097 = vpop.f32.mrf.mxu0
    %v1098 = vadd.f32 %v1059, %v1097
    %1099 = vmatmul.bf16.gmra.mxu0 %v516
    %v1100 = vpop.f32.mrf.mxu0
    %v1101 = vadd.f32 %v1062, %v1100
    %v1102 = vpop.f32.mrf.mxu0
    %v1103 = vadd.f32 %v1064, %v1102
    %1104 = vmatmul.bf16.gmra.mxu0 %v519
    %v1105 = vpop.f32.mrf.mxu0
    %v1106 = vadd.f32 %v1067, %v1105
    %v1107 = vpop.f32.mrf.mxu0
    %v1108 = vadd.f32 %v1069, %v1107
    %1109 = vmatmul.bf16.gmra.mxu0 %v522
    %v1110 = vpop.f32.mrf.mxu0
    %v1111 = vadd.f32 %v1072, %v1110
    %v1112 = vpop.f32.mrf.mxu0
    %v1113 = vadd.f32 %v1074, %v1112
    %1114 = vmatmul.bf16.gmra.mxu0 %v1040
    %v1115 = vpop.f32.mrf.mxu0
    %v1116 = vadd.f32 %v1077, %v1115
    %v1117 = vpop.f32.mrf.mxu0
    %v1118 = vadd.f32 %v1079, %v1117
    %1119 = vdwg.mxu0
    %1120 = vmatpush.bf16.msra.mxu0 %v1018
    %1121 = vmatpush.bf16.msra.mxu0 %v1016
    %1122 = vmatpush.bf16.msra.mxu0 %v1014
    %1123 = vmatpush.bf16.msra.mxu0 %v1012
    %1124 = vmatpush.bf16.msra.mxu0 %v1010
    %1125 = vmatpush.bf16.msra.mxu0 %v1008
    %1126 = vmatpush.bf16.msra.mxu0 %v1006
    %1127 = vmatpush.bf16.msra.mxu0 %v1004
    %1128 = vmatmul.bf16.gmra.mxu0 %v369
    %v1129 = vpop.f32.mrf.mxu0
    %v1130 = vadd.f32 0.0, %v1129
    %v1131 = vpop.f32.mrf.mxu0
    %v1132 = vadd.f32 0.0, %v1131
    %1133 = vmatmul.bf16.gmra.mxu0 %v371
    %v1134 = vpop.f32.mrf.mxu0
    %v1135 = vadd.f32 0.0, %v1134
    %v1136 = vpop.f32.mrf.mxu0
    %v1137 = vadd.f32 0.0, %v1136
    %1138 = vmatmul.bf16.gmra.mxu0 %v373
    %v1139 = vpop.f32.mrf.mxu0
    %v1140 = vadd.f32 0.0, %v1139
    %v1141 = vpop.f32.mrf.mxu0
    %v1142 = vadd.f32 0.0, %v1141
    %1143 = vmatmul.bf16.gmra.mxu0 %v375
    %v1144 = vpop.f32.mrf.mxu0
    %v1145 = vadd.f32 0.0, %v1144
    %v1146 = vpop.f32.mrf.mxu0
    %v1147 = vadd.f32 0.0, %v1146
    %1148 = vmatmul.bf16.gmra.mxu0 %v395
    %v1149 = vpop.f32.mrf.mxu0
    %v1150 = vadd.f32 0.0, %v1149
    %v1151 = vpop.f32.mrf.mxu0
    %v1152 = vadd.f32 0.0, %v1151
    %1153 = vmatmul.bf16.gmra.mxu0 %v929
    %v1154 = vpop.f32.mrf.mxu0
    %v1155 = vadd.f32 0.0, %v1154
    %v1156 = vpop.f32.mrf.mxu0
    %v1157 = vadd.f32 0.0, %v1156
    %1158 = vdwg.mxu0
    %1159 = vmatpush.bf16.msra.mxu0 0
    %1160 = vmatpush.bf16.msra.mxu0 0
    %1161 = vmatpush.bf16.msra.mxu0 0
    %1162 = vmatpush.bf16.msra.mxu0 0
    %1163 = vmatpush.bf16.msra.mxu0 0
    %1164 = vmatpush.bf16.msra.mxu0 0
    %1165 = vmatpush.bf16.msra.mxu0 0
    %1166 = vmatpush.bf16.msra.mxu0 %v1020
    %1167 = vmatmul.bf16.gmra.mxu0 %v510
    %v1168 = vpop.f32.mrf.mxu0
    %v1169 = vadd.f32 %v1130, %v1168
    %v1170 = vpop.f32.mrf.mxu0
    %v1171 = vadd.f32 %v1132, %v1170
    %1172 = vmatmul.bf16.gmra.mxu0 %v513
    %v1173 = vpop.f32.mrf.mxu0
    %v1174 = vadd.f32 %v1135, %v1173
    %v1175 = vpop.f32.mrf.mxu0
    %v1176 = vadd.f32 %v1137, %v1175
    %1177 = vmatmul.bf16.gmra.mxu0 %v516
    %v1178 = vpop.f32.mrf.mxu0
    %v1179 = vadd.f32 %v1140, %v1178
    %v1180 = vpop.f32.mrf.mxu0
    %v1181 = vadd.f32 %v1142, %v1180
    %1182 = vmatmul.bf16.gmra.mxu0 %v519
    %v1183 = vpop.f32.mrf.mxu0
    %v1184 = vadd.f32 %v1145, %v1183
    %v1185 = vpop.f32.mrf.mxu0
    %v1186 = vadd.f32 %v1147, %v1185
    %1187 = vmatmul.bf16.gmra.mxu0 %v522
    %v1188 = vpop.f32.mrf.mxu0
    %v1189 = vadd.f32 %v1150, %v1188
    %v1190 = vpop.f32.mrf.mxu0
    %v1191 = vadd.f32 %v1152, %v1190
    %1192 = vmatmul.bf16.gmra.mxu0 %v1040
    %v1193 = vpop.f32.mrf.mxu0
    %v1194 = vadd.f32 %v1155, %v1193
    %v1195 = vpop.f32.mrf.mxu0
    %v1196 = vadd.f32 %v1157, %v1195
    %1197 = vdwg.mxu0
    %v1198 = vadd.f32 %v822, %v1091
    %v1199 = vadd.f32 %v900, %v1169
    %v1200 = vadd.f32 %v824, %v1093
    %v1201 = vadd.f32 %v902, %v1171
    %v1202 = vadd.f32 %v827, %v1096
    %v1203 = vadd.f32 %v905, %v1174
    %v1204 = vadd.f32 %v829, %v1098
    %v1205 = vadd.f32 %v907, %v1176
    %v1206 = vadd.f32 %v832, %v1101
    %v1207 = vadd.f32 %v910, %v1179
    %v1208 = vadd.f32 %v834, %v1103
    %v1209 = vadd.f32 %v912, %v1181
    %v1210 = vadd.f32 %v837, %v1106
    %v1211 = vadd.f32 %v915, %v1184
    %v1212 = vadd.f32 %v839, %v1108
    %v1213 = vadd.f32 %v917, %v1186
    %v1214 = vadd.f32 %v842, %v1111
    %v1215 = vadd.f32 %v920, %v1189
    %v1216 = vadd.f32 %v844, %v1113
    %v1217 = vadd.f32 %v922, %v1191
    %v1218 = vadd.f32 %v847, %v1116
    %v1219 = vadd.f32 %v925, %v1194
    %v1220 = vadd.f32 %v849, %v1118
    %v1221 = vadd.f32 %v927, %v1196
    %v1222 = vpack.c.bf16 %v363, %v361
    %v1223 = vpack.c.bf16 %v364, %v362
    %v1224 = vld [vmem:[#allocation2 + $0x230] sm:$0xff]
    %v1225 = vld [vmem:[#allocation2 + $0x238] sm:$0xff]
    %v1226 = vld [vmem:[#allocation2 + $0x240] sm:$0xff]
    %v1227 = vld [vmem:[#allocation2 + $0x248] sm:$0xff]
    %v1228 = vld [vmem:[#allocation2 + $0x250] sm:$0xff]
    %v1229 = vld [vmem:[#allocation2 + $0x258] sm:$0xff]
    %v1230 = vld [vmem:[#allocation2 + $0x260] sm:$0xff]
    %v1231 = vld [vmem:[#allocation2 + $0x268] sm:$0xff]
    %v1232 = vld [vmem:[#allocation2 + $0x270] sm:$0xff]
    %v1233 = vld [vmem:[#allocation2 + $0x278] sm:$0xff]
    %v1234 = vld [vmem:[#allocation2 + $0x280] sm:$0xff]
    %v1235 = vld [vmem:[#allocation2 + $0x288] sm:$0xff]
    %v1236 = vld [vmem:[#allocation2 + $0x290] sm:$0xff]
    %v1237 = vld [vmem:[#allocation2 + $0x298] sm:$0xff]
    %v1238 = vld [vmem:[#allocation2 + $0x2a0] sm:$0xff]
    %v1239 = vld [vmem:[#allocation2 + $0x2a8] sm:$0xff]
    %v1240 = vld [vmem:[#allocation2 + $0x2b0] sm:$0xff]
    %v1241 = vld [vmem:[#allocation2 + $0x2b8] sm:$0xff]
    %v1260 = vunpack.c.l.b16 %v1224
    %v1261 = vunpack.c.h.b16 %v1224
    %v1262 = vunpack.c.l.b16 %v1225
    %v1263 = vunpack.c.h.b16 %v1225
    %v1264 = vunpack.c.l.b16 %v1226
    %v1265 = vunpack.c.h.b16 %v1226
    %v1266 = vunpack.c.l.b16 %v1227
    %v1267 = vunpack.c.h.b16 %v1227
    %v1268 = vunpack.c.l.b16 %v1228
    %v1269 = vunpack.c.h.b16 %v1228
    %v1270 = vunpack.c.l.b16 %v1229
    %v1271 = vunpack.c.h.b16 %v1229
    %v1272 = vunpack.c.l.b16 %v1230
    %v1273 = vunpack.c.h.b16 %v1230
    %v1274 = vunpack.c.l.b16 %v1231
    %v1275 = vunpack.c.h.b16 %v1231
    %v1276 = vunpack.c.l.b16 %v1232
    %v1277 = vunpack.c.h.b16 %v1232
    %v1278 = vunpack.c.l.b16 %v1233
    %v1279 = vunpack.c.h.b16 %v1233
    %v1280 = vunpack.c.l.b16 %v1234
    %v1281 = vunpack.c.h.b16 %v1234
    %v1282 = vunpack.c.l.b16 %v1235
    %v1283 = vunpack.c.h.b16 %v1235
    %v1284 = vunpack.c.l.b16 %v1236
    %v1285 = vunpack.c.h.b16 %v1236
    %v1286 = vunpack.c.l.b16 %v1237
    %v1287 = vunpack.c.h.b16 %v1237
    %v1288 = vunpack.c.l.b16 %v1238
    %v1289 = vunpack.c.h.b16 %v1238
    %v1290 = vunpack.c.l.b16 %v1239
    %v1291 = vunpack.c.h.b16 %v1239
    %v1292 = vunpack.c.l.b16 %v1240
    %v1293 = vunpack.c.h.b16 %v1240
    %v1294 = vunpack.c.l.b16 %v1241
    %v1295 = vunpack.c.h.b16 %v1241
    %v1296 = vpack.c.b16 %v1262, %v1260
    %v1297 = vpack.c.b16 %v1263, %v1261
    %v1298 = vpack.c.b16 %v1266, %v1264
    %v1299 = vpack.c.b16 %v1267, %v1265
    %v1300 = vpack.c.b16 %v1270, %v1268
    %v1301 = vpack.c.b16 %v1271, %v1269
    %v1302 = vpack.c.b16 %v1274, %v1272
    %v1303 = vpack.c.b16 %v1275, %v1273
    %v1304 = vpack.c.b16 %v1278, %v1276
    %v1305 = vpack.c.b16 %v1279, %v1277
    %v1306 = vpack.c.b16 %v1282, %v1280
    %v1307 = vpack.c.b16 %v1283, %v1281
    %v1308 = vpack.c.b16 %v1286, %v1284
    %v1309 = vpack.c.b16 %v1287, %v1285
    %v1310 = vpack.c.b16 %v1290, %v1288
    %v1311 = vpack.c.b16 %v1291, %v1289
    %v1312 = vpack.c.b16 %v1294, %v1292
    %v1313 = vpack.c.b16 %v1295, %v1293
    %v1333 = vsel %vm505, %v1223, 0
    %1335 = vmatpush.bf16.msra.mxu0 %v1310
    %1336 = vmatpush.bf16.msra.mxu0 %v1308
    %1337 = vmatpush.bf16.msra.mxu0 %v1306
    %1338 = vmatpush.bf16.msra.mxu0 %v1304
    %1339 = vmatpush.bf16.msra.mxu0 %v1302
    %1340 = vmatpush.bf16.msra.mxu0 %v1300
    %1341 = vmatpush.bf16.msra.mxu0 %v1298
    %1342 = vmatpush.bf16.msra.mxu0 %v1296
    %1343 = vmatmul.bf16.gmra.mxu0 %v371
    %v1344 = vpop.f32.mrf.mxu0
    %v1345 = vadd.f32 0.0, %v1344
    %v1346 = vpop.f32.mrf.mxu0
    %v1347 = vadd.f32 0.0, %v1346
    %1348 = vmatmul.bf16.gmra.mxu0 %v373
    %v1349 = vpop.f32.mrf.mxu0
    %v1350 = vadd.f32 0.0, %v1349
    %v1351 = vpop.f32.mrf.mxu0
    %v1352 = vadd.f32 0.0, %v1351
    %1353 = vmatmul.bf16.gmra.mxu0 %v375
    %v1354 = vpop.f32.mrf.mxu0
    %v1355 = vadd.f32 0.0, %v1354
    %v1356 = vpop.f32.mrf.mxu0
    %v1357 = vadd.f32 0.0, %v1356
    %1358 = vmatmul.bf16.gmra.mxu0 %v395
    %v1359 = vpop.f32.mrf.mxu0
    %v1360 = vadd.f32 0.0, %v1359
    %v1361 = vpop.f32.mrf.mxu0
    %v1362 = vadd.f32 0.0, %v1361
    %1363 = vmatmul.bf16.gmra.mxu0 %v929
    %v1364 = vpop.f32.mrf.mxu0
    %v1365 = vadd.f32 0.0, %v1364
    %v1366 = vpop.f32.mrf.mxu0
    %v1367 = vadd.f32 0.0, %v1366
    %1368 = vmatmul.bf16.gmra.mxu0 %v1222
    %v1369 = vpop.f32.mrf.mxu0
    %v1370 = vadd.f32 0.0, %v1369
    %v1371 = vpop.f32.mrf.mxu0
    %v1372 = vadd.f32 0.0, %v1371
    %1373 = vdwg.mxu0
    %1374 = vmatpush.bf16.msra.mxu0 0
    %1375 = vmatpush.bf16.msra.mxu0 0
    %1376 = vmatpush.bf16.msra.mxu0 0
    %1377 = vmatpush.bf16.msra.mxu0 0
    %1378 = vmatpush.bf16.msra.mxu0 0
    %1379 = vmatpush.bf16.msra.mxu0 0
    %1380 = vmatpush.bf16.msra.mxu0 0
    %1381 = vmatpush.bf16.msra.mxu0 %v1312
    %1382 = vmatmul.bf16.gmra.mxu0 %v513
    %v1383 = vpop.f32.mrf.mxu0
    %v1384 = vadd.f32 %v1345, %v1383
    %v1385 = vpop.f32.mrf.mxu0
    %v1386 = vadd.f32 %v1347, %v1385
    %1387 = vmatmul.bf16.gmra.mxu0 %v516
    %v1388 = vpop.f32.mrf.mxu0
    %v1389 = vadd.f32 %v1350, %v1388
    %v1390 = vpop.f32.mrf.mxu0
    %v1391 = vadd.f32 %v1352, %v1390
    %1392 = vmatmul.bf16.gmra.mxu0 %v519
    %v1393 = vpop.f32.mrf.mxu0
    %v1394 = vadd.f32 %v1355, %v1393
    %v1395 = vpop.f32.mrf.mxu0
    %v1396 = vadd.f32 %v1357, %v1395
    %1397 = vmatmul.bf16.gmra.mxu0 %v522
    %v1398 = vpop.f32.mrf.mxu0
    %v1399 = vadd.f32 %v1360, %v1398
    %v1400 = vpop.f32.mrf.mxu0
    %v1401 = vadd.f32 %v1362, %v1400
    %1402 = vmatmul.bf16.gmra.mxu0 %v1040
    %v1403 = vpop.f32.mrf.mxu0
    %v1404 = vadd.f32 %v1365, %v1403
    %v1405 = vpop.f32.mrf.mxu0
    %v1406 = vadd.f32 %v1367, %v1405
    %1407 = vmatmul.bf16.gmra.mxu0 %v1333
    %v1408 = vpop.f32.mrf.mxu0
    %v1409 = vadd.f32 %v1370, %v1408
    %v1410 = vpop.f32.mrf.mxu0
    %v1411 = vadd.f32 %v1372, %v1410
    %1412 = vdwg.mxu0
    %1413 = vmatpush.bf16.msra.mxu0 %v1311
    %1414 = vmatpush.bf16.msra.mxu0 %v1309
    %1415 = vmatpush.bf16.msra.mxu0 %v1307
    %1416 = vmatpush.bf16.msra.mxu0 %v1305
    %1417 = vmatpush.bf16.msra.mxu0 %v1303
    %1418 = vmatpush.bf16.msra.mxu0 %v1301
    %1419 = vmatpush.bf16.msra.mxu0 %v1299
    %1420 = vmatpush.bf16.msra.mxu0 %v1297
    %1421 = vmatmul.bf16.gmra.mxu0 %v371
    %v1422 = vpop.f32.mrf.mxu0
    %v1423 = vadd.f32 0.0, %v1422
    %v1424 = vpop.f32.mrf.mxu0
    %v1425 = vadd.f32 0.0, %v1424
    %1426 = vmatmul.bf16.gmra.mxu0 %v373
    %v1427 = vpop.f32.mrf.mxu0
    %v1428 = vadd.f32 0.0, %v1427
    %v1429 = vpop.f32.mrf.mxu0
    %v1430 = vadd.f32 0.0, %v1429
    %1431 = vmatmul.bf16.gmra.mxu0 %v375
    %v1432 = vpop.f32.mrf.mxu0
    %v1433 = vadd.f32 0.0, %v1432
    %v1434 = vpop.f32.mrf.mxu0
    %v1435 = vadd.f32 0.0, %v1434
    %1436 = vmatmul.bf16.gmra.mxu0 %v395
    %v1437 = vpop.f32.mrf.mxu0
    %v1438 = vadd.f32 0.0, %v1437
    %v1439 = vpop.f32.mrf.mxu0
    %v1440 = vadd.f32 0.0, %v1439
    %1441 = vmatmul.bf16.gmra.mxu0 %v929
    %v1442 = vpop.f32.mrf.mxu0
    %v1443 = vadd.f32 0.0, %v1442
    %v1444 = vpop.f32.mrf.mxu0
    %v1445 = vadd.f32 0.0, %v1444
    %1446 = vmatmul.bf16.gmra.mxu0 %v1222
    %v1447 = vpop.f32.mrf.mxu0
    %v1448 = vadd.f32 0.0, %v1447
    %v1449 = vpop.f32.mrf.mxu0
    %v1450 = vadd.f32 0.0, %v1449
    %1451 = vdwg.mxu0
    %1452 = vmatpush.bf16.msra.mxu0 0
    %1453 = vmatpush.bf16.msra.mxu0 0
    %1454 = vmatpush.bf16.msra.mxu0 0
    %1455 = vmatpush.bf16.msra.mxu0 0
    %1456 = vmatpush.bf16.msra.mxu0 0
    %1457 = vmatpush.bf16.msra.mxu0 0
    %1458 = vmatpush.bf16.msra.mxu0 0
    %1459 = vmatpush.bf16.msra.mxu0 %v1313
    %1460 = vmatmul.bf16.gmra.mxu0 %v513
    %v1461 = vpop.f32.mrf.mxu0
    %v1462 = vadd.f32 %v1423, %v1461
    %v1463 = vpop.f32.mrf.mxu0
    %v1464 = vadd.f32 %v1425, %v1463
    %1465 = vmatmul.bf16.gmra.mxu0 %v516
    %v1466 = vpop.f32.mrf.mxu0
    %v1467 = vadd.f32 %v1428, %v1466
    %v1468 = vpop.f32.mrf.mxu0
    %v1469 = vadd.f32 %v1430, %v1468
    %1470 = vmatmul.bf16.gmra.mxu0 %v519
    %v1471 = vpop.f32.mrf.mxu0
    %v1472 = vadd.f32 %v1433, %v1471
    %v1473 = vpop.f32.mrf.mxu0
    %v1474 = vadd.f32 %v1435, %v1473
    %1475 = vmatmul.bf16.gmra.mxu0 %v522
    %v1476 = vpop.f32.mrf.mxu0
    %v1477 = vadd.f32 %v1438, %v1476
    %v1478 = vpop.f32.mrf.mxu0
    %v1479 = vadd.f32 %v1440, %v1478
    %1480 = vmatmul.bf16.gmra.mxu0 %v1040
    %v1481 = vpop.f32.mrf.mxu0
    %v1482 = vadd.f32 %v1443, %v1481
    %v1483 = vpop.f32.mrf.mxu0
    %v1484 = vadd.f32 %v1445, %v1483
    %1485 = vmatmul.bf16.gmra.mxu0 %v1333
    %v1486 = vpop.f32.mrf.mxu0
    %v1487 = vadd.f32 %v1448, %v1486
    %v1488 = vpop.f32.mrf.mxu0
    %v1489 = vadd.f32 %v1450, %v1488
    %1490 = vdwg.mxu0
    %v1491 = vadd.f32 %v1198, %v1384
    %v1492 = vadd.f32 %v1199, %v1462
    %v1493 = vadd.f32 %v1200, %v1386
    %v1494 = vadd.f32 %v1201, %v1464
    %v1495 = vadd.f32 %v1202, %v1389
    %v1496 = vadd.f32 %v1203, %v1467
    %v1497 = vadd.f32 %v1204, %v1391
    %v1498 = vadd.f32 %v1205, %v1469
    %v1499 = vadd.f32 %v1206, %v1394
    %v1500 = vadd.f32 %v1207, %v1472
    %v1501 = vadd.f32 %v1208, %v1396
    %v1502 = vadd.f32 %v1209, %v1474
    %v1503 = vadd.f32 %v1210, %v1399
    %v1504 = vadd.f32 %v1211, %v1477
    %v1505 = vadd.f32 %v1212, %v1401
    %v1506 = vadd.f32 %v1213, %v1479
    %v1507 = vadd.f32 %v1214, %v1404
    %v1508 = vadd.f32 %v1215, %v1482
    %v1509 = vadd.f32 %v1216, %v1406
    %v1510 = vadd.f32 %v1217, %v1484
    %v1511 = vadd.f32 %v1218, %v1409
    %v1512 = vadd.f32 %v1219, %v1487
    %v1513 = vadd.f32 %v1220, %v1411
    %v1514 = vadd.f32 %v1221, %v1489
    %s1515 = scalar_lea.vmem [#allocation4], 1
    %v1516 = vld [vmem:[%s1515] ss:$8 sm:$0x3]
    %v1518 = vperm.slane %v1516, 0
    %v1519 = vperm.slane %v1516, 1
    %v1522 = vadd.f32 %v1491, %v1518
    %v1523 = vadd.f32 %v1492, %v1519
    %v1524 = vadd.f32 %v1493, %v1518
    %v1525 = vadd.f32 %v1494, %v1519
    %v1526 = vadd.f32 %v1495, %v1518
    %v1527 = vadd.f32 %v1496, %v1519
    %v1528 = vadd.f32 %v1497, %v1518
    %v1529 = vadd.f32 %v1498, %v1519
    %v1530 = vadd.f32 %v1499, %v1518
    %v1531 = vadd.f32 %v1500, %v1519
    %v1532 = vadd.f32 %v1501, %v1518
    %v1533 = vadd.f32 %v1502, %v1519
    %v1534 = vadd.f32 %v1503, %v1518
    %v1535 = vadd.f32 %v1504, %v1519
    %v1536 = vadd.f32 %v1505, %v1518
    %v1537 = vadd.f32 %v1506, %v1519
    %v1538 = vadd.f32 %v1507, %v1518
    %v1539 = vadd.f32 %v1508, %v1519
    %v1540 = vadd.f32 %v1509, %v1518
    %v1541 = vadd.f32 %v1510, %v1519
    %v1542 = vadd.f32 %v1511, %v1518
    %v1543 = vadd.f32 %v1512, %v1519
    %v1544 = vadd.f32 %v1513, %v1518
    %v1545 = vadd.f32 %v1514, %v1519
    %v1546 = vtanh.pop %v1522
    %v1547 = vtanh.pop %v1523
    %v1548 = vtanh.pop %v1524
    %v1549 = vtanh.pop %v1525
    %v1550 = vtanh.pop %v1526
    %v1551 = vtanh.pop %v1527
    %v1552 = vtanh.pop %v1528
    %v1553 = vtanh.pop %v1529
    %v1554 = vtanh.pop %v1530
    %v1555 = vtanh.pop %v1531
    %v1556 = vtanh.pop %v1532
    %v1557 = vtanh.pop %v1533
    %v1558 = vtanh.pop %v1534
    %v1559 = vtanh.pop %v1535
    %v1560 = vtanh.pop %v1536
    %v1561 = vtanh.pop %v1537
    %v1562 = vtanh.pop %v1538
    %v1563 = vtanh.pop %v1539
    %v1564 = vtanh.pop %v1540
    %v1565 = vtanh.pop %v1541
    %v1566 = vtanh.pop %v1542
    %v1567 = vtanh.pop %v1543
    %v1568 = vtanh.pop %v1544
    %v1569 = vtanh.pop %v1545
    %v1570 = vpack.c.bf16 %v1548, %v1546
    %v1571 = vpack.c.bf16 %v1549, %v1547
    %v1572 = vld [vmem:[#allocation2 + $0x2c0] sm:$0xff]
    %v1573 = vld [vmem:[#allocation2 + $0x2c8] sm:$0xff]
    %v1574 = vld [vmem:[#allocation2 + $0x2d0] sm:$0xff]
    %v1575 = vld [vmem:[#allocation2 + $0x2d8] sm:$0xff]
    %v1576 = vld [vmem:[#allocation2 + $0x2e0] sm:$0xff]
    %v1577 = vld [vmem:[#allocation2 + $0x2e8] sm:$0xff]
    %v1578 = vld [vmem:[#allocation2 + $0x2f0] sm:$0xff]
    %v1579 = vld [vmem:[#allocation2 + $0x2f8] sm:$0xff]
    %v1580 = vld [vmem:[#allocation2 + $0x300] sm:$0xff]
    %v1581 = vld [vmem:[#allocation2 + $0x308] sm:$0xff]
    %v1582 = vld [vmem:[#allocation2 + $0x310] sm:$0xff]
    %v1583 = vld [vmem:[#allocation2 + $0x318] sm:$0xff]
    %v1584 = vld [vmem:[#allocation2 + $0x320] sm:$0xff]
    %v1585 = vld [vmem:[#allocation2 + $0x328] sm:$0xff]
    %v1586 = vld [vmem:[#allocation2 + $0x330] sm:$0xff]
    %v1587 = vld [vmem:[#allocation2 + $0x338] sm:$0xff]
    %v1588 = vld [vmem:[#allocation2 + $0x340] sm:$0xff]
    %v1589 = vld [vmem:[#allocation2 + $0x348] sm:$0xff]
    %v1590 = vld [vmem:[#allocation2 + $0x350] sm:$0xff]
    %v1591 = vld [vmem:[#allocation2 + $0x358] sm:$0xff]
    %v1592 = vld [vmem:[#allocation2 + $0x360] sm:$0xff]
    %v1593 = vld [vmem:[#allocation2 + $0x368] sm:$0xff]
    %v1594 = vld [vmem:[#allocation2 + $0x370] sm:$0xff]
    %v1595 = vld [vmem:[#allocation2 + $0x378] sm:$0xff]
    %v1596 = vpack.c.bf16 %v1552, %v1550
    %v1597 = vpack.c.bf16 %v1553, %v1551
    %v1598 = vld [vmem:[#allocation2 + $0x380] sm:$0xff]
    %v1599 = vld [vmem:[#allocation2 + $0x388] sm:$0xff]
    %v1600 = vld [vmem:[#allocation2 + $0x390] sm:$0xff]
    %v1601 = vld [vmem:[#allocation2 + $0x398] sm:$0xff]
    %v1602 = vld [vmem:[#allocation2 + $0x3a0] sm:$0xff]
    %v1603 = vld [vmem:[#allocation2 + $0x3a8] sm:$0xff]
    %v1604 = vld [vmem:[#allocation2 + $0x3b0] sm:$0xff]
    %v1605 = vld [vmem:[#allocation2 + $0x3b8] sm:$0xff]
    %v1606 = vld [vmem:[#allocation2 + $0x3c0] sm:$0xff]
    %v1607 = vld [vmem:[#allocation2 + $0x3c8] sm:$0xff]
    %v1608 = vld [vmem:[#allocation2 + $0x3d0] sm:$0xff]
    %v1609 = vld [vmem:[#allocation2 + $0x3d8] sm:$0xff]
    %v1610 = vld [vmem:[#allocation2 + $0x3e0] sm:$0xff]
    %v1611 = vld [vmem:[#allocation2 + $0x3e8] sm:$0xff]
    %v1612 = vld [vmem:[#allocation2 + $0x3f0] sm:$0xff]
    %v1613 = vld [vmem:[#allocation2 + $0x3f8] sm:$0xff]
    %v1614 = vld [vmem:[#allocation2 + $0x400] sm:$0xff]
    %v1615 = vld [vmem:[#allocation2 + $0x408] sm:$0xff]
    %v1616 = vld [vmem:[#allocation2 + $0x410] sm:$0xff]
    %v1617 = vld [vmem:[#allocation2 + $0x418] sm:$0xff]
    %v1618 = vld [vmem:[#allocation2 + $0x420] sm:$0xff]
    %v1619 = vld [vmem:[#allocation2 + $0x428] sm:$0xff]
    %v1620 = vld [vmem:[#allocation2 + $0x430] sm:$0xff]
    %v1621 = vld [vmem:[#allocation2 + $0x438] sm:$0xff]
    %v1646 = vunpack.c.l.b16 %v1598
    %v1647 = vunpack.c.h.b16 %v1598
    %v1648 = vunpack.c.l.b16 %v1599
    %v1649 = vunpack.c.h.b16 %v1599
    %v1650 = vunpack.c.l.b16 %v1600
    %v1651 = vunpack.c.h.b16 %v1600
    %v1652 = vunpack.c.l.b16 %v1601
    %v1653 = vunpack.c.h.b16 %v1601
    %v1654 = vunpack.c.l.b16 %v1602
    %v1655 = vunpack.c.h.b16 %v1602
    %v1656 = vunpack.c.l.b16 %v1603
    %v1657 = vunpack.c.h.b16 %v1603
    %v1658 = vunpack.c.l.b16 %v1604
    %v1659 = vunpack.c.h.b16 %v1604
    %v1660 = vunpack.c.l.b16 %v1605
    %v1661 = vunpack.c.h.b16 %v1605
    %v1662 = vunpack.c.l.b16 %v1606
    %v1663 = vunpack.c.h.b16 %v1606
    %v1664 = vunpack.c.l.b16 %v1607
    %v1665 = vunpack.c.h.b16 %v1607
    %v1666 = vunpack.c.l.b16 %v1608
    %v1667 = vunpack.c.h.b16 %v1608
    %v1668 = vunpack.c.l.b16 %v1609
    %v1669 = vunpack.c.h.b16 %v1609
    %v1670 = vunpack.c.l.b16 %v1610
    %v1671 = vunpack.c.h.b16 %v1610
    %v1672 = vunpack.c.l.b16 %v1611
    %v1673 = vunpack.c.h.b16 %v1611
    %v1674 = vunpack.c.l.b16 %v1612
    %v1675 = vunpack.c.h.b16 %v1612
    %v1676 = vunpack.c.l.b16 %v1613
    %v1677 = vunpack.c.h.b16 %v1613
    %v1678 = vunpack.c.l.b16 %v1614
    %v1679 = vunpack.c.h.b16 %v1614
    %v1680 = vunpack.c.l.b16 %v1615
    %v1681 = vunpack.c.h.b16 %v1615
    %v1682 = vunpack.c.l.b16 %v1616
    %v1683 = vunpack.c.h.b16 %v1616
    %v1684 = vunpack.c.l.b16 %v1617
    %v1685 = vunpack.c.h.b16 %v1617
    %v1686 = vunpack.c.l.b16 %v1618
    %v1687 = vunpack.c.h.b16 %v1618
    %v1688 = vunpack.c.l.b16 %v1619
    %v1689 = vunpack.c.h.b16 %v1619
    %v1690 = vunpack.c.l.b16 %v1620
    %v1691 = vunpack.c.h.b16 %v1620
    %v1692 = vunpack.c.l.b16 %v1621
    %v1693 = vunpack.c.h.b16 %v1621
    %v1694 = vpack.c.b16 %v1648, %v1646
    %v1695 = vpack.c.b16 %v1649, %v1647
    %v1696 = vpack.c.b16 %v1652, %v1650
    %v1697 = vpack.c.b16 %v1653, %v1651
    %v1698 = vpack.c.b16 %v1656, %v1654
    %v1699 = vpack.c.b16 %v1657, %v1655
    %v1700 = vpack.c.b16 %v1660, %v1658
    %v1701 = vpack.c.b16 %v1661, %v1659
    %v1702 = vpack.c.b16 %v1664, %v1662
    %v1703 = vpack.c.b16 %v1665, %v1663
    %v1704 = vpack.c.b16 %v1668, %v1666
    %v1705 = vpack.c.b16 %v1669, %v1667
    %v1706 = vpack.c.b16 %v1672, %v1670
    %v1707 = vpack.c.b16 %v1673, %v1671
    %v1708 = vpack.c.b16 %v1676, %v1674
    %v1709 = vpack.c.b16 %v1677, %v1675
    %v1710 = vpack.c.b16 %v1680, %v1678
    %v1711 = vpack.c.b16 %v1681, %v1679
    %v1712 = vpack.c.b16 %v1684, %v1682
    %v1713 = vpack.c.b16 %v1685, %v1683
    %v1714 = vpack.c.b16 %v1688, %v1686
    %v1715 = vpack.c.b16 %v1689, %v1687
    %v1716 = vpack.c.b16 %v1692, %v1690
    %v1717 = vpack.c.b16 %v1693, %v1691
    %vm1742 = vcmask 523264
    %v1744 = vsel %vm1742, %v1597, 0
    %1746 = vmatpush.bf16.msra.mxu0 %v1708
    %1747 = vmatpush.bf16.msra.mxu0 %v1706
    %1748 = vmatpush.bf16.msra.mxu0 %v1704
    %1749 = vmatpush.bf16.msra.mxu0 %v1702
    %1750 = vmatpush.bf16.msra.mxu0 %v1700
    %1751 = vmatpush.bf16.msra.mxu0 %v1698
    %1752 = vmatpush.bf16.msra.mxu0 %v1696
    %1753 = vmatpush.bf16.msra.mxu0 %v1694
    %1754 = vmatmul.bf16.gmra.mxu0 %v1596
    %v1755 = vpop.f32.mrf.mxu0
    %v1756 = vadd.f32 0.0, %v1755
    %v1757 = vpop.f32.mrf.mxu0
    %v1758 = vadd.f32 0.0, %v1757
    %1759 = vdwg.mxu0
    %1760 = vmatpush.bf16.msra.mxu0 0
    %1761 = vmatpush.bf16.msra.mxu0 0
    %1762 = vmatpush.bf16.msra.mxu0 0
    %1763 = vmatpush.bf16.msra.mxu0 0
    %1764 = vmatpush.bf16.msra.mxu0 %v1716
    %1765 = vmatpush.bf16.msra.mxu0 %v1714
    %1766 = vmatpush.bf16.msra.mxu0 %v1712
    %1767 = vmatpush.bf16.msra.mxu0 %v1710
    %1768 = vmatmul.bf16.gmra.mxu0 %v1744
    %v1769 = vpop.f32.mrf.mxu0
    %v1770 = vadd.f32 %v1756, %v1769
    %v1771 = vpop.f32.mrf.mxu0
    %v1772 = vadd.f32 %v1758, %v1771
    %1773 = vdwg.mxu0
    %1774 = vmatpush.bf16.msra.mxu0 %v1709
    %1775 = vmatpush.bf16.msra.mxu0 %v1707
    %1776 = vmatpush.bf16.msra.mxu0 %v1705
    %1777 = vmatpush.bf16.msra.mxu0 %v1703
    %1778 = vmatpush.bf16.msra.mxu0 %v1701
    %1779 = vmatpush.bf16.msra.mxu0 %v1699
    %1780 = vmatpush.bf16.msra.mxu0 %v1697
    %1781 = vmatpush.bf16.msra.mxu0 %v1695
    %1782 = vmatmul.bf16.gmra.mxu0 %v1596
    %v1783 = vpop.f32.mrf.mxu0
    %v1784 = vadd.f32 0.0, %v1783
    %v1785 = vpop.f32.mrf.mxu0
    %v1786 = vadd.f32 0.0, %v1785
    %1787 = vdwg.mxu0
    %1788 = vmatpush.bf16.msra.mxu0 0
    %1789 = vmatpush.bf16.msra.mxu0 0
    %1790 = vmatpush.bf16.msra.mxu0 0
    %1791 = vmatpush.bf16.msra.mxu0 0
    %1792 = vmatpush.bf16.msra.mxu0 %v1717
    %1793 = vmatpush.bf16.msra.mxu0 %v1715
    %1794 = vmatpush.bf16.msra.mxu0 %v1713
    %1795 = vmatpush.bf16.msra.mxu0 %v1711
    %1796 = vmatmul.bf16.gmra.mxu0 %v1744
    %v1797 = vpop.f32.mrf.mxu0
    %v1798 = vadd.f32 %v1784, %v1797
    %v1799 = vpop.f32.mrf.mxu0
    %v1800 = vadd.f32 %v1786, %v1799
    %1801 = vdwg.mxu0
    %v1826 = vunpack.c.l.b16 %v1572
    %v1827 = vunpack.c.h.b16 %v1572
    %v1828 = vunpack.c.l.b16 %v1573
    %v1829 = vunpack.c.h.b16 %v1573
    %v1830 = vunpack.c.l.b16 %v1574
    %v1831 = vunpack.c.h.b16 %v1574
    %v1832 = vunpack.c.l.b16 %v1575
    %v1833 = vunpack.c.h.b16 %v1575
    %v1834 = vunpack.c.l.b16 %v1576
    %v1835 = vunpack.c.h.b16 %v1576
    %v1836 = vunpack.c.l.b16 %v1577
    %v1837 = vunpack.c.h.b16 %v1577
    %v1838 = vunpack.c.l.b16 %v1578
    %v1839 = vunpack.c.h.b16 %v1578
    %v1840 = vunpack.c.l.b16 %v1579
    %v1841 = vunpack.c.h.b16 %v1579
    %v1842 = vunpack.c.l.b16 %v1580
    %v1843 = vunpack.c.h.b16 %v1580
    %v1844 = vunpack.c.l.b16 %v1581
    %v1845 = vunpack.c.h.b16 %v1581
    %v1846 = vunpack.c.l.b16 %v1582
    %v1847 = vunpack.c.h.b16 %v1582
    %v1848 = vunpack.c.l.b16 %v1583
    %v1849 = vunpack.c.h.b16 %v1583
    %v1850 = vunpack.c.l.b16 %v1584
    %v1851 = vunpack.c.h.b16 %v1584
    %v1852 = vunpack.c.l.b16 %v1585
    %v1853 = vunpack.c.h.b16 %v1585
    %v1854 = vunpack.c.l.b16 %v1586
    %v1855 = vunpack.c.h.b16 %v1586
    %v1856 = vunpack.c.l.b16 %v1587
    %v1857 = vunpack.c.h.b16 %v1587
    %v1858 = vunpack.c.l.b16 %v1588
    %v1859 = vunpack.c.h.b16 %v1588
    %v1860 = vunpack.c.l.b16 %v1589
    %v1861 = vunpack.c.h.b16 %v1589
    %v1862 = vunpack.c.l.b16 %v1590
    %v1863 = vunpack.c.h.b16 %v1590
    %v1864 = vunpack.c.l.b16 %v1591
    %v1865 = vunpack.c.h.b16 %v1591
    %v1866 = vunpack.c.l.b16 %v1592
    %v1867 = vunpack.c.h.b16 %v1592
    %v1868 = vunpack.c.l.b16 %v1593
    %v1869 = vunpack.c.h.b16 %v1593
    %v1870 = vunpack.c.l.b16 %v1594
    %v1871 = vunpack.c.h.b16 %v1594
    %v1872 = vunpack.c.l.b16 %v1595
    %v1873 = vunpack.c.h.b16 %v1595
    %v1874 = vpack.c.b16 %v1828, %v1826
    %v1875 = vpack.c.b16 %v1829, %v1827
    %v1876 = vpack.c.b16 %v1832, %v1830
    %v1877 = vpack.c.b16 %v1833, %v1831
    %v1878 = vpack.c.b16 %v1836, %v1834
    %v1879 = vpack.c.b16 %v1837, %v1835
    %v1880 = vpack.c.b16 %v1840, %v1838
    %v1881 = vpack.c.b16 %v1841, %v1839
    %v1882 = vpack.c.b16 %v1844, %v1842
    %v1883 = vpack.c.b16 %v1845, %v1843
    %v1884 = vpack.c.b16 %v1848, %v1846
    %v1885 = vpack.c.b16 %v1849, %v1847
    %v1886 = vpack.c.b16 %v1852, %v1850
    %v1887 = vpack.c.b16 %v1853, %v1851
    %v1888 = vpack.c.b16 %v1856, %v1854
    %v1889 = vpack.c.b16 %v1857, %v1855
    %v1890 = vpack.c.b16 %v1860, %v1858
    %v1891 = vpack.c.b16 %v1861, %v1859
    %v1892 = vpack.c.b16 %v1864, %v1862
    %v1893 = vpack.c.b16 %v1865, %v1863
    %v1894 = vpack.c.b16 %v1868, %v1866
    %v1895 = vpack.c.b16 %v1869, %v1867
    %v1896 = vpack.c.b16 %v1872, %v1870
    %v1897 = vpack.c.b16 %v1873, %v1871
    %v1923 = vsel %vm1742, %v1571, 0
    %1925 = vmatpush.bf16.msra.mxu0 %v1888
    %1926 = vmatpush.bf16.msra.mxu0 %v1886
    %1927 = vmatpush.bf16.msra.mxu0 %v1884
    %1928 = vmatpush.bf16.msra.mxu0 %v1882
    %1929 = vmatpush.bf16.msra.mxu0 %v1880
    %1930 = vmatpush.bf16.msra.mxu0 %v1878
    %1931 = vmatpush.bf16.msra.mxu0 %v1876
    %1932 = vmatpush.bf16.msra.mxu0 %v1874
    %1933 = vmatmul.bf16.gmra.mxu0 %v1570
    %v1934 = vpop.f32.mrf.mxu0
    %v1935 = vadd.f32 %v1770, %v1934
    %v1936 = vpop.f32.mrf.mxu0
    %v1937 = vadd.f32 %v1772, %v1936
    %1938 = vdwg.mxu0
    %1939 = vmatpush.bf16.msra.mxu0 0
    %1940 = vmatpush.bf16.msra.mxu0 0
    %1941 = vmatpush.bf16.msra.mxu0 0
    %1942 = vmatpush.bf16.msra.mxu0 0
    %1943 = vmatpush.bf16.msra.mxu0 %v1896
    %1944 = vmatpush.bf16.msra.mxu0 %v1894
    %1945 = vmatpush.bf16.msra.mxu0 %v1892
    %1946 = vmatpush.bf16.msra.mxu0 %v1890
    %1947 = vmatmul.bf16.gmra.mxu0 %v1923
    %v1948 = vpop.f32.mrf.mxu0
    %v1949 = vadd.f32 %v1935, %v1948
    %v1950 = vpop.f32.mrf.mxu0
    %v1951 = vadd.f32 %v1937, %v1950
    %1952 = vdwg.mxu0
    %1953 = vmatpush.bf16.msra.mxu0 %v1889
    %1954 = vmatpush.bf16.msra.mxu0 %v1887
    %1955 = vmatpush.bf16.msra.mxu0 %v1885
    %1956 = vmatpush.bf16.msra.mxu0 %v1883
    %1957 = vmatpush.bf16.msra.mxu0 %v1881
    %1958 = vmatpush.bf16.msra.mxu0 %v1879
    %1959 = vmatpush.bf16.msra.mxu0 %v1877
    %1960 = vmatpush.bf16.msra.mxu0 %v1875
    %1961 = vmatmul.bf16.gmra.mxu0 %v1570
    %v1962 = vpop.f32.mrf.mxu0
    %v1963 = vadd.f32 %v1798, %v1962
    %v1964 = vpop.f32.mrf.mxu0
    %v1965 = vadd.f32 %v1800, %v1964
    %1966 = vdwg.mxu0
    %1967 = vmatpush.bf16.msra.mxu0 0
    %1968 = vmatpush.bf16.msra.mxu0 0
    %1969 = vmatpush.bf16.msra.mxu0 0
    %1970 = vmatpush.bf16.msra.mxu0 0
    %1971 = vmatpush.bf16.msra.mxu0 %v1897
    %1972 = vmatpush.bf16.msra.mxu0 %v1895
    %1973 = vmatpush.bf16.msra.mxu0 %v1893
    %1974 = vmatpush.bf16.msra.mxu0 %v1891
    %1975 = vmatmul.bf16.gmra.mxu0 %v1923
    %v1976 = vpop.f32.mrf.mxu0
    %v1977 = vadd.f32 %v1963, %v1976
    %v1978 = vpop.f32.mrf.mxu0
    %v1979 = vadd.f32 %v1965, %v1978
    %1980 = vdwg.mxu0
    %v1981 = vpack.c.bf16 %v1556, %v1554
    %v1982 = vpack.c.bf16 %v1557, %v1555
    %v1983 = vld [vmem:[#allocation2 + $0x440] sm:$0xff]
    %v1984 = vld [vmem:[#allocation2 + $0x448] sm:$0xff]
    %v1985 = vld [vmem:[#allocation2 + $0x450] sm:$0xff]
    %v1986 = vld [vmem:[#allocation2 + $0x458] sm:$0xff]
    %v1987 = vld [vmem:[#allocation2 + $0x460] sm:$0xff]
    %v1988 = vld [vmem:[#allocation2 + $0x468] sm:$0xff]
    %v1989 = vld [vmem:[#allocation2 + $0x470] sm:$0xff]
    %v1990 = vld [vmem:[#allocation2 + $0x478] sm:$0xff]
    %v1991 = vld [vmem:[#allocation2 + $0x480] sm:$0xff]
    %v1992 = vld [vmem:[#allocation2 + $0x488] sm:$0xff]
    %v1993 = vld [vmem:[#allocation2 + $0x490] sm:$0xff]
    %v1994 = vld [vmem:[#allocation2 + $0x498] sm:$0xff]
    %v1995 = vld [vmem:[#allocation2 + $0x4a0] sm:$0xff]
    %v1996 = vld [vmem:[#allocation2 + $0x4a8] sm:$0xff]
    %v1997 = vld [vmem:[#allocation2 + $0x4b0] sm:$0xff]
    %v1998 = vld [vmem:[#allocation2 + $0x4b8] sm:$0xff]
    %v1999 = vld [vmem:[#allocation2 + $0x4c0] sm:$0xff]
    %v2000 = vld [vmem:[#allocation2 + $0x4c8] sm:$0xff]
    %v2001 = vld [vmem:[#allocation2 + $0x4d0] sm:$0xff]
    %v2002 = vld [vmem:[#allocation2 + $0x4d8] sm:$0xff]
    %v2003 = vld [vmem:[#allocation2 + $0x4e0] sm:$0xff]
    %v2004 = vld [vmem:[#allocation2 + $0x4e8] sm:$0xff]
    %v2005 = vld [vmem:[#allocation2 + $0x4f0] sm:$0xff]
    %v2006 = vld [vmem:[#allocation2 + $0x4f8] sm:$0xff]
    %v2031 = vunpack.c.l.b16 %v1983
    %v2032 = vunpack.c.h.b16 %v1983
    %v2033 = vunpack.c.l.b16 %v1984
    %v2034 = vunpack.c.h.b16 %v1984
    %v2035 = vunpack.c.l.b16 %v1985
    %v2036 = vunpack.c.h.b16 %v1985
    %v2037 = vunpack.c.l.b16 %v1986
    %v2038 = vunpack.c.h.b16 %v1986
    %v2039 = vunpack.c.l.b16 %v1987
    %v2040 = vunpack.c.h.b16 %v1987
    %v2041 = vunpack.c.l.b16 %v1988
    %v2042 = vunpack.c.h.b16 %v1988
    %v2043 = vunpack.c.l.b16 %v1989
    %v2044 = vunpack.c.h.b16 %v1989
    %v2045 = vunpack.c.l.b16 %v1990
    %v2046 = vunpack.c.h.b16 %v1990
    %v2047 = vunpack.c.l.b16 %v1991
    %v2048 = vunpack.c.h.b16 %v1991
    %v2049 = vunpack.c.l.b16 %v1992
    %v2050 = vunpack.c.h.b16 %v1992
    %v2051 = vunpack.c.l.b16 %v1993
    %v2052 = vunpack.c.h.b16 %v1993
    %v2053 = vunpack.c.l.b16 %v1994
    %v2054 = vunpack.c.h.b16 %v1994
    %v2055 = vunpack.c.l.b16 %v1995
    %v2056 = vunpack.c.h.b16 %v1995
    %v2057 = vunpack.c.l.b16 %v1996
    %v2058 = vunpack.c.h.b16 %v1996
    %v2059 = vunpack.c.l.b16 %v1997
    %v2060 = vunpack.c.h.b16 %v1997
    %v2061 = vunpack.c.l.b16 %v1998
    %v2062 = vunpack.c.h.b16 %v1998
    %v2063 = vunpack.c.l.b16 %v1999
    %v2064 = vunpack.c.h.b16 %v1999
    %v2065 = vunpack.c.l.b16 %v2000
    %v2066 = vunpack.c.h.b16 %v2000
    %v2067 = vunpack.c.l.b16 %v2001
    %v2068 = vunpack.c.h.b16 %v2001
    %v2069 = vunpack.c.l.b16 %v2002
    %v2070 = vunpack.c.h.b16 %v2002
    %v2071 = vunpack.c.l.b16 %v2003
    %v2072 = vunpack.c.h.b16 %v2003
    %v2073 = vunpack.c.l.b16 %v2004
    %v2074 = vunpack.c.h.b16 %v2004
    %v2075 = vunpack.c.l.b16 %v2005
    %v2076 = vunpack.c.h.b16 %v2005
    %v2077 = vunpack.c.l.b16 %v2006
    %v2078 = vunpack.c.h.b16 %v2006
    %v2079 = vpack.c.b16 %v2033, %v2031
    %v2080 = vpack.c.b16 %v2034, %v2032
    %v2081 = vpack.c.b16 %v2037, %v2035
    %v2082 = vpack.c.b16 %v2038, %v2036
    %v2083 = vpack.c.b16 %v2041, %v2039
    %v2084 = vpack.c.b16 %v2042, %v2040
    %v2085 = vpack.c.b16 %v2045, %v2043
    %v2086 = vpack.c.b16 %v2046, %v2044
    %v2087 = vpack.c.b16 %v2049, %v2047
    %v2088 = vpack.c.b16 %v2050, %v2048
    %v2089 = vpack.c.b16 %v2053, %v2051
    %v2090 = vpack.c.b16 %v2054, %v2052
    %v2091 = vpack.c.b16 %v2057, %v2055
    %v2092 = vpack.c.b16 %v2058, %v2056
    %v2093 = vpack.c.b16 %v2061, %v2059
    %v2094 = vpack.c.b16 %v2062, %v2060
    %v2095 = vpack.c.b16 %v2065, %v2063
    %v2096 = vpack.c.b16 %v2066, %v2064
    %v2097 = vpack.c.b16 %v2069, %v2067
    %v2098 = vpack.c.b16 %v2070, %v2068
    %v2099 = vpack.c.b16 %v2073, %v2071
    %v2100 = vpack.c.b16 %v2074, %v2072
    %v2101 = vpack.c.b16 %v2077, %v2075
    %v2102 = vpack.c.b16 %v2078, %v2076
    %v2128 = vsel %vm1742, %v1982, 0
    %2130 = vmatpush.bf16.msra.mxu0 %v2093
    %2131 = vmatpush.bf16.msra.mxu0 %v2091
    %2132 = vmatpush.bf16.msra.mxu0 %v2089
    %2133 = vmatpush.bf16.msra.mxu0 %v2087
    %2134 = vmatpush.bf16.msra.mxu0 %v2085
    %2135 = vmatpush.bf16.msra.mxu0 %v2083
    %2136 = vmatpush.bf16.msra.mxu0 %v2081
    %2137 = vmatpush.bf16.msra.mxu0 %v2079
    %2138 = vmatmul.bf16.gmra.mxu0 %v1981
    %v2139 = vpop.f32.mrf.mxu0
    %v2140 = vadd.f32 0.0, %v2139
    %v2141 = vpop.f32.mrf.mxu0
    %v2142 = vadd.f32 0.0, %v2141
    %2143 = vdwg.mxu0
    %2144 = vmatpush.bf16.msra.mxu0 0
    %2145 = vmatpush.bf16.msra.mxu0 0
    %2146 = vmatpush.bf16.msra.mxu0 0
    %2147 = vmatpush.bf16.msra.mxu0 0
    %2148 = vmatpush.bf16.msra.mxu0 %v2101
    %2149 = vmatpush.bf16.msra.mxu0 %v2099
    %2150 = vmatpush.bf16.msra.mxu0 %v2097
    %2151 = vmatpush.bf16.msra.mxu0 %v2095
    %2152 = vmatmul.bf16.gmra.mxu0 %v2128
    %v2153 = vpop.f32.mrf.mxu0
    %v2154 = vadd.f32 %v2140, %v2153
    %v2155 = vpop.f32.mrf.mxu0
    %v2156 = vadd.f32 %v2142, %v2155
    %2157 = vdwg.mxu0
    %2158 = vmatpush.bf16.msra.mxu0 %v2094
    %2159 = vmatpush.bf16.msra.mxu0 %v2092
    %2160 = vmatpush.bf16.msra.mxu0 %v2090
    %2161 = vmatpush.bf16.msra.mxu0 %v2088
    %2162 = vmatpush.bf16.msra.mxu0 %v2086
    %2163 = vmatpush.bf16.msra.mxu0 %v2084
    %2164 = vmatpush.bf16.msra.mxu0 %v2082
    %2165 = vmatpush.bf16.msra.mxu0 %v2080
    %2166 = vmatmul.bf16.gmra.mxu0 %v1981
    %v2167 = vpop.f32.mrf.mxu0
    %v2168 = vadd.f32 0.0, %v2167
    %v2169 = vpop.f32.mrf.mxu0
    %v2170 = vadd.f32 0.0, %v2169
    %2171 = vdwg.mxu0
    %2172 = vmatpush.bf16.msra.mxu0 0
    %2173 = vmatpush.bf16.msra.mxu0 0
    %2174 = vmatpush.bf16.msra.mxu0 0
    %2175 = vmatpush.bf16.msra.mxu0 0
    %2176 = vmatpush.bf16.msra.mxu0 %v2102
    %2177 = vmatpush.bf16.msra.mxu0 %v2100
    %2178 = vmatpush.bf16.msra.mxu0 %v2098
    %2179 = vmatpush.bf16.msra.mxu0 %v2096
    %2180 = vmatmul.bf16.gmra.mxu0 %v2128
    %v2181 = vpop.f32.mrf.mxu0
    %v2182 = vadd.f32 %v2168, %v2181
    %v2183 = vpop.f32.mrf.mxu0
    %v2184 = vadd.f32 %v2170, %v2183
    %2185 = vdwg.mxu0
    %v2186 = vadd.f32 %v1949, %v2154
    %v2187 = vadd.f32 %v1977, %v2182
    %v2188 = vadd.f32 %v1951, %v2156
    %v2189 = vadd.f32 %v1979, %v2184
    %v2190 = vpack.c.bf16 %v1560, %v1558
    %v2191 = vpack.c.bf16 %v1561, %v1559
    %v2192 = vld [vmem:[#allocation2 + $0x500] sm:$0xff]
    %v2193 = vld [vmem:[#allocation2 + $0x508] sm:$0xff]
    %v2194 = vld [vmem:[#allocation2 + $0x510] sm:$0xff]
    %v2195 = vld [vmem:[#allocation2 + $0x518] sm:$0xff]
    %v2196 = vld [vmem:[#allocation2 + $0x520] sm:$0xff]
    %v2197 = vld [vmem:[#allocation2 + $0x528] sm:$0xff]
    %v2198 = vld [vmem:[#allocation2 + $0x530] sm:$0xff]
    %v2199 = vld [vmem:[#allocation2 + $0x538] sm:$0xff]
    %v2200 = vld [vmem:[#allocation2 + $0x540] sm:$0xff]
    %v2201 = vld [vmem:[#allocation2 + $0x548] sm:$0xff]
    %v2202 = vld [vmem:[#allocation2 + $0x550] sm:$0xff]
    %v2203 = vld [vmem:[#allocation2 + $0x558] sm:$0xff]
    %v2204 = vld [vmem:[#allocation2 + $0x560] sm:$0xff]
    %v2205 = vld [vmem:[#allocation2 + $0x568] sm:$0xff]
    %v2206 = vld [vmem:[#allocation2 + $0x570] sm:$0xff]
    %v2207 = vld [vmem:[#allocation2 + $0x578] sm:$0xff]
    %v2208 = vld [vmem:[#allocation2 + $0x580] sm:$0xff]
    %v2209 = vld [vmem:[#allocation2 + $0x588] sm:$0xff]
    %v2210 = vld [vmem:[#allocation2 + $0x590] sm:$0xff]
    %v2211 = vld [vmem:[#allocation2 + $0x598] sm:$0xff]
    %v2212 = vld [vmem:[#allocation2 + $0x5a0] sm:$0xff]
    %v2213 = vld [vmem:[#allocation2 + $0x5a8] sm:$0xff]
    %v2214 = vld [vmem:[#allocation2 + $0x5b0] sm:$0xff]
    %v2215 = vld [vmem:[#allocation2 + $0x5b8] sm:$0xff]
    %v2240 = vunpack.c.l.b16 %v2192
    %v2241 = vunpack.c.h.b16 %v2192
    %v2242 = vunpack.c.l.b16 %v2193
    %v2243 = vunpack.c.h.b16 %v2193
    %v2244 = vunpack.c.l.b16 %v2194
    %v2245 = vunpack.c.h.b16 %v2194
    %v2246 = vunpack.c.l.b16 %v2195
    %v2247 = vunpack.c.h.b16 %v2195
    %v2248 = vunpack.c.l.b16 %v2196
    %v2249 = vunpack.c.h.b16 %v2196
    %v2250 = vunpack.c.l.b16 %v2197
    %v2251 = vunpack.c.h.b16 %v2197
    %v2252 = vunpack.c.l.b16 %v2198
    %v2253 = vunpack.c.h.b16 %v2198
    %v2254 = vunpack.c.l.b16 %v2199
    %v2255 = vunpack.c.h.b16 %v2199
    %v2256 = vunpack.c.l.b16 %v2200
    %v2257 = vunpack.c.h.b16 %v2200
    %v2258 = vunpack.c.l.b16 %v2201
    %v2259 = vunpack.c.h.b16 %v2201
    %v2260 = vunpack.c.l.b16 %v2202
    %v2261 = vunpack.c.h.b16 %v2202
    %v2262 = vunpack.c.l.b16 %v2203
    %v2263 = vunpack.c.h.b16 %v2203
    %v2264 = vunpack.c.l.b16 %v2204
    %v2265 = vunpack.c.h.b16 %v2204
    %v2266 = vunpack.c.l.b16 %v2205
    %v2267 = vunpack.c.h.b16 %v2205
    %v2268 = vunpack.c.l.b16 %v2206
    %v2269 = vunpack.c.h.b16 %v2206
    %v2270 = vunpack.c.l.b16 %v2207
    %v2271 = vunpack.c.h.b16 %v2207
    %v2272 = vunpack.c.l.b16 %v2208
    %v2273 = vunpack.c.h.b16 %v2208
    %v2274 = vunpack.c.l.b16 %v2209
    %v2275 = vunpack.c.h.b16 %v2209
    %v2276 = vunpack.c.l.b16 %v2210
    %v2277 = vunpack.c.h.b16 %v2210
    %v2278 = vunpack.c.l.b16 %v2211
    %v2279 = vunpack.c.h.b16 %v2211
    %v2280 = vunpack.c.l.b16 %v2212
    %v2281 = vunpack.c.h.b16 %v2212
    %v2282 = vunpack.c.l.b16 %v2213
    %v2283 = vunpack.c.h.b16 %v2213
    %v2284 = vunpack.c.l.b16 %v2214
    %v2285 = vunpack.c.h.b16 %v2214
    %v2286 = vunpack.c.l.b16 %v2215
    %v2287 = vunpack.c.h.b16 %v2215
    %v2288 = vpack.c.b16 %v2242, %v2240
    %v2289 = vpack.c.b16 %v2243, %v2241
    %v2290 = vpack.c.b16 %v2246, %v2244
    %v2291 = vpack.c.b16 %v2247, %v2245
    %v2292 = vpack.c.b16 %v2250, %v2248
    %v2293 = vpack.c.b16 %v2251, %v2249
    %v2294 = vpack.c.b16 %v2254, %v2252
    %v2295 = vpack.c.b16 %v2255, %v2253
    %v2296 = vpack.c.b16 %v2258, %v2256
    %v2297 = vpack.c.b16 %v2259, %v2257
    %v2298 = vpack.c.b16 %v2262, %v2260
    %v2299 = vpack.c.b16 %v2263, %v2261
    %v2300 = vpack.c.b16 %v2266, %v2264
    %v2301 = vpack.c.b16 %v2267, %v2265
    %v2302 = vpack.c.b16 %v2270, %v2268
    %v2303 = vpack.c.b16 %v2271, %v2269
    %v2304 = vpack.c.b16 %v2274, %v2272
    %v2305 = vpack.c.b16 %v2275, %v2273
    %v2306 = vpack.c.b16 %v2278, %v2276
    %v2307 = vpack.c.b16 %v2279, %v2277
    %v2308 = vpack.c.b16 %v2282, %v2280
    %v2309 = vpack.c.b16 %v2283, %v2281
    %v2310 = vpack.c.b16 %v2286, %v2284
    %v2311 = vpack.c.b16 %v2287, %v2285
    %v2337 = vsel %vm1742, %v2191, 0
    %2339 = vmatpush.bf16.msra.mxu0 %v2302
    %2340 = vmatpush.bf16.msra.mxu0 %v2300
    %2341 = vmatpush.bf16.msra.mxu0 %v2298
    %2342 = vmatpush.bf16.msra.mxu0 %v2296
    %2343 = vmatpush.bf16.msra.mxu0 %v2294
    %2344 = vmatpush.bf16.msra.mxu0 %v2292
    %2345 = vmatpush.bf16.msra.mxu0 %v2290
    %2346 = vmatpush.bf16.msra.mxu0 %v2288
    %2347 = vmatmul.bf16.gmra.mxu0 %v2190
    %v2348 = vpop.f32.mrf.mxu0
    %v2349 = vadd.f32 0.0, %v2348
    %v2350 = vpop.f32.mrf.mxu0
    %v2351 = vadd.f32 0.0, %v2350
    %2352 = vdwg.mxu0
    %2353 = vmatpush.bf16.msra.mxu0 0
    %2354 = vmatpush.bf16.msra.mxu0 0
    %2355 = vmatpush.bf16.msra.mxu0 0
    %2356 = vmatpush.bf16.msra.mxu0 0
    %2357 = vmatpush.bf16.msra.mxu0 %v2310
    %2358 = vmatpush.bf16.msra.mxu0 %v2308
    %2359 = vmatpush.bf16.msra.mxu0 %v2306
    %2360 = vmatpush.bf16.msra.mxu0 %v2304
    %2361 = vmatmul.bf16.gmra.mxu0 %v2337
    %v2362 = vpop.f32.mrf.mxu0
    %v2363 = vadd.f32 %v2349, %v2362
    %v2364 = vpop.f32.mrf.mxu0
    %v2365 = vadd.f32 %v2351, %v2364
    %2366 = vdwg.mxu0
    %2367 = vmatpush.bf16.msra.mxu0 %v2303
    %2368 = vmatpush.bf16.msra.mxu0 %v2301
    %2369 = vmatpush.bf16.msra.mxu0 %v2299
    %2370 = vmatpush.bf16.msra.mxu0 %v2297
    %2371 = vmatpush.bf16.msra.mxu0 %v2295
    %2372 = vmatpush.bf16.msra.mxu0 %v2293
    %2373 = vmatpush.bf16.msra.mxu0 %v2291
    %2374 = vmatpush.bf16.msra.mxu0 %v2289
    %2375 = vmatmul.bf16.gmra.mxu0 %v2190
    %v2376 = vpop.f32.mrf.mxu0
    %v2377 = vadd.f32 0.0, %v2376
    %v2378 = vpop.f32.mrf.mxu0
    %v2379 = vadd.f32 0.0, %v2378
    %2380 = vdwg.mxu0
    %2381 = vmatpush.bf16.msra.mxu0 0
    %2382 = vmatpush.bf16.msra.mxu0 0
    %2383 = vmatpush.bf16.msra.mxu0 0
    %2384 = vmatpush.bf16.msra.mxu0 0
    %2385 = vmatpush.bf16.msra.mxu0 %v2311
    %2386 = vmatpush.bf16.msra.mxu0 %v2309
    %2387 = vmatpush.bf16.msra.mxu0 %v2307
    %2388 = vmatpush.bf16.msra.mxu0 %v2305
    %2389 = vmatmul.bf16.gmra.mxu0 %v2337
    %v2390 = vpop.f32.mrf.mxu0
    %v2391 = vadd.f32 %v2377, %v2390
    %v2392 = vpop.f32.mrf.mxu0
    %v2393 = vadd.f32 %v2379, %v2392
    %2394 = vdwg.mxu0
    %v2395 = vadd.f32 %v2186, %v2363
    %v2396 = vadd.f32 %v2187, %v2391
    %v2397 = vadd.f32 %v2188, %v2365
    %v2398 = vadd.f32 %v2189, %v2393
    %v2399 = vpack.c.bf16 %v1564, %v1562
    %v2400 = vpack.c.bf16 %v1565, %v1563
    %v2401 = vld [vmem:[#allocation2 + $0x5c0] sm:$0xff]
    %v2402 = vld [vmem:[#allocation2 + $0x5c8] sm:$0xff]
    %v2403 = vld [vmem:[#allocation2 + $0x5d0] sm:$0xff]
    %v2404 = vld [vmem:[#allocation2 + $0x5d8] sm:$0xff]
    %v2405 = vld [vmem:[#allocation2 + $0x5e0] sm:$0xff]
    %v2406 = vld [vmem:[#allocation2 + $0x5e8] sm:$0xff]
    %v2407 = vld [vmem:[#allocation2 + $0x5f0] sm:$0xff]
    %v2408 = vld [vmem:[#allocation2 + $0x5f8] sm:$0xff]
    %v2409 = vld [vmem:[#allocation2 + $0x600] sm:$0xff]
    %v2410 = vld [vmem:[#allocation2 + $0x608] sm:$0xff]
    %v2411 = vld [vmem:[#allocation2 + $0x610] sm:$0xff]
    %v2412 = vld [vmem:[#allocation2 + $0x618] sm:$0xff]
    %v2413 = vld [vmem:[#allocation2 + $0x620] sm:$0xff]
    %v2414 = vld [vmem:[#allocation2 + $0x628] sm:$0xff]
    %v2415 = vld [vmem:[#allocation2 + $0x630] sm:$0xff]
    %v2416 = vld [vmem:[#allocation2 + $0x638] sm:$0xff]
    %v2417 = vld [vmem:[#allocation2 + $0x640] sm:$0xff]
    %v2418 = vld [vmem:[#allocation2 + $0x648] sm:$0xff]
    %v2419 = vld [vmem:[#allocation2 + $0x650] sm:$0xff]
    %v2420 = vld [vmem:[#allocation2 + $0x658] sm:$0xff]
    %v2421 = vld [vmem:[#allocation2 + $0x660] sm:$0xff]
    %v2422 = vld [vmem:[#allocation2 + $0x668] sm:$0xff]
    %v2423 = vld [vmem:[#allocation2 + $0x670] sm:$0xff]
    %v2424 = vld [vmem:[#allocation2 + $0x678] sm:$0xff]
    %v2449 = vunpack.c.l.b16 %v2401
    %v2450 = vunpack.c.h.b16 %v2401
    %v2451 = vunpack.c.l.b16 %v2402
    %v2452 = vunpack.c.h.b16 %v2402
    %v2453 = vunpack.c.l.b16 %v2403
    %v2454 = vunpack.c.h.b16 %v2403
    %v2455 = vunpack.c.l.b16 %v2404
    %v2456 = vunpack.c.h.b16 %v2404
    %v2457 = vunpack.c.l.b16 %v2405
    %v2458 = vunpack.c.h.b16 %v2405
    %v2459 = vunpack.c.l.b16 %v2406
    %v2460 = vunpack.c.h.b16 %v2406
    %v2461 = vunpack.c.l.b16 %v2407
    %v2462 = vunpack.c.h.b16 %v2407
    %v2463 = vunpack.c.l.b16 %v2408
    %v2464 = vunpack.c.h.b16 %v2408
    %v2465 = vunpack.c.l.b16 %v2409
    %v2466 = vunpack.c.h.b16 %v2409
    %v2467 = vunpack.c.l.b16 %v2410
    %v2468 = vunpack.c.h.b16 %v2410
    %v2469 = vunpack.c.l.b16 %v2411
    %v2470 = vunpack.c.h.b16 %v2411
    %v2471 = vunpack.c.l.b16 %v2412
    %v2472 = vunpack.c.h.b16 %v2412
    %v2473 = vunpack.c.l.b16 %v2413
    %v2474 = vunpack.c.h.b16 %v2413
    %v2475 = vunpack.c.l.b16 %v2414
    %v2476 = vunpack.c.h.b16 %v2414
    %v2477 = vunpack.c.l.b16 %v2415
    %v2478 = vunpack.c.h.b16 %v2415
    %v2479 = vunpack.c.l.b16 %v2416
    %v2480 = vunpack.c.h.b16 %v2416
    %v2481 = vunpack.c.l.b16 %v2417
    %v2482 = vunpack.c.h.b16 %v2417
    %v2483 = vunpack.c.l.b16 %v2418
    %v2484 = vunpack.c.h.b16 %v2418
    %v2485 = vunpack.c.l.b16 %v2419
    %v2486 = vunpack.c.h.b16 %v2419
    %v2487 = vunpack.c.l.b16 %v2420
    %v2488 = vunpack.c.h.b16 %v2420
    %v2489 = vunpack.c.l.b16 %v2421
    %v2490 = vunpack.c.h.b16 %v2421
    %v2491 = vunpack.c.l.b16 %v2422
    %v2492 = vunpack.c.h.b16 %v2422
    %v2493 = vunpack.c.l.b16 %v2423
    %v2494 = vunpack.c.h.b16 %v2423
    %v2495 = vunpack.c.l.b16 %v2424
    %v2496 = vunpack.c.h.b16 %v2424
    %v2497 = vpack.c.b16 %v2451, %v2449
    %v2498 = vpack.c.b16 %v2452, %v2450
    %v2499 = vpack.c.b16 %v2455, %v2453
    %v2500 = vpack.c.b16 %v2456, %v2454
    %v2501 = vpack.c.b16 %v2459, %v2457
    %v2502 = vpack.c.b16 %v2460, %v2458
    %v2503 = vpack.c.b16 %v2463, %v2461
    %v2504 = vpack.c.b16 %v2464, %v2462
    %v2505 = vpack.c.b16 %v2467, %v2465
    %v2506 = vpack.c.b16 %v2468, %v2466
    %v2507 = vpack.c.b16 %v2471, %v2469
    %v2508 = vpack.c.b16 %v2472, %v2470
    %v2509 = vpack.c.b16 %v2475, %v2473
    %v2510 = vpack.c.b16 %v2476, %v2474
    %v2511 = vpack.c.b16 %v2479, %v2477
    %v2512 = vpack.c.b16 %v2480, %v2478
    %v2513 = vpack.c.b16 %v2483, %v2481
    %v2514 = vpack.c.b16 %v2484, %v2482
    %v2515 = vpack.c.b16 %v2487, %v2485
    %v2516 = vpack.c.b16 %v2488, %v2486
    %v2517 = vpack.c.b16 %v2491, %v2489
    %v2518 = vpack.c.b16 %v2492, %v2490
    %v2519 = vpack.c.b16 %v2495, %v2493
    %v2520 = vpack.c.b16 %v2496, %v2494
    %v2546 = vsel %vm1742, %v2400, 0
    %2548 = vmatpush.bf16.msra.mxu0 %v2511
    %2549 = vmatpush.bf16.msra.mxu0 %v2509
    %2550 = vmatpush.bf16.msra.mxu0 %v2507
    %2551 = vmatpush.bf16.msra.mxu0 %v2505
    %2552 = vmatpush.bf16.msra.mxu0 %v2503
    %2553 = vmatpush.bf16.msra.mxu0 %v2501
    %2554 = vmatpush.bf16.msra.mxu0 %v2499
    %2555 = vmatpush.bf16.msra.mxu0 %v2497
    %2556 = vmatmul.bf16.gmra.mxu0 %v2399
    %v2557 = vpop.f32.mrf.mxu0
    %v2558 = vadd.f32 0.0, %v2557
    %v2559 = vpop.f32.mrf.mxu0
    %v2560 = vadd.f32 0.0, %v2559
    %2561 = vdwg.mxu0
    %2562 = vmatpush.bf16.msra.mxu0 0
    %2563 = vmatpush.bf16.msra.mxu0 0
    %2564 = vmatpush.bf16.msra.mxu0 0
    %2565 = vmatpush.bf16.msra.mxu0 0
    %2566 = vmatpush.bf16.msra.mxu0 %v2519
    %2567 = vmatpush.bf16.msra.mxu0 %v2517
    %2568 = vmatpush.bf16.msra.mxu0 %v2515
    %2569 = vmatpush.bf16.msra.mxu0 %v2513
    %2570 = vmatmul.bf16.gmra.mxu0 %v2546
    %v2571 = vpop.f32.mrf.mxu0
    %v2572 = vadd.f32 %v2558, %v2571
    %v2573 = vpop.f32.mrf.mxu0
    %v2574 = vadd.f32 %v2560, %v2573
    %2575 = vdwg.mxu0
    %2576 = vmatpush.bf16.msra.mxu0 %v2512
    %2577 = vmatpush.bf16.msra.mxu0 %v2510
    %2578 = vmatpush.bf16.msra.mxu0 %v2508
    %2579 = vmatpush.bf16.msra.mxu0 %v2506
    %2580 = vmatpush.bf16.msra.mxu0 %v2504
    %2581 = vmatpush.bf16.msra.mxu0 %v2502
    %2582 = vmatpush.bf16.msra.mxu0 %v2500
    %2583 = vmatpush.bf16.msra.mxu0 %v2498
    %2584 = vmatmul.bf16.gmra.mxu0 %v2399
    %v2585 = vpop.f32.mrf.mxu0
    %v2586 = vadd.f32 0.0, %v2585
    %v2587 = vpop.f32.mrf.mxu0
    %v2588 = vadd.f32 0.0, %v2587
    %2589 = vdwg.mxu0
    %2590 = vmatpush.bf16.msra.mxu0 0
    %2591 = vmatpush.bf16.msra.mxu0 0
    %2592 = vmatpush.bf16.msra.mxu0 0
    %2593 = vmatpush.bf16.msra.mxu0 0
    %2594 = vmatpush.bf16.msra.mxu0 %v2520
    %2595 = vmatpush.bf16.msra.mxu0 %v2518
    %2596 = vmatpush.bf16.msra.mxu0 %v2516
    %2597 = vmatpush.bf16.msra.mxu0 %v2514
    %2598 = vmatmul.bf16.gmra.mxu0 %v2546
    %v2599 = vpop.f32.mrf.mxu0
    %v2600 = vadd.f32 %v2586, %v2599
    %v2601 = vpop.f32.mrf.mxu0
    %v2602 = vadd.f32 %v2588, %v2601
    %2603 = vdwg.mxu0
    %v2604 = vadd.f32 %v2395, %v2572
    %v2605 = vadd.f32 %v2396, %v2600
    %v2606 = vadd.f32 %v2397, %v2574
    %v2607 = vadd.f32 %v2398, %v2602
    %v2608 = vpack.c.bf16 %v1568, %v1566
    %v2609 = vpack.c.bf16 %v1569, %v1567
    %v2610 = vld [vmem:[#allocation2 + $0x680] sm:$0xff]
    %v2611 = vld [vmem:[#allocation2 + $0x688] sm:$0xff]
    %v2612 = vld [vmem:[#allocation2 + $0x690] sm:$0xff]
    %v2613 = vld [vmem:[#allocation2 + $0x698] sm:$0xff]
    %v2614 = vld [vmem:[#allocation2 + $0x6a0] sm:$0xff]
    %v2615 = vld [vmem:[#allocation2 + $0x6a8] sm:$0xff]
    %v2616 = vld [vmem:[#allocation2 + $0x6b0] sm:$0xff]
    %v2617 = vld [vmem:[#allocation2 + $0x6b8] sm:$0xff]
    %v2618 = vld [vmem:[#allocation2 + $0x6c0] sm:$0xff]
    %v2619 = vld [vmem:[#allocation2 + $0x6c8] sm:$0xff]
    %v2620 = vld [vmem:[#allocation2 + $0x6d0] sm:$0xff]
    %v2621 = vld [vmem:[#allocation2 + $0x6d8] sm:$0xff]
    %v2622 = vld [vmem:[#allocation2 + $0x6e0] sm:$0xff]
    %v2623 = vld [vmem:[#allocation2 + $0x6e8] sm:$0xff]
    %v2624 = vld [vmem:[#allocation2 + $0x6f0] sm:$0xff]
    %v2625 = vld [vmem:[#allocation2 + $0x6f8] sm:$0xff]
    %v2626 = vld [vmem:[#allocation2 + $0x700] sm:$0xff]
    %v2627 = vld [vmem:[#allocation2 + $0x708] sm:$0xff]
    %v2628 = vld [vmem:[#allocation2 + $0x710] sm:$0xff]
    %v2629 = vld [vmem:[#allocation2 + $0x718] sm:$0xff]
    %v2630 = vld [vmem:[#allocation2 + $0x720] sm:$0xff]
    %v2631 = vld [vmem:[#allocation2 + $0x728] sm:$0xff]
    %v2632 = vld [vmem:[#allocation2 + $0x730] sm:$0xff]
    %v2633 = vld [vmem:[#allocation2 + $0x738] sm:$0xff]
    %v2658 = vunpack.c.l.b16 %v2610
    %v2659 = vunpack.c.h.b16 %v2610
    %v2660 = vunpack.c.l.b16 %v2611
    %v2661 = vunpack.c.h.b16 %v2611
    %v2662 = vunpack.c.l.b16 %v2612
    %v2663 = vunpack.c.h.b16 %v2612
    %v2664 = vunpack.c.l.b16 %v2613
    %v2665 = vunpack.c.h.b16 %v2613
    %v2666 = vunpack.c.l.b16 %v2614
    %v2667 = vunpack.c.h.b16 %v2614
    %v2668 = vunpack.c.l.b16 %v2615
    %v2669 = vunpack.c.h.b16 %v2615
    %v2670 = vunpack.c.l.b16 %v2616
    %v2671 = vunpack.c.h.b16 %v2616
    %v2672 = vunpack.c.l.b16 %v2617
    %v2673 = vunpack.c.h.b16 %v2617
    %v2674 = vunpack.c.l.b16 %v2618
    %v2675 = vunpack.c.h.b16 %v2618
    %v2676 = vunpack.c.l.b16 %v2619
    %v2677 = vunpack.c.h.b16 %v2619
    %v2678 = vunpack.c.l.b16 %v2620
    %v2679 = vunpack.c.h.b16 %v2620
    %v2680 = vunpack.c.l.b16 %v2621
    %v2681 = vunpack.c.h.b16 %v2621
    %v2682 = vunpack.c.l.b16 %v2622
    %v2683 = vunpack.c.h.b16 %v2622
    %v2684 = vunpack.c.l.b16 %v2623
    %v2685 = vunpack.c.h.b16 %v2623
    %v2686 = vunpack.c.l.b16 %v2624
    %v2687 = vunpack.c.h.b16 %v2624
    %v2688 = vunpack.c.l.b16 %v2625
    %v2689 = vunpack.c.h.b16 %v2625
    %v2690 = vunpack.c.l.b16 %v2626
    %v2691 = vunpack.c.h.b16 %v2626
    %v2692 = vunpack.c.l.b16 %v2627
    %v2693 = vunpack.c.h.b16 %v2627
    %v2694 = vunpack.c.l.b16 %v2628
    %v2695 = vunpack.c.h.b16 %v2628
    %v2696 = vunpack.c.l.b16 %v2629
    %v2697 = vunpack.c.h.b16 %v2629
    %v2698 = vunpack.c.l.b16 %v2630
    %v2699 = vunpack.c.h.b16 %v2630
    %v2700 = vunpack.c.l.b16 %v2631
    %v2701 = vunpack.c.h.b16 %v2631
    %v2702 = vunpack.c.l.b16 %v2632
    %v2703 = vunpack.c.h.b16 %v2632
    %v2704 = vunpack.c.l.b16 %v2633
    %v2705 = vunpack.c.h.b16 %v2633
    %v2706 = vpack.c.b16 %v2660, %v2658
    %v2707 = vpack.c.b16 %v2661, %v2659
    %v2708 = vpack.c.b16 %v2664, %v2662
    %v2709 = vpack.c.b16 %v2665, %v2663
    %v2710 = vpack.c.b16 %v2668, %v2666
    %v2711 = vpack.c.b16 %v2669, %v2667
    %v2712 = vpack.c.b16 %v2672, %v2670
    %v2713 = vpack.c.b16 %v2673, %v2671
    %v2714 = vpack.c.b16 %v2676, %v2674
    %v2715 = vpack.c.b16 %v2677, %v2675
    %v2716 = vpack.c.b16 %v2680, %v2678
    %v2717 = vpack.c.b16 %v2681, %v2679
    %v2718 = vpack.c.b16 %v2684, %v2682
    %v2719 = vpack.c.b16 %v2685, %v2683
    %v2720 = vpack.c.b16 %v2688, %v2686
    %v2721 = vpack.c.b16 %v2689, %v2687
    %v2722 = vpack.c.b16 %v2692, %v2690
    %v2723 = vpack.c.b16 %v2693, %v2691
    %v2724 = vpack.c.b16 %v2696, %v2694
    %v2725 = vpack.c.b16 %v2697, %v2695
    %v2726 = vpack.c.b16 %v2700, %v2698
    %v2727 = vpack.c.b16 %v2701, %v2699
    %v2728 = vpack.c.b16 %v2704, %v2702
    %v2729 = vpack.c.b16 %v2705, %v2703
    %v2755 = vsel %vm1742, %v2609, 0
    %2757 = vmatpush.bf16.msra.mxu0 %v2720
    %2758 = vmatpush.bf16.msra.mxu0 %v2718
    %2759 = vmatpush.bf16.msra.mxu0 %v2716
    %2760 = vmatpush.bf16.msra.mxu0 %v2714
    %2761 = vmatpush.bf16.msra.mxu0 %v2712
    %2762 = vmatpush.bf16.msra.mxu0 %v2710
    %2763 = vmatpush.bf16.msra.mxu0 %v2708
    %2764 = vmatpush.bf16.msra.mxu0 %v2706
    %2765 = vmatmul.bf16.gmra.mxu0 %v2608
    %v2766 = vpop.f32.mrf.mxu0
    %v2767 = vadd.f32 0.0, %v2766
    %v2768 = vpop.f32.mrf.mxu0
    %v2769 = vadd.f32 0.0, %v2768
    %2770 = vdwg.mxu0
    %2771 = vmatpush.bf16.msra.mxu0 0
    %2772 = vmatpush.bf16.msra.mxu0 0
    %2773 = vmatpush.bf16.msra.mxu0 0
    %2774 = vmatpush.bf16.msra.mxu0 0
    %2775 = vmatpush.bf16.msra.mxu0 %v2728
    %2776 = vmatpush.bf16.msra.mxu0 %v2726
    %2777 = vmatpush.bf16.msra.mxu0 %v2724
    %2778 = vmatpush.bf16.msra.mxu0 %v2722
    %2779 = vmatmul.bf16.gmra.mxu0 %v2755
    %v2780 = vpop.f32.mrf.mxu0
    %v2781 = vadd.f32 %v2767, %v2780
    %v2782 = vpop.f32.mrf.mxu0
    %v2783 = vadd.f32 %v2769, %v2782
    %2784 = vdwg.mxu0
    %2785 = vmatpush.bf16.msra.mxu0 %v2721
    %2786 = vmatpush.bf16.msra.mxu0 %v2719
    %2787 = vmatpush.bf16.msra.mxu0 %v2717
    %2788 = vmatpush.bf16.msra.mxu0 %v2715
    %2789 = vmatpush.bf16.msra.mxu0 %v2713
    %2790 = vmatpush.bf16.msra.mxu0 %v2711
    %2791 = vmatpush.bf16.msra.mxu0 %v2709
    %2792 = vmatpush.bf16.msra.mxu0 %v2707
    %2793 = vmatmul.bf16.gmra.mxu0 %v2608
    %v2794 = vpop.f32.mrf.mxu0
    %v2795 = vadd.f32 0.0, %v2794
    %v2796 = vpop.f32.mrf.mxu0
    %v2797 = vadd.f32 0.0, %v2796
    %2798 = vdwg.mxu0
    %2799 = vmatpush.bf16.msra.mxu0 0
    %2800 = vmatpush.bf16.msra.mxu0 0
    %2801 = vmatpush.bf16.msra.mxu0 0
    %2802 = vmatpush.bf16.msra.mxu0 0
    %2803 = vmatpush.bf16.msra.mxu0 %v2729
    %2804 = vmatpush.bf16.msra.mxu0 %v2727
    %2805 = vmatpush.bf16.msra.mxu0 %v2725
    %2806 = vmatpush.bf16.msra.mxu0 %v2723
    %2807 = vmatmul.bf16.gmra.mxu0 %v2755
    %v2808 = vpop.f32.mrf.mxu0
    %v2809 = vadd.f32 %v2795, %v2808
    %v2810 = vpop.f32.mrf.mxu0
    %v2811 = vadd.f32 %v2797, %v2810
    %2812 = vdwg.mxu0
    %v2813 = vadd.f32 %v2604, %v2781
    %v2814 = vadd.f32 %v2605, %v2809
    %v2815 = vadd.f32 %v2606, %v2783
    %v2816 = vadd.f32 %v2607, %v2811
    %s2817 = scalar_lea.vmem [#allocation4], 2
    %v2818 = vld [vmem:[%s2817] ss:$8 sm:$0x3]
    %v2820 = vperm.slane %v2818, 0
    %v2821 = vperm.slane %v2818, 1
    %v2824 = vadd.f32 %v2813, %v2820
    %v2825 = vadd.f32 %v2814, %v2821
    %v2826 = vadd.f32 %v2815, %v2820
    %v2827 = vadd.f32 %v2816, %v2821
    %v2828 = vtanh.pop %v2824
    %v2829 = vtanh.pop %v2825
    %v2830 = vtanh.pop %v2826
    %v2831 = vtanh.pop %v2827
    %v2832 = vld [vmem:[#allocation2 + $0x740] sm:$0xff]
    %v2833 = vld [vmem:[#allocation2 + $0x748] sm:$0xff]
    %v2834 = vld [vmem:[#allocation2 + $0x750] sm:$0xff]
    %v2835 = vld [vmem:[#allocation2 + $0x758] sm:$0xff]
    %v2836 = vld [vmem:[#allocation2 + $0x760] sm:$0xff]
    %v2837 = vld [vmem:[#allocation2 + $0x768] sm:$0xff]
    %v2838 = vld [vmem:[#allocation2 + $0x770] sm:$0xff]
    %v2839 = vld [vmem:[#allocation2 + $0x778] sm:$0xff]
    %v2840 = vld [vmem:[#allocation2 + $0x780] sm:$0xff]
    %v2841 = vld [vmem:[#allocation2 + $0x788] sm:$0xff]
    %v2842 = vld [vmem:[#allocation2 + $0x790] sm:$0xff]
    %v2843 = vld [vmem:[#allocation2 + $0x798] sm:$0xff]
    %v2844 = vld [vmem:[#allocation2 + $0x7a0] sm:$0xff]
    %v2845 = vld [vmem:[#allocation2 + $0x7a8] sm:$0xff]
    %v2846 = vld [vmem:[#allocation2 + $0x7b0] sm:$0xff]
    %v2847 = vld [vmem:[#allocation2 + $0x7b8] sm:$0xff]
    %s2848 = scalar_lea.vmem [#allocation4], 3
    %v2849 = vld [vmem:[%s2848] ss:$8 sm:$0x3]
    %v2851 = vperm.slane %v2849, 0
    %v2852 = vperm.slane %v2849, 1
    %v2857 = vunpack.c.l.b16 %v63
    %v2858 = vunpack.c.l.b16 %v64
    %v2859 = vpack.c.b16 %v2858, %v2857
    %v2877 = vunpack.c.l.b16 %v2832
    %v2878 = vunpack.c.h.b16 %v2832
    %v2879 = vunpack.c.l.b16 %v2833
    %v2880 = vunpack.c.h.b16 %v2833
    %v2881 = vunpack.c.l.b16 %v2834
    %v2882 = vunpack.c.h.b16 %v2834
    %v2883 = vunpack.c.l.b16 %v2835
    %v2884 = vunpack.c.h.b16 %v2835
    %v2885 = vunpack.c.l.b16 %v2836
    %v2886 = vunpack.c.h.b16 %v2836
    %v2887 = vunpack.c.l.b16 %v2837
    %v2888 = vunpack.c.h.b16 %v2837
    %v2889 = vunpack.c.l.b16 %v2838
    %v2890 = vunpack.c.h.b16 %v2838
    %v2891 = vunpack.c.l.b16 %v2839
    %v2892 = vunpack.c.h.b16 %v2839
    %v2893 = vunpack.c.l.b16 %v2840
    %v2894 = vunpack.c.h.b16 %v2840
    %v2895 = vunpack.c.l.b16 %v2841
    %v2896 = vunpack.c.h.b16 %v2841
    %v2897 = vunpack.c.l.b16 %v2842
    %v2898 = vunpack.c.h.b16 %v2842
    %v2899 = vunpack.c.l.b16 %v2843
    %v2900 = vunpack.c.h.b16 %v2843
    %v2901 = vunpack.c.l.b16 %v2844
    %v2902 = vunpack.c.h.b16 %v2844
    %v2903 = vunpack.c.l.b16 %v2845
    %v2904 = vunpack.c.h.b16 %v2845
    %v2905 = vunpack.c.l.b16 %v2846
    %v2906 = vunpack.c.h.b16 %v2846
    %v2907 = vunpack.c.l.b16 %v2847
    %v2908 = vunpack.c.h.b16 %v2847
    %v2909 = vpack.c.b16 %v2879, %v2877
    %v2910 = vpack.c.b16 %v2880, %v2878
    %v2911 = vpack.c.b16 %v2883, %v2881
    %v2912 = vpack.c.b16 %v2884, %v2882
    %v2913 = vpack.c.b16 %v2887, %v2885
    %v2914 = vpack.c.b16 %v2888, %v2886
    %v2915 = vpack.c.b16 %v2891, %v2889
    %v2916 = vpack.c.b16 %v2892, %v2890
    %v2917 = vpack.c.b16 %v2895, %v2893
    %v2918 = vpack.c.b16 %v2896, %v2894
    %v2919 = vpack.c.b16 %v2899, %v2897
    %v2920 = vpack.c.b16 %v2900, %v2898
    %v2921 = vpack.c.b16 %v2903, %v2901
    %v2922 = vpack.c.b16 %v2904, %v2902
    %v2923 = vpack.c.b16 %v2907, %v2905
    %v2924 = vpack.c.b16 %v2908, %v2906
    %2941 = vmatpush.bf16.msra.mxu0 %v2923
    %2942 = vmatpush.bf16.msra.mxu0 %v2921
    %2943 = vmatpush.bf16.msra.mxu0 %v2919
    %2944 = vmatpush.bf16.msra.mxu0 %v2917
    %2945 = vmatpush.bf16.msra.mxu0 %v2915
    %2946 = vmatpush.bf16.msra.mxu0 %v2913
    %2947 = vmatpush.bf16.msra.mxu0 %v2911
    %2948 = vmatpush.bf16.msra.mxu0 %v2909
    %2949 = vmatmul.bf16.gmra.mxu0 %v2859
    %v2950 = vpop.f32.mrf.mxu0
    %v2951 = vadd.f32 %v2851, %v2950
    %v2952 = vpop.f32.mrf.mxu0
    %v2953 = vadd.f32 %v2851, %v2952
    %2954 = vdwg.mxu0
    %2955 = vmatpush.bf16.msra.mxu0 %v2924
    %2956 = vmatpush.bf16.msra.mxu0 %v2922
    %2957 = vmatpush.bf16.msra.mxu0 %v2920
    %2958 = vmatpush.bf16.msra.mxu0 %v2918
    %2959 = vmatpush.bf16.msra.mxu0 %v2916
    %2960 = vmatpush.bf16.msra.mxu0 %v2914
    %2961 = vmatpush.bf16.msra.mxu0 %v2912
    %2962 = vmatpush.bf16.msra.mxu0 %v2910
    %2963 = vmatmul.bf16.gmra.mxu0 %v2859
    %v2964 = vpop.f32.mrf.mxu0
    %v2965 = vadd.f32 %v2852, %v2964
    %v2966 = vpop.f32.mrf.mxu0
    %v2967 = vadd.f32 %v2852, %v2966
    %2968 = vdwg.mxu0
    %v2969 = vtanh.pop %v2951
    %v2970 = vtanh.pop %v2965
    %v2971 = vtanh.pop %v2953
    %v2972 = vtanh.pop %v2967
    %v2973 = vld [vmem:[#allocation2 + $0x7c0] sm:$0xff]
    %v2974 = vld [vmem:[#allocation2 + $0x7c8] sm:$0xff]
    %v2975 = vld [vmem:[#allocation2 + $0x7d0] sm:$0xff]
    %v2976 = vld [vmem:[#allocation2 + $0x7d8] sm:$0xff]
    %v2977 = vld [vmem:[#allocation2 + $0x7e0] sm:$0xff]
    %v2978 = vld [vmem:[#allocation2 + $0x7e8] sm:$0xff]
    %v2979 = vld [vmem:[#allocation2 + $0x7f0] sm:$0xff]
    %v2980 = vld [vmem:[#allocation2 + $0x7f8] sm:$0xff]
    %v2981 = vld [vmem:[#allocation2 + $0x800] sm:$0xff]
    %v2982 = vld [vmem:[#allocation2 + $0x808] sm:$0xff]
    %v2983 = vld [vmem:[#allocation2 + $0x810] sm:$0xff]
    %v2984 = vld [vmem:[#allocation2 + $0x818] sm:$0xff]
    %v2985 = vld [vmem:[#allocation2 + $0x820] sm:$0xff]
    %v2986 = vld [vmem:[#allocation2 + $0x828] sm:$0xff]
    %v2987 = vld [vmem:[#allocation2 + $0x830] sm:$0xff]
    %v2988 = vld [vmem:[#allocation2 + $0x838] sm:$0xff]
    %s2989 = scalar_lea.vmem [#allocation4], 4
    %v2990 = vld [vmem:[%s2989] ss:$8 sm:$0x3]
    %v2992 = vperm.slane %v2990, 0
    %v2993 = vperm.slane %v2990, 1
    %v3012 = vunpack.c.l.b16 %v2973
    %v3013 = vunpack.c.h.b16 %v2973
    %v3014 = vunpack.c.l.b16 %v2974
    %v3015 = vunpack.c.h.b16 %v2974
    %v3016 = vunpack.c.l.b16 %v2975
    %v3017 = vunpack.c.h.b16 %v2975
    %v3018 = vunpack.c.l.b16 %v2976
    %v3019 = vunpack.c.h.b16 %v2976
    %v3020 = vunpack.c.l.b16 %v2977
    %v3021 = vunpack.c.h.b16 %v2977
    %v3022 = vunpack.c.l.b16 %v2978
    %v3023 = vunpack.c.h.b16 %v2978
    %v3024 = vunpack.c.l.b16 %v2979
    %v3025 = vunpack.c.h.b16 %v2979
    %v3026 = vunpack.c.l.b16 %v2980
    %v3027 = vunpack.c.h.b16 %v2980
    %v3028 = vunpack.c.l.b16 %v2981
    %v3029 = vunpack.c.h.b16 %v2981
    %v3030 = vunpack.c.l.b16 %v2982
    %v3031 = vunpack.c.h.b16 %v2982
    %v3032 = vunpack.c.l.b16 %v2983
    %v3033 = vunpack.c.h.b16 %v2983
    %v3034 = vunpack.c.l.b16 %v2984
    %v3035 = vunpack.c.h.b16 %v2984
    %v3036 = vunpack.c.l.b16 %v2985
    %v3037 = vunpack.c.h.b16 %v2985
    %v3038 = vunpack.c.l.b16 %v2986
    %v3039 = vunpack.c.h.b16 %v2986
    %v3040 = vunpack.c.l.b16 %v2987
    %v3041 = vunpack.c.h.b16 %v2987
    %v3042 = vunpack.c.l.b16 %v2988
    %v3043 = vunpack.c.h.b16 %v2988
    %v3044 = vpack.c.b16 %v3014, %v3012
    %v3045 = vpack.c.b16 %v3015, %v3013
    %v3046 = vpack.c.b16 %v3018, %v3016
    %v3047 = vpack.c.b16 %v3019, %v3017
    %v3048 = vpack.c.b16 %v3022, %v3020
    %v3049 = vpack.c.b16 %v3023, %v3021
    %v3050 = vpack.c.b16 %v3026, %v3024
    %v3051 = vpack.c.b16 %v3027, %v3025
    %v3052 = vpack.c.b16 %v3030, %v3028
    %v3053 = vpack.c.b16 %v3031, %v3029
    %v3054 = vpack.c.b16 %v3034, %v3032
    %v3055 = vpack.c.b16 %v3035, %v3033
    %v3056 = vpack.c.b16 %v3038, %v3036
    %v3057 = vpack.c.b16 %v3039, %v3037
    %v3058 = vpack.c.b16 %v3042, %v3040
    %v3059 = vpack.c.b16 %v3043, %v3041
    %3076 = vmatpush.bf16.msra.mxu0 %v3058
    %3077 = vmatpush.bf16.msra.mxu0 %v3056
    %3078 = vmatpush.bf16.msra.mxu0 %v3054
    %3079 = vmatpush.bf16.msra.mxu0 %v3052
    %3080 = vmatpush.bf16.msra.mxu0 %v3050
    %3081 = vmatpush.bf16.msra.mxu0 %v3048
    %3082 = vmatpush.bf16.msra.mxu0 %v3046
    %3083 = vmatpush.bf16.msra.mxu0 %v3044
    %3084 = vmatmul.bf16.gmra.mxu0 %v2859
    %v3085 = vpop.f32.mrf.mxu0
    %v3086 = vadd.f32 %v2992, %v3085
    %v3087 = vpop.f32.mrf.mxu0
    %v3088 = vadd.f32 %v2992, %v3087
    %3089 = vdwg.mxu0
    %3090 = vmatpush.bf16.msra.mxu0 %v3059
    %3091 = vmatpush.bf16.msra.mxu0 %v3057
    %3092 = vmatpush.bf16.msra.mxu0 %v3055
    %3093 = vmatpush.bf16.msra.mxu0 %v3053
    %3094 = vmatpush.bf16.msra.mxu0 %v3051
    %3095 = vmatpush.bf16.msra.mxu0 %v3049
    %3096 = vmatpush.bf16.msra.mxu0 %v3047
    %3097 = vmatpush.bf16.msra.mxu0 %v3045
    %3098 = vmatmul.bf16.gmra.mxu0 %v2859
    %v3099 = vpop.f32.mrf.mxu0
    %v3100 = vadd.f32 %v2993, %v3099
    %v3101 = vpop.f32.mrf.mxu0
    %v3102 = vadd.f32 %v2993, %v3101
    %3103 = vdwg.mxu0
    %v3104 = vtanh.pop %v3086
    %v3105 = vtanh.pop %v3100
    %v3106 = vtanh.pop %v3088
    %v3107 = vtanh.pop %v3102
    %v3108 = vpack.c.bf16 %v2971, %v2969
    %v3109 = vpack.c.bf16 %v2972, %v2970
    %v3110 = vld [vmem:[#allocation2 + $0x840] sm:$0xff]
    %v3111 = vld [vmem:[#allocation2 + $0x848] sm:$0xff]
    %v3112 = vld [vmem:[#allocation2 + $0x850] sm:$0xff]
    %v3113 = vld [vmem:[#allocation2 + $0x858] sm:$0xff]
    %v3114 = vld [vmem:[#allocation2 + $0x860] sm:$0xff]
    %v3115 = vld [vmem:[#allocation2 + $0x868] sm:$0xff]
    %v3116 = vld [vmem:[#allocation2 + $0x870] sm:$0xff]
    %v3117 = vld [vmem:[#allocation2 + $0x878] sm:$0xff]
    %v3118 = vld [vmem:[#allocation2 + $0x880] sm:$0xff]
    %v3119 = vld [vmem:[#allocation2 + $0x888] sm:$0xff]
    %v3120 = vld [vmem:[#allocation2 + $0x890] sm:$0xff]
    %v3121 = vld [vmem:[#allocation2 + $0x898] sm:$0xff]
    %v3122 = vld [vmem:[#allocation2 + $0x8a0] sm:$0xff]
    %v3123 = vld [vmem:[#allocation2 + $0x8a8] sm:$0xff]
    %v3124 = vld [vmem:[#allocation2 + $0x8b0] sm:$0xff]
    %v3125 = vld [vmem:[#allocation2 + $0x8b8] sm:$0xff]
    %v3126 = vld [vmem:[#allocation2 + $0x8c0] sm:$0xff]
    %v3127 = vld [vmem:[#allocation2 + $0x8c8] sm:$0xff]
    %v3128 = vld [vmem:[#allocation2 + $0x8d0] sm:$0xff]
    %v3129 = vld [vmem:[#allocation2 + $0x8d8] sm:$0xff]
    %v3130 = vld [vmem:[#allocation2 + $0x8e0] sm:$0xff]
    %v3131 = vld [vmem:[#allocation2 + $0x8e8] sm:$0xff]
    %v3132 = vld [vmem:[#allocation2 + $0x8f0] sm:$0xff]
    %v3133 = vld [vmem:[#allocation2 + $0x8f8] sm:$0xff]
    %v3134 = vld [vmem:[#allocation2 + $0x900] sm:$0xff]
    %v3135 = vld [vmem:[#allocation2 + $0x908] sm:$0xff]
    %v3136 = vld [vmem:[#allocation2 + $0x910] sm:$0xff]
    %v3137 = vld [vmem:[#allocation2 + $0x918] sm:$0xff]
    %v3138 = vld [vmem:[#allocation2 + $0x920] sm:$0xff]
    %v3139 = vld [vmem:[#allocation2 + $0x928] sm:$0xff]
    %v3140 = vld [vmem:[#allocation2 + $0x930] sm:$0xff]
    %v3141 = vld [vmem:[#allocation2 + $0x938] sm:$0xff]
    %v3142 = vpack.c.bf16 %v3106, %v3104
    %v3143 = vpack.c.bf16 %v3107, %v3105
    %v3144 = vld [vmem:[#allocation2 + $0x940] sm:$0xff]
    %v3145 = vld [vmem:[#allocation2 + $0x948] sm:$0xff]
    %v3146 = vld [vmem:[#allocation2 + $0x950] sm:$0xff]
    %v3147 = vld [vmem:[#allocation2 + $0x958] sm:$0xff]
    %v3148 = vld [vmem:[#allocation2 + $0x960] sm:$0xff]
    %v3149 = vld [vmem:[#allocation2 + $0x968] sm:$0xff]
    %v3150 = vld [vmem:[#allocation2 + $0x970] sm:$0xff]
    %v3151 = vld [vmem:[#allocation2 + $0x978] sm:$0xff]
    %v3152 = vld [vmem:[#allocation2 + $0x980] sm:$0xff]
    %v3153 = vld [vmem:[#allocation2 + $0x988] sm:$0xff]
    %v3154 = vld [vmem:[#allocation2 + $0x990] sm:$0xff]
    %v3155 = vld [vmem:[#allocation2 + $0x998] sm:$0xff]
    %v3156 = vld [vmem:[#allocation2 + $0x9a0] sm:$0xff]
    %v3157 = vld [vmem:[#allocation2 + $0x9a8] sm:$0xff]
    %v3158 = vld [vmem:[#allocation2 + $0x9b0] sm:$0xff]
    %v3159 = vld [vmem:[#allocation2 + $0x9b8] sm:$0xff]
    %v3160 = vld [vmem:[#allocation2 + $0x9c0] sm:$0xff]
    %v3161 = vld [vmem:[#allocation2 + $0x9c8] sm:$0xff]
    %v3162 = vld [vmem:[#allocation2 + $0x9d0] sm:$0xff]
    %v3163 = vld [vmem:[#allocation2 + $0x9d8] sm:$0xff]
    %v3164 = vld [vmem:[#allocation2 + $0x9e0] sm:$0xff]
    %v3165 = vld [vmem:[#allocation2 + $0x9e8] sm:$0xff]
    %v3166 = vld [vmem:[#allocation2 + $0x9f0] sm:$0xff]
    %v3167 = vld [vmem:[#allocation2 + $0x9f8] sm:$0xff]
    %v3168 = vld [vmem:[#allocation2 + $0xa00] sm:$0xff]
    %v3169 = vld [vmem:[#allocation2 + $0xa08] sm:$0xff]
    %v3170 = vld [vmem:[#allocation2 + $0xa10] sm:$0xff]
    %v3171 = vld [vmem:[#allocation2 + $0xa18] sm:$0xff]
    %v3172 = vld [vmem:[#allocation2 + $0xa20] sm:$0xff]
    %v3173 = vld [vmem:[#allocation2 + $0xa28] sm:$0xff]
    %v3174 = vld [vmem:[#allocation2 + $0xa30] sm:$0xff]
    %v3175 = vld [vmem:[#allocation2 + $0xa38] sm:$0xff]
    %v3208 = vunpack.c.l.b16 %v3144
    %v3209 = vunpack.c.h.b16 %v3144
    %v3210 = vunpack.c.l.b16 %v3145
    %v3211 = vunpack.c.h.b16 %v3145
    %v3212 = vunpack.c.l.b16 %v3146
    %v3213 = vunpack.c.h.b16 %v3146
    %v3214 = vunpack.c.l.b16 %v3147
    %v3215 = vunpack.c.h.b16 %v3147
    %v3216 = vunpack.c.l.b16 %v3148
    %v3217 = vunpack.c.h.b16 %v3148
    %v3218 = vunpack.c.l.b16 %v3149
    %v3219 = vunpack.c.h.b16 %v3149
    %v3220 = vunpack.c.l.b16 %v3150
    %v3221 = vunpack.c.h.b16 %v3150
    %v3222 = vunpack.c.l.b16 %v3151
    %v3223 = vunpack.c.h.b16 %v3151
    %v3224 = vunpack.c.l.b16 %v3152
    %v3225 = vunpack.c.h.b16 %v3152
    %v3226 = vunpack.c.l.b16 %v3153
    %v3227 = vunpack.c.h.b16 %v3153
    %v3228 = vunpack.c.l.b16 %v3154
    %v3229 = vunpack.c.h.b16 %v3154
    %v3230 = vunpack.c.l.b16 %v3155
    %v3231 = vunpack.c.h.b16 %v3155
    %v3232 = vunpack.c.l.b16 %v3156
    %v3233 = vunpack.c.h.b16 %v3156
    %v3234 = vunpack.c.l.b16 %v3157
    %v3235 = vunpack.c.h.b16 %v3157
    %v3236 = vunpack.c.l.b16 %v3158
    %v3237 = vunpack.c.h.b16 %v3158
    %v3238 = vunpack.c.l.b16 %v3159
    %v3239 = vunpack.c.h.b16 %v3159
    %v3240 = vunpack.c.l.b16 %v3160
    %v3241 = vunpack.c.h.b16 %v3160
    %v3242 = vunpack.c.l.b16 %v3161
    %v3243 = vunpack.c.h.b16 %v3161
    %v3244 = vunpack.c.l.b16 %v3162
    %v3245 = vunpack.c.h.b16 %v3162
    %v3246 = vunpack.c.l.b16 %v3163
    %v3247 = vunpack.c.h.b16 %v3163
    %v3248 = vunpack.c.l.b16 %v3164
    %v3249 = vunpack.c.h.b16 %v3164
    %v3250 = vunpack.c.l.b16 %v3165
    %v3251 = vunpack.c.h.b16 %v3165
    %v3252 = vunpack.c.l.b16 %v3166
    %v3253 = vunpack.c.h.b16 %v3166
    %v3254 = vunpack.c.l.b16 %v3167
    %v3255 = vunpack.c.h.b16 %v3167
    %v3256 = vunpack.c.l.b16 %v3168
    %v3257 = vunpack.c.h.b16 %v3168
    %v3258 = vunpack.c.l.b16 %v3169
    %v3259 = vunpack.c.h.b16 %v3169
    %v3260 = vunpack.c.l.b16 %v3170
    %v3261 = vunpack.c.h.b16 %v3170
    %v3262 = vunpack.c.l.b16 %v3171
    %v3263 = vunpack.c.h.b16 %v3171
    %v3264 = vunpack.c.l.b16 %v3172
    %v3265 = vunpack.c.h.b16 %v3172
    %v3266 = vunpack.c.l.b16 %v3173
    %v3267 = vunpack.c.h.b16 %v3173
    %v3268 = vunpack.c.l.b16 %v3174
    %v3269 = vunpack.c.h.b16 %v3174
    %v3270 = vunpack.c.l.b16 %v3175
    %v3271 = vunpack.c.h.b16 %v3175
    %v3272 = vpack.c.b16 %v3210, %v3208
    %v3273 = vpack.c.b16 %v3211, %v3209
    %v3274 = vpack.c.b16 %v3214, %v3212
    %v3275 = vpack.c.b16 %v3215, %v3213
    %v3276 = vpack.c.b16 %v3218, %v3216
    %v3277 = vpack.c.b16 %v3219, %v3217
    %v3278 = vpack.c.b16 %v3222, %v3220
    %v3279 = vpack.c.b16 %v3223, %v3221
    %v3280 = vpack.c.b16 %v3226, %v3224
    %v3281 = vpack.c.b16 %v3227, %v3225
    %v3282 = vpack.c.b16 %v3230, %v3228
    %v3283 = vpack.c.b16 %v3231, %v3229
    %v3284 = vpack.c.b16 %v3234, %v3232
    %v3285 = vpack.c.b16 %v3235, %v3233
    %v3286 = vpack.c.b16 %v3238, %v3236
    %v3287 = vpack.c.b16 %v3239, %v3237
    %v3288 = vpack.c.b16 %v3242, %v3240
    %v3289 = vpack.c.b16 %v3243, %v3241
    %v3290 = vpack.c.b16 %v3246, %v3244
    %v3291 = vpack.c.b16 %v3247, %v3245
    %v3292 = vpack.c.b16 %v3250, %v3248
    %v3293 = vpack.c.b16 %v3251, %v3249
    %v3294 = vpack.c.b16 %v3254, %v3252
    %v3295 = vpack.c.b16 %v3255, %v3253
    %v3296 = vpack.c.b16 %v3258, %v3256
    %v3297 = vpack.c.b16 %v3259, %v3257
    %v3298 = vpack.c.b16 %v3262, %v3260
    %v3299 = vpack.c.b16 %v3263, %v3261
    %v3300 = vpack.c.b16 %v3266, %v3264
    %v3301 = vpack.c.b16 %v3267, %v3265
    %v3302 = vpack.c.b16 %v3270, %v3268
    %v3303 = vpack.c.b16 %v3271, %v3269
    %3336 = vmatpush.bf16.msra.mxu0 %v3286
    %3337 = vmatpush.bf16.msra.mxu0 %v3284
    %3338 = vmatpush.bf16.msra.mxu0 %v3282
    %3339 = vmatpush.bf16.msra.mxu0 %v3280
    %3340 = vmatpush.bf16.msra.mxu0 %v3278
    %3341 = vmatpush.bf16.msra.mxu0 %v3276
    %3342 = vmatpush.bf16.msra.mxu0 %v3274
    %3343 = vmatpush.bf16.msra.mxu0 %v3272
    %3344 = vmatmul.bf16.gmra.mxu0 %v3142
    %v3345 = vpop.f32.mrf.mxu0
    %v3346 = vadd.f32 0.0, %v3345
    %v3347 = vpop.f32.mrf.mxu0
    %v3348 = vadd.f32 0.0, %v3347
    %3349 = vdwg.mxu0
    %3350 = vmatpush.bf16.msra.mxu0 %v3302
    %3351 = vmatpush.bf16.msra.mxu0 %v3300
    %3352 = vmatpush.bf16.msra.mxu0 %v3298
    %3353 = vmatpush.bf16.msra.mxu0 %v3296
    %3354 = vmatpush.bf16.msra.mxu0 %v3294
    %3355 = vmatpush.bf16.msra.mxu0 %v3292
    %3356 = vmatpush.bf16.msra.mxu0 %v3290
    %3357 = vmatpush.bf16.msra.mxu0 %v3288
    %3358 = vmatmul.bf16.gmra.mxu0 %v3143
    %v3359 = vpop.f32.mrf.mxu0
    %v3360 = vadd.f32 %v3346, %v3359
    %v3361 = vpop.f32.mrf.mxu0
    %v3362 = vadd.f32 %v3348, %v3361
    %3363 = vdwg.mxu0
    %3364 = vmatpush.bf16.msra.mxu0 %v3287
    %3365 = vmatpush.bf16.msra.mxu0 %v3285
    %3366 = vmatpush.bf16.msra.mxu0 %v3283
    %3367 = vmatpush.bf16.msra.mxu0 %v3281
    %3368 = vmatpush.bf16.msra.mxu0 %v3279
    %3369 = vmatpush.bf16.msra.mxu0 %v3277
    %3370 = vmatpush.bf16.msra.mxu0 %v3275
    %3371 = vmatpush.bf16.msra.mxu0 %v3273
    %3372 = vmatmul.bf16.gmra.mxu0 %v3142
    %v3373 = vpop.f32.mrf.mxu0
    %v3374 = vadd.f32 0.0, %v3373
    %v3375 = vpop.f32.mrf.mxu0
    %v3376 = vadd.f32 0.0, %v3375
    %3377 = vdwg.mxu0
    %3378 = vmatpush.bf16.msra.mxu0 %v3303
    %3379 = vmatpush.bf16.msra.mxu0 %v3301
    %3380 = vmatpush.bf16.msra.mxu0 %v3299
    %3381 = vmatpush.bf16.msra.mxu0 %v3297
    %3382 = vmatpush.bf16.msra.mxu0 %v3295
    %3383 = vmatpush.bf16.msra.mxu0 %v3293
    %3384 = vmatpush.bf16.msra.mxu0 %v3291
    %3385 = vmatpush.bf16.msra.mxu0 %v3289
    %3386 = vmatmul.bf16.gmra.mxu0 %v3143
    %v3387 = vpop.f32.mrf.mxu0
    %v3388 = vadd.f32 %v3374, %v3387
    %v3389 = vpop.f32.mrf.mxu0
    %v3390 = vadd.f32 %v3376, %v3389
    %3391 = vdwg.mxu0
    %v3424 = vunpack.c.l.b16 %v3110
    %v3425 = vunpack.c.h.b16 %v3110
    %v3426 = vunpack.c.l.b16 %v3111
    %v3427 = vunpack.c.h.b16 %v3111
    %v3428 = vunpack.c.l.b16 %v3112
    %v3429 = vunpack.c.h.b16 %v3112
    %v3430 = vunpack.c.l.b16 %v3113
    %v3431 = vunpack.c.h.b16 %v3113
    %v3432 = vunpack.c.l.b16 %v3114
    %v3433 = vunpack.c.h.b16 %v3114
    %v3434 = vunpack.c.l.b16 %v3115
    %v3435 = vunpack.c.h.b16 %v3115
    %v3436 = vunpack.c.l.b16 %v3116
    %v3437 = vunpack.c.h.b16 %v3116
    %v3438 = vunpack.c.l.b16 %v3117
    %v3439 = vunpack.c.h.b16 %v3117
    %v3440 = vunpack.c.l.b16 %v3118
    %v3441 = vunpack.c.h.b16 %v3118
    %v3442 = vunpack.c.l.b16 %v3119
    %v3443 = vunpack.c.h.b16 %v3119
    %v3444 = vunpack.c.l.b16 %v3120
    %v3445 = vunpack.c.h.b16 %v3120
    %v3446 = vunpack.c.l.b16 %v3121
    %v3447 = vunpack.c.h.b16 %v3121
    %v3448 = vunpack.c.l.b16 %v3122
    %v3449 = vunpack.c.h.b16 %v3122
    %v3450 = vunpack.c.l.b16 %v3123
    %v3451 = vunpack.c.h.b16 %v3123
    %v3452 = vunpack.c.l.b16 %v3124
    %v3453 = vunpack.c.h.b16 %v3124
    %v3454 = vunpack.c.l.b16 %v3125
    %v3455 = vunpack.c.h.b16 %v3125
    %v3456 = vunpack.c.l.b16 %v3126
    %v3457 = vunpack.c.h.b16 %v3126
    %v3458 = vunpack.c.l.b16 %v3127
    %v3459 = vunpack.c.h.b16 %v3127
    %v3460 = vunpack.c.l.b16 %v3128
    %v3461 = vunpack.c.h.b16 %v3128
    %v3462 = vunpack.c.l.b16 %v3129
    %v3463 = vunpack.c.h.b16 %v3129
    %v3464 = vunpack.c.l.b16 %v3130
    %v3465 = vunpack.c.h.b16 %v3130
    %v3466 = vunpack.c.l.b16 %v3131
    %v3467 = vunpack.c.h.b16 %v3131
    %v3468 = vunpack.c.l.b16 %v3132
    %v3469 = vunpack.c.h.b16 %v3132
    %v3470 = vunpack.c.l.b16 %v3133
    %v3471 = vunpack.c.h.b16 %v3133
    %v3472 = vunpack.c.l.b16 %v3134
    %v3473 = vunpack.c.h.b16 %v3134
    %v3474 = vunpack.c.l.b16 %v3135
    %v3475 = vunpack.c.h.b16 %v3135
    %v3476 = vunpack.c.l.b16 %v3136
    %v3477 = vunpack.c.h.b16 %v3136
    %v3478 = vunpack.c.l.b16 %v3137
    %v3479 = vunpack.c.h.b16 %v3137
    %v3480 = vunpack.c.l.b16 %v3138
    %v3481 = vunpack.c.h.b16 %v3138
    %v3482 = vunpack.c.l.b16 %v3139
    %v3483 = vunpack.c.h.b16 %v3139
    %v3484 = vunpack.c.l.b16 %v3140
    %v3485 = vunpack.c.h.b16 %v3140
    %v3486 = vunpack.c.l.b16 %v3141
    %v3487 = vunpack.c.h.b16 %v3141
    %v3488 = vpack.c.b16 %v3426, %v3424
    %v3489 = vpack.c.b16 %v3427, %v3425
    %v3490 = vpack.c.b16 %v3430, %v3428
    %v3491 = vpack.c.b16 %v3431, %v3429
    %v3492 = vpack.c.b16 %v3434, %v3432
    %v3493 = vpack.c.b16 %v3435, %v3433
    %v3494 = vpack.c.b16 %v3438, %v3436
    %v3495 = vpack.c.b16 %v3439, %v3437
    %v3496 = vpack.c.b16 %v3442, %v3440
    %v3497 = vpack.c.b16 %v3443, %v3441
    %v3498 = vpack.c.b16 %v3446, %v3444
    %v3499 = vpack.c.b16 %v3447, %v3445
    %v3500 = vpack.c.b16 %v3450, %v3448
    %v3501 = vpack.c.b16 %v3451, %v3449
    %v3502 = vpack.c.b16 %v3454, %v3452
    %v3503 = vpack.c.b16 %v3455, %v3453
    %v3504 = vpack.c.b16 %v3458, %v3456
    %v3505 = vpack.c.b16 %v3459, %v3457
    %v3506 = vpack.c.b16 %v3462, %v3460
    %v3507 = vpack.c.b16 %v3463, %v3461
    %v3508 = vpack.c.b16 %v3466, %v3464
    %v3509 = vpack.c.b16 %v3467, %v3465
    %v3510 = vpack.c.b16 %v3470, %v3468
    %v3511 = vpack.c.b16 %v3471, %v3469
    %v3512 = vpack.c.b16 %v3474, %v3472
    %v3513 = vpack.c.b16 %v3475, %v3473
    %v3514 = vpack.c.b16 %v3478, %v3476
    %v3515 = vpack.c.b16 %v3479, %v3477
    %v3516 = vpack.c.b16 %v3482, %v3480
    %v3517 = vpack.c.b16 %v3483, %v3481
    %v3518 = vpack.c.b16 %v3486, %v3484
    %v3519 = vpack.c.b16 %v3487, %v3485
    %3552 = vmatpush.bf16.msra.mxu0 %v3502
    %3553 = vmatpush.bf16.msra.mxu0 %v3500
    %3554 = vmatpush.bf16.msra.mxu0 %v3498
    %3555 = vmatpush.bf16.msra.mxu0 %v3496
    %3556 = vmatpush.bf16.msra.mxu0 %v3494
    %3557 = vmatpush.bf16.msra.mxu0 %v3492
    %3558 = vmatpush.bf16.msra.mxu0 %v3490
    %3559 = vmatpush.bf16.msra.mxu0 %v3488
    %3560 = vmatmul.bf16.gmra.mxu0 %v3108
    %v3561 = vpop.f32.mrf.mxu0
    %v3562 = vadd.f32 %v3360, %v3561
    %v3563 = vpop.f32.mrf.mxu0
    %v3564 = vadd.f32 %v3362, %v3563
    %3565 = vdwg.mxu0
    %3566 = vmatpush.bf16.msra.mxu0 %v3518
    %3567 = vmatpush.bf16.msra.mxu0 %v3516
    %3568 = vmatpush.bf16.msra.mxu0 %v3514
    %3569 = vmatpush.bf16.msra.mxu0 %v3512
    %3570 = vmatpush.bf16.msra.mxu0 %v3510
    %3571 = vmatpush.bf16.msra.mxu0 %v3508
    %3572 = vmatpush.bf16.msra.mxu0 %v3506
    %3573 = vmatpush.bf16.msra.mxu0 %v3504
    %3574 = vmatmul.bf16.gmra.mxu0 %v3109
    %v3575 = vpop.f32.mrf.mxu0
    %v3576 = vadd.f32 %v3562, %v3575
    %v3577 = vpop.f32.mrf.mxu0
    %v3578 = vadd.f32 %v3564, %v3577
    %3579 = vdwg.mxu0
    %3580 = vmatpush.bf16.msra.mxu0 %v3503
    %3581 = vmatpush.bf16.msra.mxu0 %v3501
    %3582 = vmatpush.bf16.msra.mxu0 %v3499
    %3583 = vmatpush.bf16.msra.mxu0 %v3497
    %3584 = vmatpush.bf16.msra.mxu0 %v3495
    %3585 = vmatpush.bf16.msra.mxu0 %v3493
    %3586 = vmatpush.bf16.msra.mxu0 %v3491
    %3587 = vmatpush.bf16.msra.mxu0 %v3489
    %3588 = vmatmul.bf16.gmra.mxu0 %v3108
    %v3589 = vpop.f32.mrf.mxu0
    %v3590 = vadd.f32 %v3388, %v3589
    %v3591 = vpop.f32.mrf.mxu0
    %v3592 = vadd.f32 %v3390, %v3591
    %3593 = vdwg.mxu0
    %3594 = vmatpush.bf16.msra.mxu0 %v3519
    %3595 = vmatpush.bf16.msra.mxu0 %v3517
    %3596 = vmatpush.bf16.msra.mxu0 %v3515
    %3597 = vmatpush.bf16.msra.mxu0 %v3513
    %3598 = vmatpush.bf16.msra.mxu0 %v3511
    %3599 = vmatpush.bf16.msra.mxu0 %v3509
    %3600 = vmatpush.bf16.msra.mxu0 %v3507
    %3601 = vmatpush.bf16.msra.mxu0 %v3505
    %3602 = vmatmul.bf16.gmra.mxu0 %v3109
    %v3603 = vpop.f32.mrf.mxu0
    %v3604 = vadd.f32 %v3590, %v3603
    %v3605 = vpop.f32.mrf.mxu0
    %v3606 = vadd.f32 %v3592, %v3605
    %3607 = vdwg.mxu0
    %s3608 = scalar_lea.vmem [#allocation4], 5
    %v3609 = vld [vmem:[%s3608] ss:$8 sm:$0x3]
    %v3611 = vperm.slane %v3609, 0
    %v3612 = vperm.slane %v3609, 1
    %v3615 = vadd.f32 %v3576, %v3611
    %v3616 = vadd.f32 %v3604, %v3612
    %v3617 = vadd.f32 %v3578, %v3611
    %v3618 = vadd.f32 %v3606, %v3612
    %v3619 = vtanh.pop %v3615
    %v3620 = vtanh.pop %v3616
    %v3621 = vtanh.pop %v3617
    %v3622 = vtanh.pop %v3618
    %v3623 = vpack.c.bf16 %v2830, %v2828
    %v3624 = vpack.c.bf16 %v2831, %v2829
    %v3625 = vld [vmem:[#allocation2 + $0xa40] sm:$0xff]
    %v3626 = vld [vmem:[#allocation2 + $0xa48] sm:$0xff]
    %v3627 = vld [vmem:[#allocation2 + $0xa50] sm:$0xff]
    %v3628 = vld [vmem:[#allocation2 + $0xa58] sm:$0xff]
    %v3629 = vld [vmem:[#allocation2 + $0xa60] sm:$0xff]
    %v3630 = vld [vmem:[#allocation2 + $0xa68] sm:$0xff]
    %v3631 = vld [vmem:[#allocation2 + $0xa70] sm:$0xff]
    %v3632 = vld [vmem:[#allocation2 + $0xa78] sm:$0xff]
    %v3633 = vld [vmem:[#allocation2 + $0xa80] sm:$0xff]
    %v3634 = vld [vmem:[#allocation2 + $0xa88] sm:$0xff]
    %v3635 = vld [vmem:[#allocation2 + $0xa90] sm:$0xff]
    %v3636 = vld [vmem:[#allocation2 + $0xa98] sm:$0xff]
    %v3637 = vld [vmem:[#allocation2 + $0xaa0] sm:$0xff]
    %v3638 = vld [vmem:[#allocation2 + $0xaa8] sm:$0xff]
    %v3639 = vld [vmem:[#allocation2 + $0xab0] sm:$0xff]
    %v3640 = vld [vmem:[#allocation2 + $0xab8] sm:$0xff]
    %v3641 = vld [vmem:[#allocation2 + $0xac0] sm:$0xff]
    %v3642 = vld [vmem:[#allocation2 + $0xac8] sm:$0xff]
    %v3643 = vld [vmem:[#allocation2 + $0xad0] sm:$0xff]
    %v3644 = vld [vmem:[#allocation2 + $0xad8] sm:$0xff]
    %v3645 = vld [vmem:[#allocation2 + $0xae0] sm:$0xff]
    %v3646 = vld [vmem:[#allocation2 + $0xae8] sm:$0xff]
    %v3647 = vld [vmem:[#allocation2 + $0xaf0] sm:$0xff]
    %v3648 = vld [vmem:[#allocation2 + $0xaf8] sm:$0xff]
    %v3649 = vld [vmem:[#allocation2 + $0xb00] sm:$0xff]
    %v3650 = vld [vmem:[#allocation2 + $0xb08] sm:$0xff]
    %v3651 = vld [vmem:[#allocation2 + $0xb10] sm:$0xff]
    %v3652 = vld [vmem:[#allocation2 + $0xb18] sm:$0xff]
    %v3653 = vld [vmem:[#allocation2 + $0xb20] sm:$0xff]
    %v3654 = vld [vmem:[#allocation2 + $0xb28] sm:$0xff]
    %v3655 = vld [vmem:[#allocation2 + $0xb30] sm:$0xff]
    %v3656 = vld [vmem:[#allocation2 + $0xb38] sm:$0xff]
    %v3657 = vpack.c.bf16 %v3621, %v3619
    %v3658 = vpack.c.bf16 %v3622, %v3620
    %v3659 = vld [vmem:[#allocation2 + $0xb40] sm:$0xff]
    %v3660 = vld [vmem:[#allocation2 + $0xb48] sm:$0xff]
    %v3661 = vld [vmem:[#allocation2 + $0xb50] sm:$0xff]
    %v3662 = vld [vmem:[#allocation2 + $0xb58] sm:$0xff]
    %v3663 = vld [vmem:[#allocation2 + $0xb60] sm:$0xff]
    %v3664 = vld [vmem:[#allocation2 + $0xb68] sm:$0xff]
    %v3665 = vld [vmem:[#allocation2 + $0xb70] sm:$0xff]
    %v3666 = vld [vmem:[#allocation2 + $0xb78] sm:$0xff]
    %v3667 = vld [vmem:[#allocation2 + $0xb80] sm:$0xff]
    %v3668 = vld [vmem:[#allocation2 + $0xb88] sm:$0xff]
    %v3669 = vld [vmem:[#allocation2 + $0xb90] sm:$0xff]
    %v3670 = vld [vmem:[#allocation2 + $0xb98] sm:$0xff]
    %v3671 = vld [vmem:[#allocation2 + $0xba0] sm:$0xff]
    %v3672 = vld [vmem:[#allocation2 + $0xba8] sm:$0xff]
    %v3673 = vld [vmem:[#allocation2 + $0xbb0] sm:$0xff]
    %v3674 = vld [vmem:[#allocation2 + $0xbb8] sm:$0xff]
    %v3675 = vld [vmem:[#allocation2 + $0xbc0] sm:$0xff]
    %v3676 = vld [vmem:[#allocation2 + $0xbc8] sm:$0xff]
    %v3677 = vld [vmem:[#allocation2 + $0xbd0] sm:$0xff]
    %v3678 = vld [vmem:[#allocation2 + $0xbd8] sm:$0xff]
    %v3679 = vld [vmem:[#allocation2 + $0xbe0] sm:$0xff]
    %v3680 = vld [vmem:[#allocation2 + $0xbe8] sm:$0xff]
    %v3681 = vld [vmem:[#allocation2 + $0xbf0] sm:$0xff]
    %v3682 = vld [vmem:[#allocation2 + $0xbf8] sm:$0xff]
    %v3683 = vld [vmem:[#allocation2 + $0xc00] sm:$0xff]
    %v3684 = vld [vmem:[#allocation2 + $0xc08] sm:$0xff]
    %v3685 = vld [vmem:[#allocation2 + $0xc10] sm:$0xff]
    %v3686 = vld [vmem:[#allocation2 + $0xc18] sm:$0xff]
    %v3687 = vld [vmem:[#allocation2 + $0xc20] sm:$0xff]
    %v3688 = vld [vmem:[#allocation2 + $0xc28] sm:$0xff]
    %v3689 = vld [vmem:[#allocation2 + $0xc30] sm:$0xff]
    %v3690 = vld [vmem:[#allocation2 + $0xc38] sm:$0xff]
    %v3723 = vunpack.c.l.b16 %v3659
    %v3724 = vunpack.c.h.b16 %v3659
    %v3725 = vunpack.c.l.b16 %v3660
    %v3726 = vunpack.c.h.b16 %v3660
    %v3727 = vunpack.c.l.b16 %v3661
    %v3728 = vunpack.c.h.b16 %v3661
    %v3729 = vunpack.c.l.b16 %v3662
    %v3730 = vunpack.c.h.b16 %v3662
    %v3731 = vunpack.c.l.b16 %v3663
    %v3732 = vunpack.c.h.b16 %v3663
    %v3733 = vunpack.c.l.b16 %v3664
    %v3734 = vunpack.c.h.b16 %v3664
    %v3735 = vunpack.c.l.b16 %v3665
    %v3736 = vunpack.c.h.b16 %v3665
    %v3737 = vunpack.c.l.b16 %v3666
    %v3738 = vunpack.c.h.b16 %v3666
    %v3739 = vunpack.c.l.b16 %v3667
    %v3740 = vunpack.c.h.b16 %v3667
    %v3741 = vunpack.c.l.b16 %v3668
    %v3742 = vunpack.c.h.b16 %v3668
    %v3743 = vunpack.c.l.b16 %v3669
    %v3744 = vunpack.c.h.b16 %v3669
    %v3745 = vunpack.c.l.b16 %v3670
    %v3746 = vunpack.c.h.b16 %v3670
    %v3747 = vunpack.c.l.b16 %v3671
    %v3748 = vunpack.c.h.b16 %v3671
    %v3749 = vunpack.c.l.b16 %v3672
    %v3750 = vunpack.c.h.b16 %v3672
    %v3751 = vunpack.c.l.b16 %v3673
    %v3752 = vunpack.c.h.b16 %v3673
    %v3753 = vunpack.c.l.b16 %v3674
    %v3754 = vunpack.c.h.b16 %v3674
    %v3755 = vunpack.c.l.b16 %v3675
    %v3756 = vunpack.c.h.b16 %v3675
    %v3757 = vunpack.c.l.b16 %v3676
    %v3758 = vunpack.c.h.b16 %v3676
    %v3759 = vunpack.c.l.b16 %v3677
    %v3760 = vunpack.c.h.b16 %v3677
    %v3761 = vunpack.c.l.b16 %v3678
    %v3762 = vunpack.c.h.b16 %v3678
    %v3763 = vunpack.c.l.b16 %v3679
    %v3764 = vunpack.c.h.b16 %v3679
    %v3765 = vunpack.c.l.b16 %v3680
    %v3766 = vunpack.c.h.b16 %v3680
    %v3767 = vunpack.c.l.b16 %v3681
    %v3768 = vunpack.c.h.b16 %v3681
    %v3769 = vunpack.c.l.b16 %v3682
    %v3770 = vunpack.c.h.b16 %v3682
    %v3771 = vunpack.c.l.b16 %v3683
    %v3772 = vunpack.c.h.b16 %v3683
    %v3773 = vunpack.c.l.b16 %v3684
    %v3774 = vunpack.c.h.b16 %v3684
    %v3775 = vunpack.c.l.b16 %v3685
    %v3776 = vunpack.c.h.b16 %v3685
    %v3777 = vunpack.c.l.b16 %v3686
    %v3778 = vunpack.c.h.b16 %v3686
    %v3779 = vunpack.c.l.b16 %v3687
    %v3780 = vunpack.c.h.b16 %v3687
    %v3781 = vunpack.c.l.b16 %v3688
    %v3782 = vunpack.c.h.b16 %v3688
    %v3783 = vunpack.c.l.b16 %v3689
    %v3784 = vunpack.c.h.b16 %v3689
    %v3785 = vunpack.c.l.b16 %v3690
    %v3786 = vunpack.c.h.b16 %v3690
    %v3787 = vpack.c.b16 %v3725, %v3723
    %v3788 = vpack.c.b16 %v3726, %v3724
    %v3789 = vpack.c.b16 %v3729, %v3727
    %v3790 = vpack.c.b16 %v3730, %v3728
    %v3791 = vpack.c.b16 %v3733, %v3731
    %v3792 = vpack.c.b16 %v3734, %v3732
    %v3793 = vpack.c.b16 %v3737, %v3735
    %v3794 = vpack.c.b16 %v3738, %v3736
    %v3795 = vpack.c.b16 %v3741, %v3739
    %v3796 = vpack.c.b16 %v3742, %v3740
    %v3797 = vpack.c.b16 %v3745, %v3743
    %v3798 = vpack.c.b16 %v3746, %v3744
    %v3799 = vpack.c.b16 %v3749, %v3747
    %v3800 = vpack.c.b16 %v3750, %v3748
    %v3801 = vpack.c.b16 %v3753, %v3751
    %v3802 = vpack.c.b16 %v3754, %v3752
    %v3803 = vpack.c.b16 %v3757, %v3755
    %v3804 = vpack.c.b16 %v3758, %v3756
    %v3805 = vpack.c.b16 %v3761, %v3759
    %v3806 = vpack.c.b16 %v3762, %v3760
    %v3807 = vpack.c.b16 %v3765, %v3763
    %v3808 = vpack.c.b16 %v3766, %v3764
    %v3809 = vpack.c.b16 %v3769, %v3767
    %v3810 = vpack.c.b16 %v3770, %v3768
    %v3811 = vpack.c.b16 %v3773, %v3771
    %v3812 = vpack.c.b16 %v3774, %v3772
    %v3813 = vpack.c.b16 %v3777, %v3775
    %v3814 = vpack.c.b16 %v3778, %v3776
    %v3815 = vpack.c.b16 %v3781, %v3779
    %v3816 = vpack.c.b16 %v3782, %v3780
    %v3817 = vpack.c.b16 %v3785, %v3783
    %v3818 = vpack.c.b16 %v3786, %v3784
    %3851 = vmatpush.bf16.msra.mxu0 %v3801
    %3852 = vmatpush.bf16.msra.mxu0 %v3799
    %3853 = vmatpush.bf16.msra.mxu0 %v3797
    %3854 = vmatpush.bf16.msra.mxu0 %v3795
    %3855 = vmatpush.bf16.msra.mxu0 %v3793
    %3856 = vmatpush.bf16.msra.mxu0 %v3791
    %3857 = vmatpush.bf16.msra.mxu0 %v3789
    %3858 = vmatpush.bf16.msra.mxu0 %v3787
    %3859 = vmatmul.bf16.gmra.mxu0 %v3657
    %v3860 = vpop.f32.mrf.mxu0
    %v3861 = vadd.f32 0.0, %v3860
    %v3862 = vpop.f32.mrf.mxu0
    %v3863 = vadd.f32 0.0, %v3862
    %3864 = vdwg.mxu0
    %3865 = vmatpush.bf16.msra.mxu0 %v3817
    %3866 = vmatpush.bf16.msra.mxu0 %v3815
    %3867 = vmatpush.bf16.msra.mxu0 %v3813
    %3868 = vmatpush.bf16.msra.mxu0 %v3811
    %3869 = vmatpush.bf16.msra.mxu0 %v3809
    %3870 = vmatpush.bf16.msra.mxu0 %v3807
    %3871 = vmatpush.bf16.msra.mxu0 %v3805
    %3872 = vmatpush.bf16.msra.mxu0 %v3803
    %3873 = vmatmul.bf16.gmra.mxu0 %v3658
    %v3874 = vpop.f32.mrf.mxu0
    %v3875 = vadd.f32 %v3861, %v3874
    %v3876 = vpop.f32.mrf.mxu0
    %v3877 = vadd.f32 %v3863, %v3876
    %3878 = vdwg.mxu0
    %3879 = vmatpush.bf16.msra.mxu0 %v3802
    %3880 = vmatpush.bf16.msra.mxu0 %v3800
    %3881 = vmatpush.bf16.msra.mxu0 %v3798
    %3882 = vmatpush.bf16.msra.mxu0 %v3796
    %3883 = vmatpush.bf16.msra.mxu0 %v3794
    %3884 = vmatpush.bf16.msra.mxu0 %v3792
    %3885 = vmatpush.bf16.msra.mxu0 %v3790
    %3886 = vmatpush.bf16.msra.mxu0 %v3788
    %3887 = vmatmul.bf16.gmra.mxu0 %v3657
    %v3888 = vpop.f32.mrf.mxu0
    %v3889 = vadd.f32 0.0, %v3888
    %v3890 = vpop.f32.mrf.mxu0
    %v3891 = vadd.f32 0.0, %v3890
    %3892 = vdwg.mxu0
    %3893 = vmatpush.bf16.msra.mxu0 %v3818
    %3894 = vmatpush.bf16.msra.mxu0 %v3816
    %3895 = vmatpush.bf16.msra.mxu0 %v3814
    %3896 = vmatpush.bf16.msra.mxu0 %v3812
    %3897 = vmatpush.bf16.msra.mxu0 %v3810
    %3898 = vmatpush.bf16.msra.mxu0 %v3808
    %3899 = vmatpush.bf16.msra.mxu0 %v3806
    %3900 = vmatpush.bf16.msra.mxu0 %v3804
    %3901 = vmatmul.bf16.gmra.mxu0 %v3658
    %v3902 = vpop.f32.mrf.mxu0
    %v3903 = vadd.f32 %v3889, %v3902
    %v3904 = vpop.f32.mrf.mxu0
    %v3905 = vadd.f32 %v3891, %v3904
    %3906 = vdwg.mxu0
    %v3939 = vunpack.c.l.b16 %v3625
    %v3940 = vunpack.c.h.b16 %v3625
    %v3941 = vunpack.c.l.b16 %v3626
    %v3942 = vunpack.c.h.b16 %v3626
    %v3943 = vunpack.c.l.b16 %v3627
    %v3944 = vunpack.c.h.b16 %v3627
    %v3945 = vunpack.c.l.b16 %v3628
    %v3946 = vunpack.c.h.b16 %v3628
    %v3947 = vunpack.c.l.b16 %v3629
    %v3948 = vunpack.c.h.b16 %v3629
    %v3949 = vunpack.c.l.b16 %v3630
    %v3950 = vunpack.c.h.b16 %v3630
    %v3951 = vunpack.c.l.b16 %v3631
    %v3952 = vunpack.c.h.b16 %v3631
    %v3953 = vunpack.c.l.b16 %v3632
    %v3954 = vunpack.c.h.b16 %v3632
    %v3955 = vunpack.c.l.b16 %v3633
    %v3956 = vunpack.c.h.b16 %v3633
    %v3957 = vunpack.c.l.b16 %v3634
    %v3958 = vunpack.c.h.b16 %v3634
    %v3959 = vunpack.c.l.b16 %v3635
    %v3960 = vunpack.c.h.b16 %v3635
    %v3961 = vunpack.c.l.b16 %v3636
    %v3962 = vunpack.c.h.b16 %v3636
    %v3963 = vunpack.c.l.b16 %v3637
    %v3964 = vunpack.c.h.b16 %v3637
    %v3965 = vunpack.c.l.b16 %v3638
    %v3966 = vunpack.c.h.b16 %v3638
    %v3967 = vunpack.c.l.b16 %v3639
    %v3968 = vunpack.c.h.b16 %v3639
    %v3969 = vunpack.c.l.b16 %v3640
    %v3970 = vunpack.c.h.b16 %v3640
    %v3971 = vunpack.c.l.b16 %v3641
    %v3972 = vunpack.c.h.b16 %v3641
    %v3973 = vunpack.c.l.b16 %v3642
    %v3974 = vunpack.c.h.b16 %v3642
    %v3975 = vunpack.c.l.b16 %v3643
    %v3976 = vunpack.c.h.b16 %v3643
    %v3977 = vunpack.c.l.b16 %v3644
    %v3978 = vunpack.c.h.b16 %v3644
    %v3979 = vunpack.c.l.b16 %v3645
    %v3980 = vunpack.c.h.b16 %v3645
    %v3981 = vunpack.c.l.b16 %v3646
    %v3982 = vunpack.c.h.b16 %v3646
    %v3983 = vunpack.c.l.b16 %v3647
    %v3984 = vunpack.c.h.b16 %v3647
    %v3985 = vunpack.c.l.b16 %v3648
    %v3986 = vunpack.c.h.b16 %v3648
    %v3987 = vunpack.c.l.b16 %v3649
    %v3988 = vunpack.c.h.b16 %v3649
    %v3989 = vunpack.c.l.b16 %v3650
    %v3990 = vunpack.c.h.b16 %v3650
    %v3991 = vunpack.c.l.b16 %v3651
    %v3992 = vunpack.c.h.b16 %v3651
    %v3993 = vunpack.c.l.b16 %v3652
    %v3994 = vunpack.c.h.b16 %v3652
    %v3995 = vunpack.c.l.b16 %v3653
    %v3996 = vunpack.c.h.b16 %v3653
    %v3997 = vunpack.c.l.b16 %v3654
    %v3998 = vunpack.c.h.b16 %v3654
    %v3999 = vunpack.c.l.b16 %v3655
    %v4000 = vunpack.c.h.b16 %v3655
    %v4001 = vunpack.c.l.b16 %v3656
    %v4002 = vunpack.c.h.b16 %v3656
    %v4003 = vpack.c.b16 %v3941, %v3939
    %v4004 = vpack.c.b16 %v3942, %v3940
    %v4005 = vpack.c.b16 %v3945, %v3943
    %v4006 = vpack.c.b16 %v3946, %v3944
    %v4007 = vpack.c.b16 %v3949, %v3947
    %v4008 = vpack.c.b16 %v3950, %v3948
    %v4009 = vpack.c.b16 %v3953, %v3951
    %v4010 = vpack.c.b16 %v3954, %v3952
    %v4011 = vpack.c.b16 %v3957, %v3955
    %v4012 = vpack.c.b16 %v3958, %v3956
    %v4013 = vpack.c.b16 %v3961, %v3959
    %v4014 = vpack.c.b16 %v3962, %v3960
    %v4015 = vpack.c.b16 %v3965, %v3963
    %v4016 = vpack.c.b16 %v3966, %v3964
    %v4017 = vpack.c.b16 %v3969, %v3967
    %v4018 = vpack.c.b16 %v3970, %v3968
    %v4019 = vpack.c.b16 %v3973, %v3971
    %v4020 = vpack.c.b16 %v3974, %v3972
    %v4021 = vpack.c.b16 %v3977, %v3975
    %v4022 = vpack.c.b16 %v3978, %v3976
    %v4023 = vpack.c.b16 %v3981, %v3979
    %v4024 = vpack.c.b16 %v3982, %v3980
    %v4025 = vpack.c.b16 %v3985, %v3983
    %v4026 = vpack.c.b16 %v3986, %v3984
    %v4027 = vpack.c.b16 %v3989, %v3987
    %v4028 = vpack.c.b16 %v3990, %v3988
    %v4029 = vpack.c.b16 %v3993, %v3991
    %v4030 = vpack.c.b16 %v3994, %v3992
    %v4031 = vpack.c.b16 %v3997, %v3995
    %v4032 = vpack.c.b16 %v3998, %v3996
    %v4033 = vpack.c.b16 %v4001, %v3999
    %v4034 = vpack.c.b16 %v4002, %v4000
    %4067 = vmatpush.bf16.msra.mxu0 %v4017
    %4068 = vmatpush.bf16.msra.mxu0 %v4015
    %4069 = vmatpush.bf16.msra.mxu0 %v4013
    %4070 = vmatpush.bf16.msra.mxu0 %v4011
    %4071 = vmatpush.bf16.msra.mxu0 %v4009
    %4072 = vmatpush.bf16.msra.mxu0 %v4007
    %4073 = vmatpush.bf16.msra.mxu0 %v4005
    %4074 = vmatpush.bf16.msra.mxu0 %v4003
    %4075 = vmatmul.bf16.gmra.mxu0 %v3623
    %v4076 = vpop.f32.mrf.mxu0
    %v4077 = vadd.f32 %v3875, %v4076
    %v4078 = vpop.f32.mrf.mxu0
    %v4079 = vadd.f32 %v3877, %v4078
    %4080 = vdwg.mxu0
    %4081 = vmatpush.bf16.msra.mxu0 %v4033
    %4082 = vmatpush.bf16.msra.mxu0 %v4031
    %4083 = vmatpush.bf16.msra.mxu0 %v4029
    %4084 = vmatpush.bf16.msra.mxu0 %v4027
    %4085 = vmatpush.bf16.msra.mxu0 %v4025
    %4086 = vmatpush.bf16.msra.mxu0 %v4023
    %4087 = vmatpush.bf16.msra.mxu0 %v4021
    %4088 = vmatpush.bf16.msra.mxu0 %v4019
    %4089 = vmatmul.bf16.gmra.mxu0 %v3624
    %v4090 = vpop.f32.mrf.mxu0
    %v4091 = vadd.f32 %v4077, %v4090
    %v4092 = vpop.f32.mrf.mxu0
    %v4093 = vadd.f32 %v4079, %v4092
    %4094 = vdwg.mxu0
    %4095 = vmatpush.bf16.msra.mxu0 %v4018
    %4096 = vmatpush.bf16.msra.mxu0 %v4016
    %4097 = vmatpush.bf16.msra.mxu0 %v4014
    %4098 = vmatpush.bf16.msra.mxu0 %v4012
    %4099 = vmatpush.bf16.msra.mxu0 %v4010
    %4100 = vmatpush.bf16.msra.mxu0 %v4008
    %4101 = vmatpush.bf16.msra.mxu0 %v4006
    %4102 = vmatpush.bf16.msra.mxu0 %v4004
    %4103 = vmatmul.bf16.gmra.mxu0 %v3623
    %v4104 = vpop.f32.mrf.mxu0
    %v4105 = vadd.f32 %v3903, %v4104
    %v4106 = vpop.f32.mrf.mxu0
    %v4107 = vadd.f32 %v3905, %v4106
    %4108 = vdwg.mxu0
    %4109 = vmatpush.bf16.msra.mxu0 %v4034
    %4110 = vmatpush.bf16.msra.mxu0 %v4032
    %4111 = vmatpush.bf16.msra.mxu0 %v4030
    %4112 = vmatpush.bf16.msra.mxu0 %v4028
    %4113 = vmatpush.bf16.msra.mxu0 %v4026
    %4114 = vmatpush.bf16.msra.mxu0 %v4024
    %4115 = vmatpush.bf16.msra.mxu0 %v4022
    %4116 = vmatpush.bf16.msra.mxu0 %v4020
    %4117 = vmatmul.bf16.gmra.mxu0 %v3624
    %v4118 = vpop.f32.mrf.mxu0
    %v4119 = vadd.f32 %v4105, %v4118
    %v4120 = vpop.f32.mrf.mxu0
    %v4121 = vadd.f32 %v4107, %v4120
    %4122 = vdwg.mxu0
    %s4123 = scalar_lea.vmem [#allocation4], 6
    %v4124 = vld [vmem:[%s4123] ss:$8 sm:$0x3]
    %v4126 = vperm.slane %v4124, 0
    %v4127 = vperm.slane %v4124, 1
    %v4130 = vadd.f32 %v4091, %v4126
    %v4131 = vadd.f32 %v4119, %v4127
    %v4132 = vadd.f32 %v4093, %v4126
    %v4133 = vadd.f32 %v4121, %v4127
    %v4134 = vtanh.pop %v4130
    %v4135 = vtanh.pop %v4131
    %v4136 = vtanh.pop %v4132
    %v4137 = vtanh.pop %v4133
    %v4138 = vpack.c.bf16 %v4136, %v4134
    %v4139 = vpack.c.bf16 %v4137, %v4135
    %v4140 = vld [vmem:[#allocation2 + $0xc40] sm:$0xff]
    %v4141 = vld [vmem:[#allocation2 + $0xc48] sm:$0xff]
    %v4142 = vld [vmem:[#allocation2 + $0xc50] sm:$0xff]
    %v4143 = vld [vmem:[#allocation2 + $0xc58] sm:$0xff]
    %v4144 = vld [vmem:[#allocation2 + $0xc60] sm:$0xff]
    %v4145 = vld [vmem:[#allocation2 + $0xc68] sm:$0xff]
    %v4146 = vld [vmem:[#allocation2 + $0xc70] sm:$0xff]
    %v4147 = vld [vmem:[#allocation2 + $0xc78] sm:$0xff]
    %v4148 = vld [vmem:[#allocation2 + $0xc80] sm:$0xff]
    %v4149 = vld [vmem:[#allocation2 + $0xc88] sm:$0xff]
    %v4150 = vld [vmem:[#allocation2 + $0xc90] sm:$0xff]
    %v4151 = vld [vmem:[#allocation2 + $0xc98] sm:$0xff]
    %v4152 = vld [vmem:[#allocation2 + $0xca0] sm:$0xff]
    %v4153 = vld [vmem:[#allocation2 + $0xca8] sm:$0xff]
    %v4154 = vld [vmem:[#allocation2 + $0xcb0] sm:$0xff]
    %v4155 = vld [vmem:[#allocation2 + $0xcb8] sm:$0xff]
    %v4156 = vld [vmem:[#allocation2 + $0xcc0] sm:$0xff]
    %v4157 = vld [vmem:[#allocation2 + $0xcc8] sm:$0xff]
    %v4158 = vld [vmem:[#allocation2 + $0xcd0] sm:$0xff]
    %v4159 = vld [vmem:[#allocation2 + $0xcd8] sm:$0xff]
    %v4160 = vld [vmem:[#allocation2 + $0xce0] sm:$0xff]
    %v4161 = vld [vmem:[#allocation2 + $0xce8] sm:$0xff]
    %v4162 = vld [vmem:[#allocation2 + $0xcf0] sm:$0xff]
    %v4163 = vld [vmem:[#allocation2 + $0xcf8] sm:$0xff]
    %v4164 = vld [vmem:[#allocation2 + $0xd00] sm:$0xff]
    %v4165 = vld [vmem:[#allocation2 + $0xd08] sm:$0xff]
    %v4166 = vld [vmem:[#allocation2 + $0xd10] sm:$0xff]
    %v4167 = vld [vmem:[#allocation2 + $0xd18] sm:$0xff]
    %v4168 = vld [vmem:[#allocation2 + $0xd20] sm:$0xff]
    %v4169 = vld [vmem:[#allocation2 + $0xd28] sm:$0xff]
    %v4170 = vld [vmem:[#allocation2 + $0xd30] sm:$0xff]
    %v4171 = vld [vmem:[#allocation2 + $0xd38] sm:$0xff]
    %s4172 = scalar_lea.vmem [#allocation4], 7
    %v4173 = vld [vmem:[%s4172] ss:$8 sm:$0x3]
    %v4175 = vperm.slane %v4173, 0
    %v4176 = vperm.slane %v4173, 1
    %v4211 = vunpack.c.l.b16 %v4140
    %v4212 = vunpack.c.h.b16 %v4140
    %v4213 = vunpack.c.l.b16 %v4141
    %v4214 = vunpack.c.h.b16 %v4141
    %v4215 = vunpack.c.l.b16 %v4142
    %v4216 = vunpack.c.h.b16 %v4142
    %v4217 = vunpack.c.l.b16 %v4143
    %v4218 = vunpack.c.h.b16 %v4143
    %v4219 = vunpack.c.l.b16 %v4144
    %v4220 = vunpack.c.h.b16 %v4144
    %v4221 = vunpack.c.l.b16 %v4145
    %v4222 = vunpack.c.h.b16 %v4145
    %v4223 = vunpack.c.l.b16 %v4146
    %v4224 = vunpack.c.h.b16 %v4146
    %v4225 = vunpack.c.l.b16 %v4147
    %v4226 = vunpack.c.h.b16 %v4147
    %v4227 = vunpack.c.l.b16 %v4148
    %v4228 = vunpack.c.h.b16 %v4148
    %v4229 = vunpack.c.l.b16 %v4149
    %v4230 = vunpack.c.h.b16 %v4149
    %v4231 = vunpack.c.l.b16 %v4150
    %v4232 = vunpack.c.h.b16 %v4150
    %v4233 = vunpack.c.l.b16 %v4151
    %v4234 = vunpack.c.h.b16 %v4151
    %v4235 = vunpack.c.l.b16 %v4152
    %v4236 = vunpack.c.h.b16 %v4152
    %v4237 = vunpack.c.l.b16 %v4153
    %v4238 = vunpack.c.h.b16 %v4153
    %v4239 = vunpack.c.l.b16 %v4154
    %v4240 = vunpack.c.h.b16 %v4154
    %v4241 = vunpack.c.l.b16 %v4155
    %v4242 = vunpack.c.h.b16 %v4155
    %v4243 = vunpack.c.l.b16 %v4156
    %v4244 = vunpack.c.h.b16 %v4156
    %v4245 = vunpack.c.l.b16 %v4157
    %v4246 = vunpack.c.h.b16 %v4157
    %v4247 = vunpack.c.l.b16 %v4158
    %v4248 = vunpack.c.h.b16 %v4158
    %v4249 = vunpack.c.l.b16 %v4159
    %v4250 = vunpack.c.h.b16 %v4159
    %v4251 = vunpack.c.l.b16 %v4160
    %v4252 = vunpack.c.h.b16 %v4160
    %v4253 = vunpack.c.l.b16 %v4161
    %v4254 = vunpack.c.h.b16 %v4161
    %v4255 = vunpack.c.l.b16 %v4162
    %v4256 = vunpack.c.h.b16 %v4162
    %v4257 = vunpack.c.l.b16 %v4163
    %v4258 = vunpack.c.h.b16 %v4163
    %v4259 = vunpack.c.l.b16 %v4164
    %v4260 = vunpack.c.h.b16 %v4164
    %v4261 = vunpack.c.l.b16 %v4165
    %v4262 = vunpack.c.h.b16 %v4165
    %v4263 = vunpack.c.l.b16 %v4166
    %v4264 = vunpack.c.h.b16 %v4166
    %v4265 = vunpack.c.l.b16 %v4167
    %v4266 = vunpack.c.h.b16 %v4167
    %v4267 = vunpack.c.l.b16 %v4168
    %v4268 = vunpack.c.h.b16 %v4168
    %v4269 = vunpack.c.l.b16 %v4169
    %v4270 = vunpack.c.h.b16 %v4169
    %v4271 = vunpack.c.l.b16 %v4170
    %v4272 = vunpack.c.h.b16 %v4170
    %v4273 = vunpack.c.l.b16 %v4171
    %v4274 = vunpack.c.h.b16 %v4171
    %v4275 = vpack.c.b16 %v4213, %v4211
    %v4276 = vpack.c.b16 %v4214, %v4212
    %v4277 = vpack.c.b16 %v4217, %v4215
    %v4278 = vpack.c.b16 %v4218, %v4216
    %v4279 = vpack.c.b16 %v4221, %v4219
    %v4280 = vpack.c.b16 %v4222, %v4220
    %v4281 = vpack.c.b16 %v4225, %v4223
    %v4282 = vpack.c.b16 %v4226, %v4224
    %v4283 = vpack.c.b16 %v4229, %v4227
    %v4284 = vpack.c.b16 %v4230, %v4228
    %v4285 = vpack.c.b16 %v4233, %v4231
    %v4286 = vpack.c.b16 %v4234, %v4232
    %v4287 = vpack.c.b16 %v4237, %v4235
    %v4288 = vpack.c.b16 %v4238, %v4236
    %v4289 = vpack.c.b16 %v4241, %v4239
    %v4290 = vpack.c.b16 %v4242, %v4240
    %v4291 = vpack.c.b16 %v4245, %v4243
    %v4292 = vpack.c.b16 %v4246, %v4244
    %v4293 = vpack.c.b16 %v4249, %v4247
    %v4294 = vpack.c.b16 %v4250, %v4248
    %v4295 = vpack.c.b16 %v4253, %v4251
    %v4296 = vpack.c.b16 %v4254, %v4252
    %v4297 = vpack.c.b16 %v4257, %v4255
    %v4298 = vpack.c.b16 %v4258, %v4256
    %v4299 = vpack.c.b16 %v4261, %v4259
    %v4300 = vpack.c.b16 %v4262, %v4260
    %v4301 = vpack.c.b16 %v4265, %v4263
    %v4302 = vpack.c.b16 %v4266, %v4264
    %v4303 = vpack.c.b16 %v4269, %v4267
    %v4304 = vpack.c.b16 %v4270, %v4268
    %v4305 = vpack.c.b16 %v4273, %v4271
    %v4306 = vpack.c.b16 %v4274, %v4272
    %4339 = vmatpush.bf16.msra.mxu0 %v4289
    %4340 = vmatpush.bf16.msra.mxu0 %v4287
    %4341 = vmatpush.bf16.msra.mxu0 %v4285
    %4342 = vmatpush.bf16.msra.mxu0 %v4283
    %4343 = vmatpush.bf16.msra.mxu0 %v4281
    %4344 = vmatpush.bf16.msra.mxu0 %v4279
    %4345 = vmatpush.bf16.msra.mxu0 %v4277
    %4346 = vmatpush.bf16.msra.mxu0 %v4275
    %4347 = vmatmul.bf16.gmra.mxu0 %v4138
    %v4348 = vpop.f32.mrf.mxu0
    %v4349 = vadd.f32 %v4175, %v4348
    %v4350 = vpop.f32.mrf.mxu0
    %v4351 = vadd.f32 %v4175, %v4350
    %4352 = vdwg.mxu0
    %4353 = vmatpush.bf16.msra.mxu0 %v4305
    %4354 = vmatpush.bf16.msra.mxu0 %v4303
    %4355 = vmatpush.bf16.msra.mxu0 %v4301
    %4356 = vmatpush.bf16.msra.mxu0 %v4299
    %4357 = vmatpush.bf16.msra.mxu0 %v4297
    %4358 = vmatpush.bf16.msra.mxu0 %v4295
    %4359 = vmatpush.bf16.msra.mxu0 %v4293
    %4360 = vmatpush.bf16.msra.mxu0 %v4291
    %4361 = vmatmul.bf16.gmra.mxu0 %v4139
    %v4362 = vpop.f32.mrf.mxu0
    %v4363 = vadd.f32 %v4349, %v4362
    %v4364 = vpop.f32.mrf.mxu0
    %v4365 = vadd.f32 %v4351, %v4364
    %4366 = vdwg.mxu0
    %4367 = vmatpush.bf16.msra.mxu0 %v4290
    %4368 = vmatpush.bf16.msra.mxu0 %v4288
    %4369 = vmatpush.bf16.msra.mxu0 %v4286
    %4370 = vmatpush.bf16.msra.mxu0 %v4284
    %4371 = vmatpush.bf16.msra.mxu0 %v4282
    %4372 = vmatpush.bf16.msra.mxu0 %v4280
    %4373 = vmatpush.bf16.msra.mxu0 %v4278
    %4374 = vmatpush.bf16.msra.mxu0 %v4276
    %4375 = vmatmul.bf16.gmra.mxu0 %v4138
    %v4376 = vpop.f32.mrf.mxu0
    %v4377 = vadd.f32 %v4176, %v4376
    %v4378 = vpop.f32.mrf.mxu0
    %v4379 = vadd.f32 %v4176, %v4378
    %4380 = vdwg.mxu0
    %4381 = vmatpush.bf16.msra.mxu0 %v4306
    %4382 = vmatpush.bf16.msra.mxu0 %v4304
    %4383 = vmatpush.bf16.msra.mxu0 %v4302
    %4384 = vmatpush.bf16.msra.mxu0 %v4300
    %4385 = vmatpush.bf16.msra.mxu0 %v4298
    %4386 = vmatpush.bf16.msra.mxu0 %v4296
    %4387 = vmatpush.bf16.msra.mxu0 %v4294
    %4388 = vmatpush.bf16.msra.mxu0 %v4292
    %4389 = vmatmul.bf16.gmra.mxu0 %v4139
    %v4390 = vpop.f32.mrf.mxu0
    %v4391 = vadd.f32 %v4377, %v4390
    %v4392 = vpop.f32.mrf.mxu0
    %v4393 = vadd.f32 %v4379, %v4392
    %4394 = vdwg.mxu0
    %4395 = vst [vmem:[%s3] sm:$0xff] %v4363
    %4396 = vst [vmem:[%s3 + $0x8] sm:$0xff] %v4391
    %4397 = vst [vmem:[%s3 + $0x10] sm:$0xff] %v4365
    %4398 = vst [vmem:[%s3 + $0x18] sm:$0xff] %v4393
    // Predicated region
    $region22: #{cnn_model_forward.1} parent=1 // pred_check
      _
    $region23: #{cnn_model_forward.1} parent=1 // pred_check_branch
      %4400 = sbr.rel (0) target = $region25
    $region24: #{cnn_model_forward.1} parent=1 // pred_region
      _
    $region25: #{cnn_model_forward.1} parent=1 // pred_fallthru
      _
    // Predicated region
    $region26: #{cnn_model_forward.1} parent=1 // pred_check
      _
    $region27: #{cnn_model_forward.1} parent=1 // pred_check_branch
      %4402 = sbr.rel (0) target = $region29
    $region28: #{cnn_model_forward.1} parent=1 // pred_region
      _
    $region29: #{cnn_model_forward.1} parent=1 // pred_fallthru
      _
    %4403 = vsyncpa [#allocation3], 1
    %4404 = vsyncpa [#allocation5], 1

</llo_original>
